<compile_context>
chip_gen: v7x
topology: tpu7x:2x2x1
jax: 0.10.0
libtpu: 0.0.40
codegen_flags: <defaults>
</compile_context>

<pallas_src>
import functools

import numpy as np
import jax
import jax.numpy as jnp
from jax import lax
from jax.experimental import pallas as pl
from jax.experimental.pallas import tpu as pltpu

IN_DIM = 3
HIDDEN = 50
OUT_DIM = 2
N_LAYERS = 6      # 5 hidden tanh layers + linear head
N_STATES = 6      # stacked states: [h, Jt, Hxx, Hyy, Jx, Jy]


def _round_up(x, m):
    return ((x + m - 1) // m) * m


# ----------------------------------------------------------------------------
# Kernel 1: feature-major MLP forward + exact forward-mode 1st/2nd derivatives
#           (the analytic equivalent of the torch.autograd.grad calls), fused
#           with the per-tile Gram reduction of the PDE residual pieces.
# ----------------------------------------------------------------------------
def _mlp_gram_kernel(x_ref, *refs, n_true):
    # refs = (W1, b1, ..., W6, b6, gram_out_ref, scratchA, scratchB)
    wb = refs[:2 * N_LAYERS]
    gram_ref = refs[-3]
    bufs = (refs[-2], refs[-1])

    T = x_ref.shape[1]
    x = x_ref[...]                             # (3, T) feature-major

    # ---- layer 0 (special-cased): Jacobian seeds are one-hot -> columns of
    # W1; Hessian seeds are zero.
    W1 = wb[0][...]                            # (50, 3)
    b1 = wb[1][...]                            # (50, 1)
    pre = jnp.dot(W1, x, preferred_element_type=jnp.float32) + b1   # (50, T)
    wx = W1[:, 0:1]                            # d(pre)/dx, same for every point
    wy = W1[:, 1:2]
    wt = W1[:, 2:3]
    a = jnp.tanh(pre)
    s = 1.0 - a * a
    two_as = 2.0 * a * s
    dst = bufs[0]
    # stacked-state layout in lane slices of width T:
    #   [h, Jt, Hxx, Hyy, Jx, Jy]   (the linear head reads only the first 4)
    dst[:, 0 * T:1 * T] = a
    dst[:, 1 * T:2 * T] = s * wt
    dst[:, 2 * T:3 * T] = -two_as * (wx * wx)
    dst[:, 3 * T:4 * T] = -two_as * (wy * wy)
    dst[:, 4 * T:5 * T] = s * wx
    dst[:, 5 * T:6 * T] = s * wy

    # ---- middle tanh layers: ONE stacked matmul per layer (6 states share W),
    # ping-pong between the two VMEM scratch buffers.
    cur = 0
    for layer in range(1, N_LAYERS - 1):
        W = wb[2 * layer][...]                 # (50, 50)
        b = wb[2 * layer + 1][...]             # (50, 1)
        src = bufs[cur]
        dst = bufs[1 - cur]
        P = jnp.dot(W, src[...], preferred_element_type=jnp.float32)  # (50, 6T)
        pre = P[:, 0 * T:1 * T] + b
        pJt = P[:, 1 * T:2 * T]
        pHxx = P[:, 2 * T:3 * T]
        pHyy = P[:, 3 * T:4 * T]
        pJx = P[:, 4 * T:5 * T]
        pJy = P[:, 5 * T:6 * T]
        a = jnp.tanh(pre)
        s = 1.0 - a * a                        # tanh'
        two_as = 2.0 * a * s
        dst[:, 0 * T:1 * T] = a
        dst[:, 1 * T:2 * T] = s * pJt
        # d2(tanh(p))/dd2 = s * p_dd - 2 a s (p_d)^2
        dst[:, 2 * T:3 * T] = s * pHxx - two_as * (pJx * pJx)
        dst[:, 3 * T:4 * T] = s * pHyy - two_as * (pJy * pJy)
        dst[:, 4 * T:5 * T] = s * pJx
        dst[:, 5 * T:6 * T] = s * pJy
        cur = 1 - cur

    # ---- linear head: only [h, Jt, Hxx, Hyy] (first 4 slices) are live.
    W6 = wb[2 * (N_LAYERS - 1)][...]           # (2, 50)
    b6 = wb[2 * (N_LAYERS - 1) + 1][...]       # (2, 1)
    Sh = bufs[cur][:, 0:4 * T]                 # (50, 4T)
    P6 = jnp.dot(W6, Sh, preferred_element_type=jnp.float32)   # (2, 4T)
    uv = P6[:, 0 * T:1 * T] + b6
    u, v = uv[0:1, :], uv[1:2, :]
    u_t, v_t = P6[0:1, 1 * T:2 * T], P6[1:2, 1 * T:2 * T]
    u_xx, v_xx = P6[0:1, 2 * T:3 * T], P6[1:2, 2 * T:3 * T]
    u_yy, v_yy = P6[0:1, 3 * T:4 * T], P6[1:2, 3 * T:4 * T]

    # ---- fused Gram epilogue: residuals are affine in para: f_k = B_k+a*A_k+c*C_k
    col = lax.broadcasted_iota(jnp.int32, (1, T), 1) + pl.program_id(0) * T
    m = (col < n_true).astype(jnp.float32)     # mask padded collocation points

    Q = u * u + v * v
    Qu = Q * u
    Qv = Q * v
    B2 = (u_t + 0.5 * v_xx - 0.5 * u_yy + Qv + u) * m
    A2 = (0.5 * v_yy) * m
    C2 = (-Qu) * m
    B1 = (v_t - 0.5 * u_xx - 0.5 * v_yy - Qu + v) * m
    A1 = (-0.5 * u_yy) * m
    C1 = (-Qv) * m

    def dot1(p, q):                            # lane reduction -> (1, 1)
        return jnp.sum(p * q, axis=1, keepdims=True)

    g_bb = dot1(B1, B1) + dot1(B2, B2)
    g_aa = dot1(A1, A1) + dot1(A2, A2)
    g_cc = dot1(C1, C1) + dot1(C2, C2)
    g_ab = dot1(A1, B1) + dot1(A2, B2)
    g_bc = dot1(B1, C1) + dot1(B2, C2)
    g_ac = dot1(A1, C1) + dot1(A2, C2)

    # One full unmasked (8, 128) store: row r holds Gram scalar r (broadcast).
    row = lax.broadcasted_iota(jnp.int32, (8, 128), 0)
    zeros = jnp.zeros((8, 128), jnp.float32)
    blk = (jnp.where(row == 0, g_bb, zeros) + jnp.where(row == 1, g_aa, zeros)
           + jnp.where(row == 2, g_cc, zeros) + jnp.where(row == 3, g_ab, zeros)
           + jnp.where(row == 4, g_bc, zeros) + jnp.where(row == 5, g_ac, zeros))
    gram_ref[...] = blk


def gram_partials(x_t, params, *, n_true, tile_n):
    """x_t: (3, n_pad) feature-major points.  Returns (n_tiles*8, 128) partial Grams."""
    n_pad = x_t.shape[1]
    assert n_pad % tile_n == 0
    nt = n_pad // tile_n
    flat = []
    in_specs = [pl.BlockSpec((IN_DIM, tile_n), lambda i: (0, i))]
    for (W, b) in params:
        flat += [W, b]
        in_specs += [pl.BlockSpec(W.shape, lambda i: (0, 0)),
                     pl.BlockSpec(b.shape, lambda i: (0, 0))]
    kernel = functools.partial(_mlp_gram_kernel, n_true=n_true)
    return pl.pallas_call(
        kernel,
        out_shape=jax.ShapeDtypeStruct((nt * 8, 128), jnp.float32),
        grid_spec=pltpu.PrefetchScalarGridSpec(
            num_scalar_prefetch=0,
            grid=(nt,),
            in_specs=in_specs,
            out_specs=pl.BlockSpec((8, 128), lambda i: (i, 0)),
            scratch_shapes=[
                pltpu.VMEM((HIDDEN, N_STATES * tile_n), jnp.float32),
                pltpu.VMEM((HIDDEN, N_STATES * tile_n), jnp.float32),
            ],
        ),
        compiler_params=pltpu.CompilerParams(
            dimension_semantics=("parallel",)),
    )(x_t, *flat)


# ----------------------------------------------------------------------------
# Kernel 2: per-para quadratic form in (a, c) over the 6 Gram scalars.
# ----------------------------------------------------------------------------
def _loss_kernel(gram_ref, para_ref, loss_ref, *, n_true):
    inv_n = 1.0 / float(n_true)
    g = gram_ref[...]                          # (1, 128): [BB, AA, CC, AB, BC, AC, ...]
    g_bb = g[0:1, 0:1]
    g_aa = g[0:1, 1:2]
    g_cc = g[0:1, 2:3]
    g_ab = g[0:1, 3:4]
    g_bc = g[0:1, 4:5]
    g_ac = g[0:1, 5:6]

    pa = para_ref[...]                         # (3, tile_p); rows = (a, b, c)
    a = pa[0:1, :]
    c = pa[2:3, :]
    loss_ref[...] = (g_bb
                     + a * (a * g_aa + 2.0 * g_ab)
                     + c * (c * g_cc + 2.0 * g_bc)
                     + 2.0 * (a * c) * g_ac) * inv_n   # (1, tile_p) lane-dense


def pml_losses(grams, para_t, *, n_true, tile_p):
    p_pad = para_t.shape[1]
    assert p_pad % tile_p == 0
    kernel = functools.partial(_loss_kernel, n_true=n_true)
    return pl.pallas_call(
        kernel,
        out_shape=jax.ShapeDtypeStruct((1, p_pad), jnp.float32),
        grid_spec=pltpu.PrefetchScalarGridSpec(
            num_scalar_prefetch=0,
            grid=(p_pad // tile_p,),
            in_specs=[pl.BlockSpec((1, 128), lambda i: (0, 0)),
                      pl.BlockSpec((3, tile_p), lambda i: (0, i))],
            out_specs=pl.BlockSpec((1, tile_p), lambda i: (0, i)),
        ),
        compiler_params=pltpu.CompilerParams(
            dimension_semantics=("parallel",)),
    )(grams, para_t)


# ----------------------------------------------------------------------------
# End-to-end forward: one loss per para row (matches PML.forward's Loss list).
# ----------------------------------------------------------------------------
def pml_forward(x_pts, para, params, *, tile_n=512, tile_p=1024):
    n = x_pts.shape[0]
    p = para.shape[0]
    tn = min(tile_n, _round_up(n, 128))
    tp = min(tile_p, _round_up(p, 128))
    n_pad = _round_up(n, tn)
    p_pad = _round_up(p, tp)

    x_t = jnp.pad(x_pts.astype(jnp.float32), ((0, n_pad - n), (0, 0))).T   # (3, n_pad)
    partial = gram_partials(x_t, params, n_true=n, tile_n=tn)              # (nt*8, 128)
    nt = n_pad // tn
    gsum = partial.reshape(nt, 8, 128)[:, 0:6, 0].sum(axis=0)              # (6,)
    grams = jnp.zeros((1, 128), jnp.float32).at[0, 0:6].set(gsum)

    para_t = jnp.pad(para.astype(jnp.float32), ((0, p_pad - p), (0, 0))).T  # (3, p_pad)
    losses = pml_losses(grams, para_t, n_true=n, tile_p=tp)                # (1, p_pad)
    return losses[0, :p]


# ----------------------------------------------------------------------------
# Deterministic parameter init (mimics torch.nn.Linear default init); weights
# are stored (out, in), biases (out, 1) for the feature-major kernel.
# ----------------------------------------------------------------------------
def init_params(key):
    dims = [IN_DIM] + [HIDDEN] * 5 + [OUT_DIM]
    params = []
    for i in range(N_LAYERS):
        key, kw, kb = jax.random.split(key, 3)
        fan_in, fan_out = dims[i], dims[i + 1]
        bound = 1.0 / np.sqrt(fan_in)
        W = jax.random.uniform(kw, (fan_out, fan_in), jnp.float32, -bound, bound)
        b = jax.random.uniform(kb, (fan_out, 1), jnp.float32, -bound, bound)
        params.append((W, b))
    return params


# ----------------------------------------------------------------------------
# Pure-JAX reference (jacfwd-of-jacfwd) for validation.
# ----------------------------------------------------------------------------
def _mlp_point(params, xyz):
    h = xyz
    for i, (W, b) in enumerate(params):
        h = W @ h + b[:, 0]
        if i < N_LAYERS - 1:
            h = jnp.tanh(h)
    return h


def reference_losses(x_pts, para, params):
    f = functools.partial(_mlp_point, params)
    uv = jax.vmap(f)(x_pts)                            # (N, 2)
    J = jax.vmap(jax.jacfwd(f))(x_pts)                 # (N, 2, 3)
    H = jax.vmap(jax.jacfwd(jax.jacfwd(f)))(x_pts)     # (N, 2, 3, 3)
    u, v = uv[:, 0], uv[:, 1]
    u_t, v_t = J[:, 0, 2], J[:, 1, 2]
    u_xx, u_yy = H[:, 0, 0, 0], H[:, 0, 1, 1]
    v_xx, v_yy = H[:, 1, 0, 0], H[:, 1, 1, 1]
    Q = u * u + v * v
    a = para[:, 0:1]
    c = para[:, 2:3]
    f_2 = (u_t[None] + 0.5 * v_xx[None] + 0.5 * a * v_yy[None]
           - 0.5 * u_yy[None] + (Q * v)[None] - c * (Q * u)[None] + u[None])
    f_1 = (v_t[None] - 0.5 * u_xx[None] - 0.5 * a * u_yy[None]
           - 0.5 * v_yy[None] - (Q * u)[None] - c * (Q * v)[None] + v[None])
    return jnp.mean(f_1 * f_1, axis=1) + jnp.mean(f_2 * f_2, axis=1)


if __name__ == "__main__":
    N_PTS = 50    # collocation points (matches original linspace(0,3,50))
    P = 200       # parameter rows (original: 5000) — kept small for the demo

    key = jax.random.PRNGKey(0)
    k_params, k_x, k_ab, k_c = jax.random.split(key, 4)

    params = init_params(k_params)
    x_pts = jax.random.uniform(k_x, (N_PTS, IN_DIM), jnp.float32, 0.0, 3.0)
    a_b = jax.random.normal(k_ab, (P, 2), jnp.float32) - 2.0      # normal(-2, 1)
    c_col = jax.random.normal(k_c, (P, 1), jnp.float32) + 0.5     # normal(0.5, 1)
    para = jnp.concatenate([a_b, c_col], axis=1)                  # (P, 3)

    losses = jax.jit(pml_forward)(x_pts, para, params)
    losses = jax.block_until_ready(losses)

    ref = reference_losses(x_pts, para, params)
    np.testing.assert_allclose(np.asarray(losses), np.asarray(ref),
                               rtol=1e-2, atol=1e-4)
    print("KERNEL_OK")
</pallas_src>

<mosaic_0001>
module attributes {stable_mosaic.version = 11 : i64} {
  func.func @_loss_kernel(%arg0: i32, %arg1: memref<1x128xf32, #tpu.memory_space<vmem>>, %arg2: memref<3x256xf32, #tpu.memory_space<vmem>>, %arg3: memref<1x256xf32, #tpu.memory_space<vmem>>) attributes {dimension_semantics = [#tpu.dimension_semantics<parallel>], iteration_bounds = array<i64: 1>, scalar_prefetch = 0 : i64, scratch_operands = 0 : i64, tpu.core_type = #tpu.core_type<tc>, window_params = [{pipeline_mode = #tpu.pipeline_mode<synchronous>, transform_indices = @transform_0, window_bounds = array<i64: 1, 128>}, {transform_indices = @transform_1, window_bounds = array<i64: 3, 256>}, {transform_indices = @transform_2, window_bounds = array<i64: 1, 256>}]} {
    %c0 = arith.constant 0 : index
    %c0_0 = arith.constant 0 : index
    %0 = vector.load %arg1[%c0, %c0_0] : memref<1x128xf32, #tpu.memory_space<vmem>>, vector<1x128xf32>
    %1 = vector.extract_strided_slice %0 {offsets = [0, 0], sizes = [1, 1], strides = [1, 1]} : vector<1x128xf32> to vector<1x1xf32>
    %2 = vector.extract_strided_slice %0 {offsets = [0, 1], sizes = [1, 1], strides = [1, 1]} : vector<1x128xf32> to vector<1x1xf32>
    %3 = vector.extract_strided_slice %0 {offsets = [0, 2], sizes = [1, 1], strides = [1, 1]} : vector<1x128xf32> to vector<1x1xf32>
    %4 = vector.extract_strided_slice %0 {offsets = [0, 3], sizes = [1, 1], strides = [1, 1]} : vector<1x128xf32> to vector<1x1xf32>
    %5 = vector.extract_strided_slice %0 {offsets = [0, 4], sizes = [1, 1], strides = [1, 1]} : vector<1x128xf32> to vector<1x1xf32>
    %6 = vector.extract_strided_slice %0 {offsets = [0, 5], sizes = [1, 1], strides = [1, 1]} : vector<1x128xf32> to vector<1x1xf32>
    %c0_1 = arith.constant 0 : index
    %c0_2 = arith.constant 0 : index
    %7 = vector.load %arg2[%c0_1, %c0_2] : memref<3x256xf32, #tpu.memory_space<vmem>>, vector<3x256xf32>
    %8 = vector.extract_strided_slice %7 {offsets = [0, 0], sizes = [1, 256], strides = [1, 1]} : vector<3x256xf32> to vector<1x256xf32>
    %9 = vector.extract_strided_slice %7 {offsets = [2, 0], sizes = [1, 256], strides = [1, 1]} : vector<3x256xf32> to vector<1x256xf32>
    %10 = vector.broadcast %2 : vector<1x1xf32> to vector<1x256xf32>
    %11 = arith.mulf %8, %10 : vector<1x256xf32>
    %cst = arith.constant 2.000000e+00 : f32
    %12 = vector.broadcast %cst : f32 to vector<1x1xf32>
    %13 = arith.mulf %12, %4 : vector<1x1xf32>
    %14 = vector.broadcast %13 : vector<1x1xf32> to vector<1x256xf32>
    %15 = arith.addf %11, %14 : vector<1x256xf32>
    %16 = arith.mulf %8, %15 : vector<1x256xf32>
    %17 = vector.broadcast %1 : vector<1x1xf32> to vector<1x256xf32>
    %18 = arith.addf %17, %16 : vector<1x256xf32>
    %19 = vector.broadcast %3 : vector<1x1xf32> to vector<1x256xf32>
    %20 = arith.mulf %9, %19 : vector<1x256xf32>
    %cst_3 = arith.constant 2.000000e+00 : f32
    %21 = vector.broadcast %cst_3 : f32 to vector<1x1xf32>
    %22 = arith.mulf %21, %5 : vector<1x1xf32>
    %23 = vector.broadcast %22 : vector<1x1xf32> to vector<1x256xf32>
    %24 = arith.addf %20, %23 : vector<1x256xf32>
    %25 = arith.mulf %9, %24 : vector<1x256xf32>
    %26 = arith.addf %18, %25 : vector<1x256xf32>
    %27 = arith.mulf %8, %9 : vector<1x256xf32>
    %cst_4 = arith.constant 2.000000e+00 : f32
    %28 = vector.broadcast %cst_4 : f32 to vector<1x256xf32>
    %29 = arith.mulf %28, %27 : vector<1x256xf32>
    %30 = vector.broadcast %6 : vector<1x1xf32> to vector<1x256xf32>
    %31 = arith.mulf %29, %30 : vector<1x256xf32>
    %32 = arith.addf %26, %31 : vector<1x256xf32>
    %cst_5 = arith.constant 2.000000e-02 : f32
    %33 = vector.broadcast %cst_5 : f32 to vector<1x256xf32>
    %34 = arith.mulf %32, %33 : vector<1x256xf32>
    %c0_6 = arith.constant 0 : index
    %c0_7 = arith.constant 0 : index
    %35 = vector.load %arg3[%c0_6, %c0_7] : memref<1x256xf32, #tpu.memory_space<vmem>>, vector<1x256xf32>
    tpu.vector_store %arg3[%c0_6, %c0_7], %34 {strides = array<i32>} : memref<1x256xf32, #tpu.memory_space<vmem>>, vector<1x256xf32>,
    return
  }
  func.func @transform_0(%arg0: i32) -> (i32, i32) {
    %c0_i32 = arith.constant 0 : i32
    %c0_i32_0 = arith.constant 0 : i32
    %c0_i32_1 = arith.constant 0 : i32
    return %c0_i32, %c0_i32_0 : i32, i32
  }
  func.func @transform_1(%arg0: i32) -> (i32, i32) {
    %c0_i32 = arith.constant 0 : i32
    %c0_i32_0 = arith.constant 0 : i32
    return %c0_i32, %arg0 : i32, i32
  }
  func.func @transform_2(%arg0: i32) -> (i32, i32) {
    %c0_i32 = arith.constant 0 : i32
    %c0_i32_0 = arith.constant 0 : i32
    return %c0_i32, %arg0 : i32, i32
  }
}

module attributes {stable_mosaic.version = 11 : i64} {
  func.func @_mlp_gram_kernel(%arg0: i32, %arg1: memref<3x128xf32, #tpu.memory_space<vmem>>, %arg2: memref<50x3xf32, #tpu.memory_space<vmem>>, %arg3: memref<50x1xf32, #tpu.memory_space<vmem>>, %arg4: memref<50x50xf32, #tpu.memory_space<vmem>>, %arg5: memref<50x1xf32, #tpu.memory_space<vmem>>, %arg6: memref<50x50xf32, #tpu.memory_space<vmem>>, %arg7: memref<50x1xf32, #tpu.memory_space<vmem>>, %arg8: memref<50x50xf32, #tpu.memory_space<vmem>>, %arg9: memref<50x1xf32, #tpu.memory_space<vmem>>, %arg10: memref<50x50xf32, #tpu.memory_space<vmem>>, %arg11: memref<50x1xf32, #tpu.memory_space<vmem>>, %arg12: memref<2x50xf32, #tpu.memory_space<vmem>>, %arg13: memref<2x1xf32, #tpu.memory_space<vmem>>, %arg14: memref<8x128xf32, #tpu.memory_space<vmem>>, %arg15: memref<50x768xf32, #tpu.memory_space<vmem>>, %arg16: memref<50x768xf32, #tpu.memory_space<vmem>>) attributes {dimension_semantics = [#tpu.dimension_semantics<parallel>], iteration_bounds = array<i64: 1>, scalar_prefetch = 0 : i64, scratch_operands = 2 : i64, tpu.core_type = #tpu.core_type<tc>, window_params = [{transform_indices = @transform_0, window_bounds = array<i64: 3, 128>}, {pipeline_mode = #tpu.pipeline_mode<synchronous>, transform_indices = @transform_1, window_bounds = array<i64: 50, 3>}, {pipeline_mode = #tpu.pipeline_mode<synchronous>, transform_indices = @transform_2, window_bounds = array<i64: 50, 1>}, {pipeline_mode = #tpu.pipeline_mode<synchronous>, transform_indices = @transform_3, window_bounds = array<i64: 50, 50>}, {pipeline_mode = #tpu.pipeline_mode<synchronous>, transform_indices = @transform_4, window_bounds = array<i64: 50, 1>}, {pipeline_mode = #tpu.pipeline_mode<synchronous>, transform_indices = @transform_5, window_bounds = array<i64: 50, 50>}, {pipeline_mode = #tpu.pipeline_mode<synchronous>, transform_indices = @transform_6, window_bounds = array<i64: 50, 1>}, {pipeline_mode = #tpu.pipeline_mode<synchronous>, transform_indices = @transform_7, window_bounds = array<i64: 50, 50>}, {pipeline_mode = #tpu.pipeline_mode<synchronous>, transform_indices = @transform_8, window_bounds = array<i64: 50, 1>}, {pipeline_mode = #tpu.pipeline_mode<synchronous>, transform_indices = @transform_9, window_bounds = array<i64: 50, 50>}, {pipeline_mode = #tpu.pipeline_mode<synchronous>, transform_indices = @transform_10, window_bounds = array<i64: 50, 1>}, {pipeline_mode = #tpu.pipeline_mode<synchronous>, transform_indices = @transform_11, window_bounds = array<i64: 2, 50>}, {pipeline_mode = #tpu.pipeline_mode<synchronous>, transform_indices = @transform_12, window_bounds = array<i64: 2, 1>}, {transform_indices = @transform_13, window_bounds = array<i64: 8, 128>}]} {
    %c0 = arith.constant 0 : index
    %c0_0 = arith.constant 0 : index
    %0 = vector.load %arg1[%c0, %c0_0] : memref<3x128xf32, #tpu.memory_space<vmem>>, vector<3x128xf32>
    %c0_1 = arith.constant 0 : index
    %c0_2 = arith.constant 0 : index
    %1 = vector.load %arg2[%c0_1, %c0_2] : memref<50x3xf32, #tpu.memory_space<vmem>>, vector<50x3xf32>
    %c0_3 = arith.constant 0 : index
    %c0_4 = arith.constant 0 : index
    %2 = vector.load %arg3[%c0_3, %c0_4] : memref<50x1xf32, #tpu.memory_space<vmem>>, vector<50x1xf32>
    %cst = arith.constant dense<0.000000e+00> : vector<50x128xf32>
    %3 = tpu.matmul %1, %0, %cst {dimension_numbers = #tpu.dot_dimension_numbers<[1], [0], [0], [1], [0, 0, 1, 1], [], []>} : vector<50x3xf32>, vector<3x128xf32>, vector<50x128xf32> -> vector<50x128xf32>
    %4 = vector.broadcast %2 : vector<50x1xf32> to vector<50x128xf32>
    %5 = arith.addf %3, %4 : vector<50x128xf32>
    %6 = vector.extract_strided_slice %1 {offsets = [0, 0], sizes = [50, 1], strides = [1, 1]} : vector<50x3xf32> to vector<50x1xf32>
    %7 = vector.extract_strided_slice %1 {offsets = [0, 1], sizes = [50, 1], strides = [1, 1]} : vector<50x3xf32> to vector<50x1xf32>
    %8 = vector.extract_strided_slice %1 {offsets = [0, 2], sizes = [50, 1], strides = [1, 1]} : vector<50x3xf32> to vector<50x1xf32>
    %9 = math.tanh %5 : vector<50x128xf32>
    %10 = arith.mulf %9, %9 : vector<50x128xf32>
    %cst_5 = arith.constant 1.000000e+00 : f32
    %11 = vector.broadcast %cst_5 : f32 to vector<50x128xf32>
    %12 = arith.subf %11, %10 : vector<50x128xf32>
    %cst_6 = arith.constant 2.000000e+00 : f32
    %13 = vector.broadcast %cst_6 : f32 to vector<50x128xf32>
    %14 = arith.mulf %13, %9 : vector<50x128xf32>
    %15 = arith.mulf %14, %12 : vector<50x128xf32>
    %c0_7 = arith.constant 0 : index
    %c0_8 = arith.constant 0 : index
    %16 = vector.load %arg15[%c0_7, %c0_8] : memref<50x768xf32, #tpu.memory_space<vmem>>, vector<50x128xf32>
    tpu.vector_store %arg15[%c0_7, %c0_8], %9 {strides = array<i32>} : memref<50x768xf32, #tpu.memory_space<vmem>>, vector<50x128xf32>,
    %17 = vector.broadcast %8 : vector<50x1xf32> to vector<50x128xf32>
    %18 = arith.mulf %12, %17 : vector<50x128xf32>
    %c0_9 = arith.constant 0 : index
    %c128 = arith.constant 128 : index
    %19 = vector.load %arg15[%c0_9, %c128] : memref<50x768xf32, #tpu.memory_space<vmem>>, vector<50x128xf32>
    tpu.vector_store %arg15[%c0_9, %c128], %18 {strides = array<i32>} : memref<50x768xf32, #tpu.memory_space<vmem>>, vector<50x128xf32>,
    %cst_10 = arith.constant 0.000000e+00 : f32
    %20 = vector.broadcast %cst_10 : f32 to vector<50x128xf32>
    %21 = arith.subf %20, %15 : vector<50x128xf32>
    %22 = arith.mulf %6, %6 : vector<50x1xf32>
    %23 = vector.broadcast %22 : vector<50x1xf32> to vector<50x128xf32>
    %24 = arith.mulf %21, %23 : vector<50x128xf32>
    %c0_11 = arith.constant 0 : index
    %c256 = arith.constant 256 : index
    %25 = vector.load %arg15[%c0_11, %c256] : memref<50x768xf32, #tpu.memory_space<vmem>>, vector<50x128xf32>
    tpu.vector_store %arg15[%c0_11, %c256], %24 {strides = array<i32>} : memref<50x768xf32, #tpu.memory_space<vmem>>, vector<50x128xf32>,
    %cst_12 = arith.constant 0.000000e+00 : f32
    %26 = vector.broadcast %cst_12 : f32 to vector<50x128xf32>
    %27 = arith.subf %26, %15 : vector<50x128xf32>
    %28 = arith.mulf %7, %7 : vector<50x1xf32>
    %29 = vector.broadcast %28 : vector<50x1xf32> to vector<50x128xf32>
    %30 = arith.mulf %27, %29 : vector<50x128xf32>
    %c0_13 = arith.constant 0 : index
    %c384 = arith.constant 384 : index
    %31 = vector.load %arg15[%c0_13, %c384] : memref<50x768xf32, #tpu.memory_space<vmem>>, vector<50x128xf32>
    tpu.vector_store %arg15[%c0_13, %c384], %30 {strides = array<i32>} : memref<50x768xf32, #tpu.memory_space<vmem>>, vector<50x128xf32>,
    %32 = vector.broadcast %6 : vector<50x1xf32> to vector<50x128xf32>
    %33 = arith.mulf %12, %32 : vector<50x128xf32>
    %c0_14 = arith.constant 0 : index
    %c512 = arith.constant 512 : index
    %34 = vector.load %arg15[%c0_14, %c512] : memref<50x768xf32, #tpu.memory_space<vmem>>, vector<50x128xf32>
    tpu.vector_store %arg15[%c0_14, %c512], %33 {strides = array<i32>} : memref<50x768xf32, #tpu.memory_space<vmem>>, vector<50x128xf32>,
    %35 = vector.broadcast %7 : vector<50x1xf32> to vector<50x128xf32>
    %36 = arith.mulf %12, %35 : vector<50x128xf32>
    %c0_15 = arith.constant 0 : index
    %c640 = arith.constant 640 : index
    %37 = vector.load %arg15[%c0_15, %c640] : memref<50x768xf32, #tpu.memory_space<vmem>>, vector<50x128xf32>
    tpu.vector_store %arg15[%c0_15, %c640], %36 {strides = array<i32>} : memref<50x768xf32, #tpu.memory_space<vmem>>, vector<50x128xf32>,
    %c0_16 = arith.constant 0 : index
    %c0_17 = arith.constant 0 : index
    %38 = vector.load %arg4[%c0_16, %c0_17] : memref<50x50xf32, #tpu.memory_space<vmem>>, vector<50x50xf32>
    %c0_18 = arith.constant 0 : index
    %c0_19 = arith.constant 0 : index
    %39 = vector.load %arg5[%c0_18, %c0_19] : memref<50x1xf32, #tpu.memory_space<vmem>>, vector<50x1xf32>
    %c0_20 = arith.constant 0 : index
    %c0_21 = arith.constant 0 : index
    %40 = vector.load %arg15[%c0_20, %c0_21] : memref<50x768xf32, #tpu.memory_space<vmem>>, vector<50x768xf32>
    %cst_22 = arith.constant dense<0.000000e+00> : vector<50x768xf32>
    %41 = tpu.matmul %38, %40, %cst_22 {dimension_numbers = #tpu.dot_dimension_numbers<[1], [0], [0], [1], [0, 0, 1, 1], [], []>} : vector<50x50xf32>, vector<50x768xf32>, vector<50x768xf32> -> vector<50x768xf32>
    %42 = vector.extract_strided_slice %41 {offsets = [0, 0], sizes = [50, 128], strides = [1, 1]} : vector<50x768xf32> to vector<50x128xf32>
    %43 = vector.broadcast %39 : vector<50x1xf32> to vector<50x128xf32>
    %44 = arith.addf %42, %43 : vector<50x128xf32>
    %45 = vector.extract_strided_slice %41 {offsets = [0, 128], sizes = [50, 128], strides = [1, 1]} : vector<50x768xf32> to vector<50x128xf32>
    %46 = vector.extract_strided_slice %41 {offsets = [0, 256], sizes = [50, 128], strides = [1, 1]} : vector<50x768xf32> to vector<50x128xf32>
    %47 = vector.extract_strided_slice %41 {offsets = [0, 384], sizes = [50, 128], strides = [1, 1]} : vector<50x768xf32> to vector<50x128xf32>
    %48 = vector.extract_strided_slice %41 {offsets = [0, 512], sizes = [50, 128], strides = [1, 1]} : vector<50x768xf32> to vector<50x128xf32>
    %49 = vector.extract_strided_slice %41 {offsets = [0, 640], sizes = [50, 128], strides = [1, 1]} : vector<50x768xf32> to vector<50x128xf32>
    %50 = math.tanh %44 : vector<50x128xf32>
    %51 = arith.mulf %50, %50 : vector<50x128xf32>
    %cst_23 = arith.constant 1.000000e+00 : f32
    %52 = vector.broadcast %cst_23 : f32 to vector<50x128xf32>
    %53 = arith.subf %52, %51 : vector<50x128xf32>
    %cst_24 = arith.constant 2.000000e+00 : f32
    %54 = vector.broadcast %cst_24 : f32 to vector<50x128xf32>
    %55 = arith.mulf %54, %50 : vector<50x128xf32>
    %56 = arith.mulf %55, %53 : vector<50x128xf32>
    %c0_25 = arith.constant 0 : index
    %c0_26 = arith.constant 0 : index
    %57 = vector.load %arg16[%c0_25, %c0_26] : memref<50x768xf32, #tpu.memory_space<vmem>>, vector<50x128xf32>
    tpu.vector_store %arg16[%c0_25, %c0_26], %50 {strides = array<i32>} : memref<50x768xf32, #tpu.memory_space<vmem>>, vector<50x128xf32>,
    %58 = arith.mulf %53, %45 : vector<50x128xf32>
    %c0_27 = arith.constant 0 : index
    %c128_28 = arith.constant 128 : index
    %59 = vector.load %arg16[%c0_27, %c128_28] : memref<50x768xf32, #tpu.memory_space<vmem>>, vector<50x128xf32>
    tpu.vector_store %arg16[%c0_27, %c128_28], %58 {strides = array<i32>} : memref<50x768xf32, #tpu.memory_space<vmem>>, vector<50x128xf32>,
    %60 = arith.mulf %53, %46 : vector<50x128xf32>
    %61 = arith.mulf %48, %48 : vector<50x128xf32>
    %62 = arith.mulf %56, %61 : vector<50x128xf32>
    %63 = arith.subf %60, %62 : vector<50x128xf32>
    %c0_29 = arith.constant 0 : index
    %c256_30 = arith.constant 256 : index
    %64 = vector.load %arg16[%c0_29, %c256_30] : memref<50x768xf32, #tpu.memory_space<vmem>>, vector<50x128xf32>
    tpu.vector_store %arg16[%c0_29, %c256_30], %63 {strides = array<i32>} : memref<50x768xf32, #tpu.memory_space<vmem>>, vector<50x128xf32>,
    %65 = arith.mulf %53, %47 : vector<50x128xf32>
    %66 = arith.mulf %49, %49 : vector<50x128xf32>
    %67 = arith.mulf %56, %66 : vector<50x128xf32>
    %68 = arith.subf %65, %67 : vector<50x128xf32>
    %c0_31 = arith.constant 0 : index
    %c384_32 = arith.constant 384 : index
    %69 = vector.load %arg16[%c0_31, %c384_32] : memref<50x768xf32, #tpu.memory_space<vmem>>, vector<50x128xf32>
    tpu.vector_store %arg16[%c0_31, %c384_32], %68 {strides = array<i32>} : memref<50x768xf32, #tpu.memory_space<vmem>>, vector<50x128xf32>,
    %70 = arith.mulf %53, %48 : vector<50x128xf32>
    %c0_33 = arith.constant 0 : index
    %c512_34 = arith.constant 512 : index
    %71 = vector.load %arg16[%c0_33, %c512_34] : memref<50x768xf32, #tpu.memory_space<vmem>>, vector<50x128xf32>
    tpu.vector_store %arg16[%c0_33, %c512_34], %70 {strides = array<i32>} : memref<50x768xf32, #tpu.memory_space<vmem>>, vector<50x128xf32>,
    %72 = arith.mulf %53, %49 : vector<50x128xf32>
    %c0_35 = arith.constant 0 : index
    %c640_36 = arith.constant 640 : index
    %73 = vector.load %arg16[%c0_35, %c640_36] : memref<50x768xf32, #tpu.memory_space<vmem>>, vector<50x128xf32>
    tpu.vector_store %arg16[%c0_35, %c640_36], %72 {strides = array<i32>} : memref<50x768xf32, #tpu.memory_space<vmem>>, vector<50x128xf32>,
    %c0_37 = arith.constant 0 : index
    %c0_38 = arith.constant 0 : index
    %74 = vector.load %arg6[%c0_37, %c0_38] : memref<50x50xf32, #tpu.memory_space<vmem>>, vector<50x50xf32>
    %c0_39 = arith.constant 0 : index
    %c0_40 = arith.constant 0 : index
    %75 = vector.load %arg7[%c0_39, %c0_40] : memref<50x1xf32, #tpu.memory_space<vmem>>, vector<50x1xf32>
    %c0_41 = arith.constant 0 : index
    %c0_42 = arith.constant 0 : index
    %76 = vector.load %arg16[%c0_41, %c0_42] : memref<50x768xf32, #tpu.memory_space<vmem>>, vector<50x768xf32>
    %cst_43 = arith.constant dense<0.000000e+00> : vector<50x768xf32>
    %77 = tpu.matmul %74, %76, %cst_43 {dimension_numbers = #tpu.dot_dimension_numbers<[1], [0], [0], [1], [0, 0, 1, 1], [], []>} : vector<50x50xf32>, vector<50x768xf32>, vector<50x768xf32> -> vector<50x768xf32>
    %78 = vector.extract_strided_slice %77 {offsets = [0, 0], sizes = [50, 128], strides = [1, 1]} : vector<50x768xf32> to vector<50x128xf32>
    %79 = vector.broadcast %75 : vector<50x1xf32> to vector<50x128xf32>
    %80 = arith.addf %78, %79 : vector<50x128xf32>
    %81 = vector.extract_strided_slice %77 {offsets = [0, 128], sizes = [50, 128], strides = [1, 1]} : vector<50x768xf32> to vector<50x128xf32>
    %82 = vector.extract_strided_slice %77 {offsets = [0, 256], sizes = [50, 128], strides = [1, 1]} : vector<50x768xf32> to vector<50x128xf32>
    %83 = vector.extract_strided_slice %77 {offsets = [0, 384], sizes = [50, 128], strides = [1, 1]} : vector<50x768xf32> to vector<50x128xf32>
    %84 = vector.extract_strided_slice %77 {offsets = [0, 512], sizes = [50, 128], strides = [1, 1]} : vector<50x768xf32> to vector<50x128xf32>
    %85 = vector.extract_strided_slice %77 {offsets = [0, 640], sizes = [50, 128], strides = [1, 1]} : vector<50x768xf32> to vector<50x128xf32>
    %86 = math.tanh %80 : vector<50x128xf32>
    %87 = arith.mulf %86, %86 : vector<50x128xf32>
    %cst_44 = arith.constant 1.000000e+00 : f32
    %88 = vector.broadcast %cst_44 : f32 to vector<50x128xf32>
    %89 = arith.subf %88, %87 : vector<50x128xf32>
    %cst_45 = arith.constant 2.000000e+00 : f32
    %90 = vector.broadcast %cst_45 : f32 to vector<50x128xf32>
    %91 = arith.mulf %90, %86 : vector<50x128xf32>
    %92 = arith.mulf %91, %89 : vector<50x128xf32>
    %c0_46 = arith.constant 0 : index
    %c0_47 = arith.constant 0 : index
    %93 = vector.load %arg15[%c0_46, %c0_47] : memref<50x768xf32, #tpu.memory_space<vmem>>, vector<50x128xf32>
    tpu.vector_store %arg15[%c0_46, %c0_47], %86 {strides = array<i32>} : memref<50x768xf32, #tpu.memory_space<vmem>>, vector<50x128xf32>,
    %94 = arith.mulf %89, %81 : vector<50x128xf32>
    %c0_48 = arith.constant 0 : index
    %c128_49 = arith.constant 128 : index
    %95 = vector.load %arg15[%c0_48, %c128_49] : memref<50x768xf32, #tpu.memory_space<vmem>>, vector<50x128xf32>
    tpu.vector_store %arg15[%c0_48, %c128_49], %94 {strides = array<i32>} : memref<50x768xf32, #tpu.memory_space<vmem>>, vector<50x128xf32>,
    %96 = arith.mulf %89, %82 : vector<50x128xf32>
    %97 = arith.mulf %84, %84 : vector<50x128xf32>
    %98 = arith.mulf %92, %97 : vector<50x128xf32>
    %99 = arith.subf %96, %98 : vector<50x128xf32>
    %c0_50 = arith.constant 0 : index
    %c256_51 = arith.constant 256 : index
    %100 = vector.load %arg15[%c0_50, %c256_51] : memref<50x768xf32, #tpu.memory_space<vmem>>, vector<50x128xf32>
    tpu.vector_store %arg15[%c0_50, %c256_51], %99 {strides = array<i32>} : memref<50x768xf32, #tpu.memory_space<vmem>>, vector<50x128xf32>,
    %101 = arith.mulf %89, %83 : vector<50x128xf32>
    %102 = arith.mulf %85, %85 : vector<50x128xf32>
    %103 = arith.mulf %92, %102 : vector<50x128xf32>
    %104 = arith.subf %101, %103 : vector<50x128xf32>
    %c0_52 = arith.constant 0 : index
    %c384_53 = arith.constant 384 : index
    %105 = vector.load %arg15[%c0_52, %c384_53] : memref<50x768xf32, #tpu.memory_space<vmem>>, vector<50x128xf32>
    tpu.vector_store %arg15[%c0_52, %c384_53], %104 {strides = array<i32>} : memref<50x768xf32, #tpu.memory_space<vmem>>, vector<50x128xf32>,
    %106 = arith.mulf %89, %84 : vector<50x128xf32>
    %c0_54 = arith.constant 0 : index
    %c512_55 = arith.constant 512 : index
    %107 = vector.load %arg15[%c0_54, %c512_55] : memref<50x768xf32, #tpu.memory_space<vmem>>, vector<50x128xf32>
    tpu.vector_store %arg15[%c0_54, %c512_55], %106 {strides = array<i32>} : memref<50x768xf32, #tpu.memory_space<vmem>>, vector<50x128xf32>,
    %108 = arith.mulf %89, %85 : vector<50x128xf32>
    %c0_56 = arith.constant 0 : index
    %c640_57 = arith.constant 640 : index
    %109 = vector.load %arg15[%c0_56, %c640_57] : memref<50x768xf32, #tpu.memory_space<vmem>>, vector<50x128xf32>
    tpu.vector_store %arg15[%c0_56, %c640_57], %108 {strides = array<i32>} : memref<50x768xf32, #tpu.memory_space<vmem>>, vector<50x128xf32>,
    %c0_58 = arith.constant 0 : index
    %c0_59 = arith.constant 0 : index
    %110 = vector.load %arg8[%c0_58, %c0_59] : memref<50x50xf32, #tpu.memory_space<vmem>>, vector<50x50xf32>
    %c0_60 = arith.constant 0 : index
    %c0_61 = arith.constant 0 : index
    %111 = vector.load %arg9[%c0_60, %c0_61] : memref<50x1xf32, #tpu.memory_space<vmem>>, vector<50x1xf32>
    %c0_62 = arith.constant 0 : index
    %c0_63 = arith.constant 0 : index
    %112 = vector.load %arg15[%c0_62, %c0_63] : memref<50x768xf32, #tpu.memory_space<vmem>>, vector<50x768xf32>
    %cst_64 = arith.constant dense<0.000000e+00> : vector<50x768xf32>
    %113 = tpu.matmul %110, %112, %cst_64 {dimension_numbers = #tpu.dot_dimension_numbers<[1], [0], [0], [1], [0, 0, 1, 1], [], []>} : vector<50x50xf32>, vector<50x768xf32>, vector<50x768xf32> -> vector<50x768xf32>
    %114 = vector.extract_strided_slice %113 {offsets = [0, 0], sizes = [50, 128], strides = [1, 1]} : vector<50x768xf32> to vector<50x128xf32>
    %115 = vector.broadcast %111 : vector<50x1xf32> to vector<50x128xf32>
    %116 = arith.addf %114, %115 : vector<50x128xf32>
    %117 = vector.extract_strided_slice %113 {offsets = [0, 128], sizes = [50, 128], strides = [1, 1]} : vector<50x768xf32> to vector<50x128xf32>
    %118 = vector.extract_strided_slice %113 {offsets = [0, 256], sizes = [50, 128], strides = [1, 1]} : vector<50x768xf32> to vector<50x128xf32>
    %119 = vector.extract_strided_slice %113 {offsets = [0, 384], sizes = [50, 128], strides = [1, 1]} : vector<50x768xf32> to vector<50x128xf32>
    %120 = vector.extract_strided_slice %113 {offsets = [0, 512], sizes = [50, 128], strides = [1, 1]} : vector<50x768xf32> to vector<50x128xf32>
    %121 = vector.extract_strided_slice %113 {offsets = [0, 640], sizes = [50, 128], strides = [1, 1]} : vector<50x768xf32> to vector<50x128xf32>
    %122 = math.tanh %116 : vector<50x128xf32>
    %123 = arith.mulf %122, %122 : vector<50x128xf32>
    %cst_65 = arith.constant 1.000000e+00 : f32
    %124 = vector.broadcast %cst_65 : f32 to vector<50x128xf32>
    %125 = arith.subf %124, %123 : vector<50x128xf32>
    %cst_66 = arith.constant 2.000000e+00 : f32
    %126 = vector.broadcast %cst_66 : f32 to vector<50x128xf32>
    %127 = arith.mulf %126, %122 : vector<50x128xf32>
    %128 = arith.mulf %127, %125 : vector<50x128xf32>
    %c0_67 = arith.constant 0 : index
    %c0_68 = arith.constant 0 : index
    %129 = vector.load %arg16[%c0_67, %c0_68] : memref<50x768xf32, #tpu.memory_space<vmem>>, vector<50x128xf32>
    tpu.vector_store %arg16[%c0_67, %c0_68], %122 {strides = array<i32>} : memref<50x768xf32, #tpu.memory_space<vmem>>, vector<50x128xf32>,
    %130 = arith.mulf %125, %117 : vector<50x128xf32>
    %c0_69 = arith.constant 0 : index
    %c128_70 = arith.constant 128 : index
    %131 = vector.load %arg16[%c0_69, %c128_70] : memref<50x768xf32, #tpu.memory_space<vmem>>, vector<50x128xf32>
    tpu.vector_store %arg16[%c0_69, %c128_70], %130 {strides = array<i32>} : memref<50x768xf32, #tpu.memory_space<vmem>>, vector<50x128xf32>,
    %132 = arith.mulf %125, %118 : vector<50x128xf32>
    %133 = arith.mulf %120, %120 : vector<50x128xf32>
    %134 = arith.mulf %128, %133 : vector<50x128xf32>
    %135 = arith.subf %132, %134 : vector<50x128xf32>
    %c0_71 = arith.constant 0 : index
    %c256_72 = arith.constant 256 : index
    %136 = vector.load %arg16[%c0_71, %c256_72] : memref<50x768xf32, #tpu.memory_space<vmem>>, vector<50x128xf32>
    tpu.vector_store %arg16[%c0_71, %c256_72], %135 {strides = array<i32>} : memref<50x768xf32, #tpu.memory_space<vmem>>, vector<50x128xf32>,
    %137 = arith.mulf %125, %119 : vector<50x128xf32>
    %138 = arith.mulf %121, %121 : vector<50x128xf32>
    %139 = arith.mulf %128, %138 : vector<50x128xf32>
    %140 = arith.subf %137, %139 : vector<50x128xf32>
    %c0_73 = arith.constant 0 : index
    %c384_74 = arith.constant 384 : index
    %141 = vector.load %arg16[%c0_73, %c384_74] : memref<50x768xf32, #tpu.memory_space<vmem>>, vector<50x128xf32>
    tpu.vector_store %arg16[%c0_73, %c384_74], %140 {strides = array<i32>} : memref<50x768xf32, #tpu.memory_space<vmem>>, vector<50x128xf32>,
    %142 = arith.mulf %125, %120 : vector<50x128xf32>
    %c0_75 = arith.constant 0 : index
    %c512_76 = arith.constant 512 : index
    %143 = vector.load %arg16[%c0_75, %c512_76] : memref<50x768xf32, #tpu.memory_space<vmem>>, vector<50x128xf32>
    tpu.vector_store %arg16[%c0_75, %c512_76], %142 {strides = array<i32>} : memref<50x768xf32, #tpu.memory_space<vmem>>, vector<50x128xf32>,
    %144 = arith.mulf %125, %121 : vector<50x128xf32>
    %c0_77 = arith.constant 0 : index
    %c640_78 = arith.constant 640 : index
    %145 = vector.load %arg16[%c0_77, %c640_78] : memref<50x768xf32, #tpu.memory_space<vmem>>, vector<50x128xf32>
    tpu.vector_store %arg16[%c0_77, %c640_78], %144 {strides = array<i32>} : memref<50x768xf32, #tpu.memory_space<vmem>>, vector<50x128xf32>,
    %c0_79 = arith.constant 0 : index
    %c0_80 = arith.constant 0 : index
    %146 = vector.load %arg10[%c0_79, %c0_80] : memref<50x50xf32, #tpu.memory_space<vmem>>, vector<50x50xf32>
    %c0_81 = arith.constant 0 : index
    %c0_82 = arith.constant 0 : index
    %147 = vector.load %arg11[%c0_81, %c0_82] : memref<50x1xf32, #tpu.memory_space<vmem>>, vector<50x1xf32>
    %c0_83 = arith.constant 0 : index
    %c0_84 = arith.constant 0 : index
    %148 = vector.load %arg16[%c0_83, %c0_84] : memref<50x768xf32, #tpu.memory_space<vmem>>, vector<50x768xf32>
    %cst_85 = arith.constant dense<0.000000e+00> : vector<50x768xf32>
    %149 = tpu.matmul %146, %148, %cst_85 {dimension_numbers = #tpu.dot_dimension_numbers<[1], [0], [0], [1], [0, 0, 1, 1], [], []>} : vector<50x50xf32>, vector<50x768xf32>, vector<50x768xf32> -> vector<50x768xf32>
    %150 = vector.extract_strided_slice %149 {offsets = [0, 0], sizes = [50, 128], strides = [1, 1]} : vector<50x768xf32> to vector<50x128xf32>
    %151 = vector.broadcast %147 : vector<50x1xf32> to vector<50x128xf32>
    %152 = arith.addf %150, %151 : vector<50x128xf32>
    %153 = vector.extract_strided_slice %149 {offsets = [0, 128], sizes = [50, 128], strides = [1, 1]} : vector<50x768xf32> to vector<50x128xf32>
    %154 = vector.extract_strided_slice %149 {offsets = [0, 256], sizes = [50, 128], strides = [1, 1]} : vector<50x768xf32> to vector<50x128xf32>
    %155 = vector.extract_strided_slice %149 {offsets = [0, 384], sizes = [50, 128], strides = [1, 1]} : vector<50x768xf32> to vector<50x128xf32>
    %156 = vector.extract_strided_slice %149 {offsets = [0, 512], sizes = [50, 128], strides = [1, 1]} : vector<50x768xf32> to vector<50x128xf32>
    %157 = vector.extract_strided_slice %149 {offsets = [0, 640], sizes = [50, 128], strides = [1, 1]} : vector<50x768xf32> to vector<50x128xf32>
    %158 = math.tanh %152 : vector<50x128xf32>
    %159 = arith.mulf %158, %158 : vector<50x128xf32>
    %cst_86 = arith.constant 1.000000e+00 : f32
    %160 = vector.broadcast %cst_86 : f32 to vector<50x128xf32>
    %161 = arith.subf %160, %159 : vector<50x128xf32>
    %cst_87 = arith.constant 2.000000e+00 : f32
    %162 = vector.broadcast %cst_87 : f32 to vector<50x128xf32>
    %163 = arith.mulf %162, %158 : vector<50x128xf32>
    %164 = arith.mulf %163, %161 : vector<50x128xf32>
    %c0_88 = arith.constant 0 : index
    %c0_89 = arith.constant 0 : index
    %165 = vector.load %arg15[%c0_88, %c0_89] : memref<50x768xf32, #tpu.memory_space<vmem>>, vector<50x128xf32>
    tpu.vector_store %arg15[%c0_88, %c0_89], %158 {strides = array<i32>} : memref<50x768xf32, #tpu.memory_space<vmem>>, vector<50x128xf32>,
    %166 = arith.mulf %161, %153 : vector<50x128xf32>
    %c0_90 = arith.constant 0 : index
    %c128_91 = arith.constant 128 : index
    %167 = vector.load %arg15[%c0_90, %c128_91] : memref<50x768xf32, #tpu.memory_space<vmem>>, vector<50x128xf32>
    tpu.vector_store %arg15[%c0_90, %c128_91], %166 {strides = array<i32>} : memref<50x768xf32, #tpu.memory_space<vmem>>, vector<50x128xf32>,
    %168 = arith.mulf %161, %154 : vector<50x128xf32>
    %169 = arith.mulf %156, %156 : vector<50x128xf32>
    %170 = arith.mulf %164, %169 : vector<50x128xf32>
    %171 = arith.subf %168, %170 : vector<50x128xf32>
    %c0_92 = arith.constant 0 : index
    %c256_93 = arith.constant 256 : index
    %172 = vector.load %arg15[%c0_92, %c256_93] : memref<50x768xf32, #tpu.memory_space<vmem>>, vector<50x128xf32>
    tpu.vector_store %arg15[%c0_92, %c256_93], %171 {strides = array<i32>} : memref<50x768xf32, #tpu.memory_space<vmem>>, vector<50x128xf32>,
    %173 = arith.mulf %161, %155 : vector<50x128xf32>
    %174 = arith.mulf %157, %157 : vector<50x128xf32>
    %175 = arith.mulf %164, %174 : vector<50x128xf32>
    %176 = arith.subf %173, %175 : vector<50x128xf32>
    %c0_94 = arith.constant 0 : index
    %c384_95 = arith.constant 384 : index
    %177 = vector.load %arg15[%c0_94, %c384_95] : memref<50x768xf32, #tpu.memory_space<vmem>>, vector<50x128xf32>
    tpu.vector_store %arg15[%c0_94, %c384_95], %176 {strides = array<i32>} : memref<50x768xf32, #tpu.memory_space<vmem>>, vector<50x128xf32>,
    %178 = arith.mulf %161, %156 : vector<50x128xf32>
    %c0_96 = arith.constant 0 : index
    %c512_97 = arith.constant 512 : index
    %179 = vector.load %arg15[%c0_96, %c512_97] : memref<50x768xf32, #tpu.memory_space<vmem>>, vector<50x128xf32>
    tpu.vector_store %arg15[%c0_96, %c512_97], %178 {strides = array<i32>} : memref<50x768xf32, #tpu.memory_space<vmem>>, vector<50x128xf32>,
    %180 = arith.mulf %161, %157 : vector<50x128xf32>
    %c0_98 = arith.constant 0 : index
    %c640_99 = arith.constant 640 : index
    %181 = vector.load %arg15[%c0_98, %c640_99] : memref<50x768xf32, #tpu.memory_space<vmem>>, vector<50x128xf32>
    tpu.vector_store %arg15[%c0_98, %c640_99], %180 {strides = array<i32>} : memref<50x768xf32, #tpu.memory_space<vmem>>, vector<50x128xf32>,
    %c0_100 = arith.constant 0 : index
    %c0_101 = arith.constant 0 : index
    %182 = vector.load %arg12[%c0_100, %c0_101] : memref<2x50xf32, #tpu.memory_space<vmem>>, vector<2x50xf32>
    %c0_102 = arith.constant 0 : index
    %c0_103 = arith.constant 0 : index
    %183 = vector.load %arg13[%c0_102, %c0_103] : memref<2x1xf32, #tpu.memory_space<vmem>>, vector<2x1xf32>
    %c0_104 = arith.constant 0 : index
    %c0_105 = arith.constant 0 : index
    %184 = vector.load %arg15[%c0_104, %c0_105] : memref<50x768xf32, #tpu.memory_space<vmem>>, vector<50x512xf32>
    %cst_106 = arith.constant dense<0.000000e+00> : vector<2x512xf32>
    %185 = tpu.matmul %182, %184, %cst_106 {dimension_numbers = #tpu.dot_dimension_numbers<[1], [0], [0], [1], [0, 0, 1, 1], [], []>} : vector<2x50xf32>, vector<50x512xf32>, vector<2x512xf32> -> vector<2x512xf32>
    %186 = vector.extract_strided_slice %185 {offsets = [0, 0], sizes = [2, 128], strides = [1, 1]} : vector<2x512xf32> to vector<2x128xf32>
    %187 = vector.broadcast %183 : vector<2x1xf32> to vector<2x128xf32>
    %188 = arith.addf %186, %187 : vector<2x128xf32>
    %189 = vector.extract_strided_slice %188 {offsets = [0, 0], sizes = [1, 128], strides = [1, 1]} : vector<2x128xf32> to vector<1x128xf32>
    %190 = vector.extract_strided_slice %188 {offsets = [1, 0], sizes = [1, 128], strides = [1, 1]} : vector<2x128xf32> to vector<1x128xf32>
    %191 = vector.extract_strided_slice %185 {offsets = [0, 128], sizes = [1, 128], strides = [1, 1]} : vector<2x512xf32> to vector<1x128xf32>
    %192 = vector.extract_strided_slice %185 {offsets = [1, 128], sizes = [1, 128], strides = [1, 1]} : vector<2x512xf32> to vector<1x128xf32>
    %193 = vector.extract_strided_slice %185 {offsets = [0, 256], sizes = [1, 128], strides = [1, 1]} : vector<2x512xf32> to vector<1x128xf32>
    %194 = vector.extract_strided_slice %185 {offsets = [1, 256], sizes = [1, 128], strides = [1, 1]} : vector<2x512xf32> to vector<1x128xf32>
    %195 = vector.extract_strided_slice %185 {offsets = [0, 384], sizes = [1, 128], strides = [1, 1]} : vector<2x512xf32> to vector<1x128xf32>
    %196 = vector.extract_strided_slice %185 {offsets = [1, 384], sizes = [1, 128], strides = [1, 1]} : vector<2x512xf32> to vector<1x128xf32>
    %197 = tpu.iota {dimensions = array<i32: 1>} : vector<1x128xi32>
    %c128_i32 = arith.constant 128 : i32
    %198 = arith.muli %arg0, %c128_i32 : i32
    %199 = vector.broadcast %198 : i32 to vector<1x128xi32>
    %200 = arith.addi %197, %199 : vector<1x128xi32>
    %c50_i32 = arith.constant 50 : i32
    %201 = vector.broadcast %c50_i32 : i32 to vector<1x128xi32>
    %202 = arith.cmpi slt, %200, %201 : vector<1x128xi32>
    %203 = arith.extui %202 : vector<1x128xi1> to vector<1x128xi32>
    %204 = arith.sitofp %203 : vector<1x128xi32> to vector<1x128xf32>
    %205 = arith.mulf %189, %189 : vector<1x128xf32>
    %206 = arith.mulf %190, %190 : vector<1x128xf32>
    %207 = arith.addf %205, %206 : vector<1x128xf32>
    %208 = arith.mulf %207, %189 : vector<1x128xf32>
    %209 = arith.mulf %207, %190 : vector<1x128xf32>
    %cst_107 = arith.constant 5.000000e-01 : f32
    %210 = vector.broadcast %cst_107 : f32 to vector<1x128xf32>
    %211 = arith.mulf %210, %194 : vector<1x128xf32>
    %212 = arith.addf %191, %211 : vector<1x128xf32>
    %cst_108 = arith.constant 5.000000e-01 : f32
    %213 = vector.broadcast %cst_108 : f32 to vector<1x128xf32>
    %214 = arith.mulf %213, %195 : vector<1x128xf32>
    %215 = arith.subf %212, %214 : vector<1x128xf32>
    %216 = arith.addf %215, %209 : vector<1x128xf32>
    %217 = arith.addf %216, %189 : vector<1x128xf32>
    %218 = arith.mulf %217, %204 : vector<1x128xf32>
    %cst_109 = arith.constant 5.000000e-01 : f32
    %219 = vector.broadcast %cst_109 : f32 to vector<1x128xf32>
    %220 = arith.mulf %219, %196 : vector<1x128xf32>
    %221 = arith.mulf %220, %204 : vector<1x128xf32>
    %cst_110 = arith.constant 0.000000e+00 : f32
    %222 = vector.broadcast %cst_110 : f32 to vector<1x128xf32>
    %223 = arith.subf %222, %208 : vector<1x128xf32>
    %224 = arith.mulf %223, %204 : vector<1x128xf32>
    %cst_111 = arith.constant 5.000000e-01 : f32
    %225 = vector.broadcast %cst_111 : f32 to vector<1x128xf32>
    %226 = arith.mulf %225, %193 : vector<1x128xf32>
    %227 = arith.subf %192, %226 : vector<1x128xf32>
    %cst_112 = arith.constant 5.000000e-01 : f32
    %228 = vector.broadcast %cst_112 : f32 to vector<1x128xf32>
    %229 = arith.mulf %228, %196 : vector<1x128xf32>
    %230 = arith.subf %227, %229 : vector<1x128xf32>
    %231 = arith.subf %230, %208 : vector<1x128xf32>
    %232 = arith.addf %231, %190 : vector<1x128xf32>
    %233 = arith.mulf %232, %204 : vector<1x128xf32>
    %cst_113 = arith.constant -5.000000e-01 : f32
    %234 = vector.broadcast %cst_113 : f32 to vector<1x128xf32>
    %235 = arith.mulf %234, %195 : vector<1x128xf32>
    %236 = arith.mulf %235, %204 : vector<1x128xf32>
    %cst_114 = arith.constant 0.000000e+00 : f32
    %237 = vector.broadcast %cst_114 : f32 to vector<1x128xf32>
    %238 = arith.subf %237, %209 : vector<1x128xf32>
    %239 = arith.mulf %238, %204 : vector<1x128xf32>
    %240 = arith.mulf %233, %233 : vector<1x128xf32>
    %cst_115 = arith.constant dense<0.000000e+00> : vector<1xf32>
    %241 = vector.multi_reduction <add>, %240, %cst_115 [1] : vector<1x128xf32> to vector<1xf32>
    %242 = vector.shape_cast %241 : vector<1xf32> to vector<1x1xf32>
    %243 = arith.mulf %218, %218 : vector<1x128xf32>
    %cst_116 = arith.constant dense<0.000000e+00> : vector<1xf32>
    %244 = vector.multi_reduction <add>, %243, %cst_116 [1] : vector<1x128xf32> to vector<1xf32>
    %245 = vector.shape_cast %244 : vector<1xf32> to vector<1x1xf32>
    %246 = arith.addf %242, %245 : vector<1x1xf32>
    %247 = arith.mulf %236, %236 : vector<1x128xf32>
    %cst_117 = arith.constant dense<0.000000e+00> : vector<1xf32>
    %248 = vector.multi_reduction <add>, %247, %cst_117 [1] : vector<1x128xf32> to vector<1xf32>
    %249 = vector.shape_cast %248 : vector<1xf32> to vector<1x1xf32>
    %250 = arith.mulf %221, %221 : vector<1x128xf32>
    %cst_118 = arith.constant dense<0.000000e+00> : vector<1xf32>
    %251 = vector.multi_reduction <add>, %250, %cst_118 [1] : vector<1x128xf32> to vector<1xf32>
    %252 = vector.shape_cast %251 : vector<1xf32> to vector<1x1xf32>
    %253 = arith.addf %249, %252 : vector<1x1xf32>
    %254 = arith.mulf %239, %239 : vector<1x128xf32>
    %cst_119 = arith.constant dense<0.000000e+00> : vector<1xf32>
    %255 = vector.multi_reduction <add>, %254, %cst_119 [1] : vector<1x128xf32> to vector<1xf32>
    %256 = vector.shape_cast %255 : vector<1xf32> to vector<1x1xf32>
    %257 = arith.mulf %224, %224 : vector<1x128xf32>
    %cst_120 = arith.constant dense<0.000000e+00> : vector<1xf32>
    %258 = vector.multi_reduction <add>, %257, %cst_120 [1] : vector<1x128xf32> to vector<1xf32>
    %259 = vector.shape_cast %258 : vector<1xf32> to vector<1x1xf32>
    %260 = arith.addf %256, %259 : vector<1x1xf32>
    %261 = arith.mulf %236, %233 : vector<1x128xf32>
    %cst_121 = arith.constant dense<0.000000e+00> : vector<1xf32>
    %262 = vector.multi_reduction <add>, %261, %cst_121 [1] : vector<1x128xf32> to vector<1xf32>
    %263 = vector.shape_cast %262 : vector<1xf32> to vector<1x1xf32>
    %264 = arith.mulf %221, %218 : vector<1x128xf32>
    %cst_122 = arith.constant dense<0.000000e+00> : vector<1xf32>
    %265 = vector.multi_reduction <add>, %264, %cst_122 [1] : vector<1x128xf32> to vector<1xf32>
    %266 = vector.shape_cast %265 : vector<1xf32> to vector<1x1xf32>
    %267 = arith.addf %263, %266 : vector<1x1xf32>
    %268 = arith.mulf %233, %239 : vector<1x128xf32>
    %cst_123 = arith.constant dense<0.000000e+00> : vector<1xf32>
    %269 = vector.multi_reduction <add>, %268, %cst_123 [1] : vector<1x128xf32> to vector<1xf32>
    %270 = vector.shape_cast %269 : vector<1xf32> to vector<1x1xf32>
    %271 = arith.mulf %218, %224 : vector<1x128xf32>
    %cst_124 = arith.constant dense<0.000000e+00> : vector<1xf32>
    %272 = vector.multi_reduction <add>, %271, %cst_124 [1] : vector<1x128xf32> to vector<1xf32>
    %273 = vector.shape_cast %272 : vector<1xf32> to vector<1x1xf32>
    %274 = arith.addf %270, %273 : vector<1x1xf32>
    %275 = arith.mulf %236, %239 : vector<1x128xf32>
    %cst_125 = arith.constant dense<0.000000e+00> : vector<1xf32>
    %276 = vector.multi_reduction <add>, %275, %cst_125 [1] : vector<1x128xf32> to vector<1xf32>
    %277 = vector.shape_cast %276 : vector<1xf32> to vector<1x1xf32>
    %278 = arith.mulf %221, %224 : vector<1x128xf32>
    %cst_126 = arith.constant dense<0.000000e+00> : vector<1xf32>
    %279 = vector.multi_reduction <add>, %278, %cst_126 [1] : vector<1x128xf32> to vector<1xf32>
    %280 = vector.shape_cast %279 : vector<1xf32> to vector<1x1xf32>
    %281 = arith.addf %277, %280 : vector<1x1xf32>
    %282 = tpu.iota {dimensions = array<i32: 0>} : vector<8x128xi32>
    %cst_127 = arith.constant 0.000000e+00 : f32
    %283 = vector.broadcast %cst_127 : f32 to vector<8x128xf32>
    %c0_i32 = arith.constant 0 : i32
    %284 = vector.broadcast %c0_i32 : i32 to vector<8x128xi32>
    %285 = arith.cmpi eq, %282, %284 : vector<8x128xi32>
    %286 = vector.shape_cast %246 : vector<1x1xf32> to vector<1x1xf32>
    %287 = vector.broadcast %286 : vector<1x1xf32> to vector<8x128xf32>
    %288 = arith.select %285, %287, %283 : vector<8x128xi1>, vector<8x128xf32>
    %c1_i32 = arith.constant 1 : i32
    %289 = vector.broadcast %c1_i32 : i32 to vector<8x128xi32>
    %290 = arith.cmpi eq, %282, %289 : vector<8x128xi32>
    %291 = vector.shape_cast %253 : vector<1x1xf32> to vector<1x1xf32>
    %292 = vector.broadcast %291 : vector<1x1xf32> to vector<8x128xf32>
    %293 = arith.select %290, %292, %283 : vector<8x128xi1>, vector<8x128xf32>
    %294 = arith.addf %288, %293 : vector<8x128xf32>
    %c2_i32 = arith.constant 2 : i32
    %295 = vector.broadcast %c2_i32 : i32 to vector<8x128xi32>
    %296 = arith.cmpi eq, %282, %295 : vector<8x128xi32>
    %297 = vector.shape_cast %260 : vector<1x1xf32> to vector<1x1xf32>
    %298 = vector.broadcast %297 : vector<1x1xf32> to vector<8x128xf32>
    %299 = arith.select %296, %298, %283 : vector<8x128xi1>, vector<8x128xf32>
    %300 = arith.addf %294, %299 : vector<8x128xf32>
    %c3_i32 = arith.constant 3 : i32
    %301 = vector.broadcast %c3_i32 : i32 to vector<8x128xi32>
    %302 = arith.cmpi eq, %282, %301 : vector<8x128xi32>
    %303 = vector.shape_cast %267 : vector<1x1xf32> to vector<1x1xf32>
    %304 = vector.broadcast %303 : vector<1x1xf32> to vector<8x128xf32>
    %305 = arith.select %302, %304, %283 : vector<8x128xi1>, vector<8x128xf32>
    %306 = arith.addf %300, %305 : vector<8x128xf32>
    %c4_i32 = arith.constant 4 : i32
    %307 = vector.broadcast %c4_i32 : i32 to vector<8x128xi32>
    %308 = arith.cmpi eq, %282, %307 : vector<8x128xi32>
    %309 = vector.shape_cast %274 : vector<1x1xf32> to vector<1x1xf32>
    %310 = vector.broadcast %309 : vector<1x1xf32> to vector<8x128xf32>
    %311 = arith.select %308, %310, %283 : vector<8x128xi1>, vector<8x128xf32>
    %312 = arith.addf %306, %311 : vector<8x128xf32>
    %c5_i32 = arith.constant 5 : i32
    %313 = vector.broadcast %c5_i32 : i32 to vector<8x128xi32>
    %314 = arith.cmpi eq, %282, %313 : vector<8x128xi32>
    %315 = vector.shape_cast %281 : vector<1x1xf32> to vector<1x1xf32>
    %316 = vector.broadcast %315 : vector<1x1xf32> to vector<8x128xf32>
    %317 = arith.select %314, %316, %283 : vector<8x128xi1>, vector<8x128xf32>
    %318 = arith.addf %312, %317 : vector<8x128xf32>
    %c0_128 = arith.constant 0 : index
    %c0_129 = arith.constant 0 : index
    %319 = vector.load %arg14[%c0_128, %c0_129] : memref<8x128xf32, #tpu.memory_space<vmem>>, vector<8x128xf32>
    tpu.vector_store %arg14[%c0_128, %c0_129], %318 {strides = array<i32>} : memref<8x128xf32, #tpu.memory_space<vmem>>, vector<8x128xf32>,
    return
  }
  func.func @transform_0(%arg0: i32) -> (i32, i32) {
    %c0_i32 = arith.constant 0 : i32
    %c0_i32_0 = arith.constant 0 : i32
    return %c0_i32, %arg0 : i32, i32
  }
  func.func @transform_1(%arg0: i32) -> (i32, i32) {
    %c0_i32 = arith.constant 0 : i32
    %c0_i32_0 = arith.constant 0 : i32
    %c0_i32_1 = arith.constant 0 : i32
    return %c0_i32, %c0_i32_0 : i32, i32
  }
  func.func @transform_2(%arg0: i32) -> (i32, i32) {
    %c0_i32 = arith.constant 0 : i32
    %c0_i32_0 = arith.constant 0 : i32
    %c0_i32_1 = arith.constant 0 : i32
    return %c0_i32, %c0_i32_0 : i32, i32
  }
  func.func @transform_3(%arg0: i32) -> (i32, i32) {
    %c0_i32 = arith.constant 0 : i32
    %c0_i32_0 = arith.constant 0 : i32
    %c0_i32_1 = arith.constant 0 : i32
    return %c0_i32, %c0_i32_0 : i32, i32
  }
  func.func @transform_4(%arg0: i32) -> (i32, i32) {
    %c0_i32 = arith.constant 0 : i32
    %c0_i32_0 = arith.constant 0 : i32
    %c0_i32_1 = arith.constant 0 : i32
    return %c0_i32, %c0_i32_0 : i32, i32
  }
  func.func @transform_5(%arg0: i32) -> (i32, i32) {
    %c0_i32 = arith.constant 0 : i32
    %c0_i32_0 = arith.constant 0 : i32
    %c0_i32_1 = arith.constant 0 : i32
    return %c0_i32, %c0_i32_0 : i32, i32
  }
  func.func @transform_6(%arg0: i32) -> (i32, i32) {
    %c0_i32 = arith.constant 0 : i32
    %c0_i32_0 = arith.constant 0 : i32
    %c0_i32_1 = arith.constant 0 : i32
    return %c0_i32, %c0_i32_0 : i32, i32
  }
  func.func @transform_7(%arg0: i32) -> (i32, i32) {
    %c0_i32 = arith.constant 0 : i32
    %c0_i32_0 = arith.constant 0 : i32
    %c0_i32_1 = arith.constant 0 : i32
    return %c0_i32, %c0_i32_0 : i32, i32
  }
  func.func @transform_8(%arg0: i32) -> (i32, i32) {
    %c0_i32 = arith.constant 0 : i32
    %c0_i32_0 = arith.constant 0 : i32
    %c0_i32_1 = arith.constant 0 : i32
    return %c0_i32, %c0_i32_0 : i32, i32
  }
  func.func @transform_9(%arg0: i32) -> (i32, i32) {
    %c0_i32 = arith.constant 0 : i32
    %c0_i32_0 = arith.constant 0 : i32
    %c0_i32_1 = arith.constant 0 : i32
    return %c0_i32, %c0_i32_0 : i32, i32
  }
  func.func @transform_10(%arg0: i32) -> (i32, i32) {
    %c0_i32 = arith.constant 0 : i32
    %c0_i32_0 = arith.constant 0 : i32
    %c0_i32_1 = arith.constant 0 : i32
    return %c0_i32, %c0_i32_0 : i32, i32
  }
  func.func @transform_11(%arg0: i32) -> (i32, i32) {
    %c0_i32 = arith.constant 0 : i32
    %c0_i32_0 = arith.constant 0 : i32
    %c0_i32_1 = arith.constant 0 : i32
    return %c0_i32, %c0_i32_0 : i32, i32
  }
  func.func @transform_12(%arg0: i32) -> (i32, i32) {
    %c0_i32 = arith.constant 0 : i32
    %c0_i32_0 = arith.constant 0 : i32
    %c0_i32_1 = arith.constant 0 : i32
    return %c0_i32, %c0_i32_0 : i32, i32
  }
  func.func @transform_13(%arg0: i32) -> (i32, i32) {
    %c0_i32 = arith.constant 0 : i32
    %c0_i32_0 = arith.constant 0 : i32
    return %arg0, %c0_i32 : i32, i32
  }
}

</mosaic_0001>

<llo_original>
// kernel: pml_forward.3
$region0: #{pml_forward.3}
  #allocation0 [shape = 'u32[]', space=smem, size = 0x4, offset = 0x4, fixed_abs, tag = 'smem constant byte address 0x4 - core index']
  #allocation1 [shape = 'u32[144,128]{1,0:T(1,128)}', space=vmem, size = 0x12000, scoped, tag = 'internal scratch']
  %s0 = inlined_call_operand.vmem [shape: f32[1,128], index: 0, kind: input, shape index: {}]
  %s1 = inlined_call_operand.vmem [shape: f32[3,256], index: 1, kind: input, shape index: {}]
  %s2 = inlined_call_operand.hbm [shape: f32[1,256], index: 2, kind: output, shape index: {}]
  %s3 = sld [smem:[#allocation0]]
  $region18: #{pml_forward.3} parent=0
    _
  %s5 = ssub.s32 1, %s3
  %s6 = scalar_select 0, %s5, %s3
  $region1: #{pml_forward.3} parent=0
    #allocation2 [shape = 'u8[1024]{0}', space=vmem, size = 0x400, scoped, tag = 'output window, operand 0, single buffered']
    #allocation3 [shape = 's32[1]{0}', space=sflag, size = 0x4, scoped, tag = 'scoped memory for pml_forward.3']
    %7 = vsyncpa [#allocation3], 0
    // Predicated region
    $region2: #{pml_forward.3} parent=1 // pred_check
      _
    $region3: #{pml_forward.3} parent=1 // pred_check_branch
      %9 = sbr.rel (0) target = $region5
    $region4: #{pml_forward.3} parent=1 // pred_region
      _
    $region5: #{pml_forward.3} parent=1 // pred_fallthru
      _
    // Predicated region
    $region6: #{pml_forward.3} parent=1 // pred_check
      _
    $region7: #{pml_forward.3} parent=1 // pred_check_branch
      %11 = sbr.rel (0) target = $region9
    $region8: #{pml_forward.3} parent=1 // pred_region
      _
    $region9: #{pml_forward.3} parent=1 // pred_fallthru
      _
    %v12 = vld [vmem:[%s0] sm:$0x1]
    %v13 = vld [vmem:[%s1] sm:$0x77]
    %15 = vset.pattern.permute.xlu0 1
    %16 = vperm.xlu0 %15, %v12
    %v17 = vpop.permute.xlu0 %16
    %v19 = vlaneseq
    %v20 = vshrl.u32 %v19, 7
    %v21 = vsub.s32 0, %v20
    %v22 = vrot.slane %v17, %v21
    %v23 = vmul.f32 %v13, %v22
    %v24 = vmul.f32 %v12, 2.0
    %26 = vset.pattern.permute.xlu0 3
    %27 = vperm.xlu0 %26, %v24
    %v28 = vpop.permute.xlu0 %27
    %v30 = vlaneseq
    %v31 = vshrl.u32 %v30, 7
    %v32 = vsub.s32 0, %v31
    %v33 = vrot.slane %v28, %v32
    %v34 = vadd.f32 %v23, %v33
    %v35 = vmul.f32 %v13, %v34
    %36 = vset.pattern.permute.xlu0 0
    %37 = vperm.xlu0 %36, %v12
    %v38 = vpop.permute.xlu0 %37
    %v40 = vlaneseq
    %v41 = vshrl.u32 %v40, 7
    %v42 = vsub.s32 0, %v41
    %v43 = vrot.slane %v38, %v42
    %v44 = vadd.f32 %v43, %v35
    %45 = vset.pattern.permute.xlu0 2
    %46 = vperm.xlu0 %45, %v12
    %v47 = vpop.permute.xlu0 %46
    %v49 = vlaneseq
    %v50 = vshrl.u32 %v49, 7
    %v51 = vsub.s32 0, %v50
    %v52 = vrot.slane %v47, %v51
    %v53 = vmul.f32 %v13, %v52
    %54 = vset.pattern.permute.xlu0 4
    %55 = vperm.xlu0 %54, %v24
    %v56 = vpop.permute.xlu0 %55
    %v58 = vlaneseq
    %v59 = vshrl.u32 %v58, 7
    %v60 = vsub.s32 0, %v59
    %v61 = vrot.slane %v56, %v60
    %v62 = vadd.f32 %v53, %v61
    %v63 = vmul.f32 %v13, %v62
    %v65 = vrot.slane %v63, 6
    %v66 = vrot.slane %v65, 4
    %v68 = vadd.f32 %v44, %v66
    %v70 = vrot.slane %v13, 6
    %v71 = vrot.slane %v70, 4
    %v73 = vmul.f32 %v13, %v71
    %v74 = vmul.f32 %v73, 2.0
    %75 = vset.pattern.permute.xlu0 5
    %76 = vperm.xlu0 %75, %v12
    %v77 = vpop.permute.xlu0 %76
    %v79 = vlaneseq
    %v80 = vshrl.u32 %v79, 7
    %v81 = vsub.s32 0, %v80
    %v82 = vrot.slane %v77, %v81
    %v83 = vmul.f32 %v74, %v82
    %v84 = vadd.f32 %v68, %v83
    %v85 = vmul.f32 %v84, 0.02
    %v88 = vunpack.c.l.s4 1966171168
    %v89 = vunpack.c.0.s8 %v88
    %v90 = vlaneseq
    %v91 = vshrl.u32 %v90, 7
    %v92 = vsub.s32 %v89, %v91
    %v93 = vrot.slane %v85, %v92
    %v95 = vunpack.c.l.s4 1966171168
    %v96 = vunpack.c.0.s8 %v95
    %v97 = vlaneseq
    %v98 = vshrl.u32 %v97, 7
    %v99 = vsub.s32 %v96, %v98
    %v100 = vrot.slane %v93, %v99
    %v102 = vlaneseq
    %vm103 = vcmp.ge.s32.totalorder %v102, 0
    %vm104 = vcmp.lt.s32.totalorder %v102, 256
    %vm105 = vmand %vm103, %vm104
    %106 = vst.msk [vmem:[#allocation2] sm:$0x3] %vm105, %v100
    // Predicated region
    $region10: #{pml_forward.3} parent=1 // pred_check
      _
    $region11: #{pml_forward.3} parent=1 // pred_check_branch
      %108 = sbr.rel (0) target = $region13
    $region12: #{pml_forward.3} parent=1 // pred_region
      %s110 = ssub.s32 32, 32
      %111 = vsyncadd [#allocation3], %s110
      %s113 = sshll.u32 [#allocation2], 4
      %s114 = int_to_ptr.vmem [resolvable:$true] %s113
      %116 = dma.vmem_to_hbm [thread:$0]  %s114, 32, %s2, [#allocation3]
    $region13: #{pml_forward.3} parent=1 // pred_fallthru
      _
    // Predicated region
    $region14: #{pml_forward.3} parent=1 // pred_check
      _
    $region15: #{pml_forward.3} parent=1 // pred_check_branch
      %118 = sbr.rel (0) target = $region17
    $region16: #{pml_forward.3} parent=1 // pred_region
      %119 = dma.done [#allocation3], 32
    $region17: #{pml_forward.3} parent=1 // pred_fallthru
      _
    %120 = vsyncpa [#allocation3], 1

// kernel: pml_forward.2
$region0: #{pml_forward.2}
  #allocation0 [shape = 'u32[]', space=smem, size = 0x4, offset = 0x4, fixed_abs, tag = 'smem constant byte address 0x4 - core index']
  #allocation1 [shape = 'u32[144,128]{1,0:T(1,128)}', space=vmem, size = 0x12000, scoped, tag = 'internal scratch']
  #allocation2 [shape = 'f32[50,768]{1,0:T(8,128)}', space=vmem, size = 0x2a000, scoped, tag = 'scratch operand']
  #allocation3 [shape = 'f32[50,768]{1,0:T(8,128)}', space=vmem, size = 0x2a000, scoped, tag = 'scratch operand']
  %s0 = inlined_call_operand.vmem [shape: f32[3,128], index: 0, kind: input, shape index: {}]
  %s1 = inlined_call_operand.vmem [shape: f32[50,3], index: 1, kind: input, shape index: {}]
  %s2 = inlined_call_operand.vmem [shape: f32[50,1], index: 2, kind: input, shape index: {}]
  %s3 = inlined_call_operand.vmem [shape: f32[50,50], index: 3, kind: input, shape index: {}]
  %s4 = inlined_call_operand.vmem [shape: f32[50,1], index: 4, kind: input, shape index: {}]
  %s5 = inlined_call_operand.vmem [shape: f32[50,50], index: 5, kind: input, shape index: {}]
  %s6 = inlined_call_operand.vmem [shape: f32[50,1], index: 6, kind: input, shape index: {}]
  %s7 = inlined_call_operand.vmem [shape: f32[50,50], index: 7, kind: input, shape index: {}]
  %s8 = inlined_call_operand.vmem [shape: f32[50,1], index: 8, kind: input, shape index: {}]
  %s9 = inlined_call_operand.vmem [shape: f32[50,50], index: 9, kind: input, shape index: {}]
  %s10 = inlined_call_operand.vmem [shape: f32[50,1], index: 10, kind: input, shape index: {}]
  %s11 = inlined_call_operand.vmem [shape: f32[2,50], index: 11, kind: input, shape index: {}]
  %s12 = inlined_call_operand.vmem [shape: f32[2,1], index: 12, kind: input, shape index: {}]
  %s13 = inlined_call_operand.vmem [shape: f32[8,128], index: 13, kind: output, shape index: {}]
  %s14 = sld [smem:[#allocation0]]
  $region62: #{pml_forward.2} parent=0
    _
  %s16 = ssub.s32 1, %s14
  %s17 = scalar_select 0, %s16, %s14
  // Predicated region
  $region2: #{pml_forward.2} parent=0 // pred_check
    _
  $region3: #{pml_forward.2} parent=0 // pred_check_branch
    %19 = sbr.rel (0) target = $region5
  $region4: #{pml_forward.2} parent=0 // pred_region
    _
  $region5: #{pml_forward.2} parent=0 // pred_fallthru
    _
  // Predicated region
  $region6: #{pml_forward.2} parent=0 // pred_check
    _
  $region7: #{pml_forward.2} parent=0 // pred_check_branch
    %21 = sbr.rel (0) target = $region9
  $region8: #{pml_forward.2} parent=0 // pred_region
    _
  $region9: #{pml_forward.2} parent=0 // pred_fallthru
    _
  // Predicated region
  $region10: #{pml_forward.2} parent=0 // pred_check
    _
  $region11: #{pml_forward.2} parent=0 // pred_check_branch
    %23 = sbr.rel (0) target = $region13
  $region12: #{pml_forward.2} parent=0 // pred_region
    _
  $region13: #{pml_forward.2} parent=0 // pred_fallthru
    _
  // Predicated region
  $region14: #{pml_forward.2} parent=0 // pred_check
    _
  $region15: #{pml_forward.2} parent=0 // pred_check_branch
    %25 = sbr.rel (0) target = $region17
  $region16: #{pml_forward.2} parent=0 // pred_region
    _
  $region17: #{pml_forward.2} parent=0 // pred_fallthru
    _
  // Predicated region
  $region18: #{pml_forward.2} parent=0 // pred_check
    _
  $region19: #{pml_forward.2} parent=0 // pred_check_branch
    %27 = sbr.rel (0) target = $region21
  $region20: #{pml_forward.2} parent=0 // pred_region
    _
  $region21: #{pml_forward.2} parent=0 // pred_fallthru
    _
  // Predicated region
  $region22: #{pml_forward.2} parent=0 // pred_check
    _
  $region23: #{pml_forward.2} parent=0 // pred_check_branch
    %29 = sbr.rel (0) target = $region25
  $region24: #{pml_forward.2} parent=0 // pred_region
    _
  $region25: #{pml_forward.2} parent=0 // pred_fallthru
    _
  // Predicated region
  $region26: #{pml_forward.2} parent=0 // pred_check
    _
  $region27: #{pml_forward.2} parent=0 // pred_check_branch
    %31 = sbr.rel (0) target = $region29
  $region28: #{pml_forward.2} parent=0 // pred_region
    _
  $region29: #{pml_forward.2} parent=0 // pred_fallthru
    _
  // Predicated region
  $region30: #{pml_forward.2} parent=0 // pred_check
    _
  $region31: #{pml_forward.2} parent=0 // pred_check_branch
    %33 = sbr.rel (0) target = $region33
  $region32: #{pml_forward.2} parent=0 // pred_region
    _
  $region33: #{pml_forward.2} parent=0 // pred_fallthru
    _
  // Predicated region
  $region34: #{pml_forward.2} parent=0 // pred_check
    _
  $region35: #{pml_forward.2} parent=0 // pred_check_branch
    %35 = sbr.rel (0) target = $region37
  $region36: #{pml_forward.2} parent=0 // pred_region
    _
  $region37: #{pml_forward.2} parent=0 // pred_fallthru
    _
  // Predicated region
  $region38: #{pml_forward.2} parent=0 // pred_check
    _
  $region39: #{pml_forward.2} parent=0 // pred_check_branch
    %37 = sbr.rel (0) target = $region41
  $region40: #{pml_forward.2} parent=0 // pred_region
    _
  $region41: #{pml_forward.2} parent=0 // pred_fallthru
    _
  // Predicated region
  $region42: #{pml_forward.2} parent=0 // pred_check
    _
  $region43: #{pml_forward.2} parent=0 // pred_check_branch
    %39 = sbr.rel (0) target = $region45
  $region44: #{pml_forward.2} parent=0 // pred_region
    _
  $region45: #{pml_forward.2} parent=0 // pred_fallthru
    _
  // Predicated region
  $region46: #{pml_forward.2} parent=0 // pred_check
    _
  $region47: #{pml_forward.2} parent=0 // pred_check_branch
    %41 = sbr.rel (0) target = $region49
  $region48: #{pml_forward.2} parent=0 // pred_region
    _
  $region49: #{pml_forward.2} parent=0 // pred_fallthru
    _
  // Predicated region
  $region50: #{pml_forward.2} parent=0 // pred_check
    _
  $region51: #{pml_forward.2} parent=0 // pred_check_branch
    %43 = sbr.rel (0) target = $region53
  $region52: #{pml_forward.2} parent=0 // pred_region
    _
  $region53: #{pml_forward.2} parent=0 // pred_fallthru
    _
  %v44 = vld [vmem:[%s0] sm:$0x7]
  %v45 = vld [vmem:[%s1] sm:$0xff]
  %v46 = vld [vmem:[%s1 + $0x8] sm:$0xff]
  %v47 = vld [vmem:[%s1 + $0x10] sm:$0xff]
  %v48 = vld [vmem:[%s1 + $0x18] sm:$0xff]
  %v49 = vld [vmem:[%s1 + $0x20] sm:$0xff]
  %v50 = vld [vmem:[%s1 + $0x28] sm:$0xff]
  %v51 = vld [vmem:[%s1 + $0x30] sm:$0x3]
  %v52 = vld [vmem:[%s2] sm:$0xff]
  %v53 = vld [vmem:[%s2 + $0x8] sm:$0xff]
  %v54 = vld [vmem:[%s2 + $0x10] sm:$0xff]
  %v55 = vld [vmem:[%s2 + $0x18] sm:$0xff]
  %v56 = vld [vmem:[%s2 + $0x20] sm:$0xff]
  %v57 = vld [vmem:[%s2 + $0x28] sm:$0xff]
  %v58 = vld [vmem:[%s2 + $0x30] sm:$0x3]
  %60 = vset.pattern.permute.xlu0 0
  %61 = vperm.xlu0 %60, %v52
  %v62 = vpop.permute.xlu0 %61
  %65 = vset.pattern.permute.xlu0 0
  %66 = vperm.xlu0 %65, %v53
  %v67 = vpop.permute.xlu0 %66
  %70 = vset.pattern.permute.xlu0 0
  %71 = vperm.xlu0 %70, %v54
  %v72 = vpop.permute.xlu0 %71
  %75 = vset.pattern.permute.xlu0 0
  %76 = vperm.xlu0 %75, %v55
  %v77 = vpop.permute.xlu0 %76
  %80 = vset.pattern.permute.xlu0 0
  %81 = vperm.xlu0 %80, %v56
  %v82 = vpop.permute.xlu0 %81
  %85 = vset.pattern.permute.xlu0 0
  %86 = vperm.xlu0 %85, %v57
  %v87 = vpop.permute.xlu0 %86
  %90 = vset.pattern.permute.xlu0 0
  %91 = vperm.xlu0 %90, %v58
  %v92 = vpop.permute.xlu0 %91
  %vm94 = vcmask 23552
  %v96 = vsel %vm94, %v45, 0
  %v99 = vsel %vm94, %v46, 0
  %v102 = vsel %vm94, %v47, 0
  %v105 = vsel %vm94, %v48, 0
  %v108 = vsel %vm94, %v49, 0
  %v111 = vsel %vm94, %v50, 0
  %v114 = vsel %vm94, %v51, 0
  %vm116 = vcmask 1042432
  %v118 = vsel %vm116, %v44, 0
  %120 = vmatprep.subr.mxu0 0.0
  %121 = vmatpush1.msra.mxu0 %v118
  %122 = vmatprep.subr.mxu0 0.0
  %123 = vmatpush1.msra.mxu0 0.0
  %124 = vmatprep.subr.mxu0 0.0
  %125 = vmatpush1.msra.mxu0 0.0
  %126 = vmatprep.subr.mxu0 0.0
  %127 = vmatpush1.msra.mxu0 0.0
  %128 = vmatprep.subr.mxu0 0.0
  %129 = vmatpush1.msra.mxu0 0.0
  %130 = vmatprep.subr.mxu0 0.0
  %131 = vmatpush1.msra.mxu0 0.0
  %132 = vmatprep.subr.mxu0 0.0
  %133 = vmatpush1.msra.mxu0 0.0
  %134 = vmatprep.subr.mxu0 0.0
  %135 = vmatpush1.msra.mxu0 0.0
  %136 = vmatprep.subr.mxu0 0.0
  %137 = vmatpush1.msra.mxu0 0.0
  %138 = vmatprep.subr.mxu0 0.0
  %139 = vmatpush1.msra.mxu0 0.0
  %140 = vmatprep.subr.mxu0 0.0
  %141 = vmatpush1.msra.mxu0 0.0
  %142 = vmatprep.subr.mxu0 0.0
  %143 = vmatpush1.msra.mxu0 0.0
  %144 = vmatprep.subr.mxu0 0.0
  %145 = vmatpush1.msra.mxu0 0.0
  %146 = vmatprep.subr.mxu0 0.0
  %147 = vmatpush1.msra.mxu0 0.0
  %148 = vmatprep.subr.mxu0 0.0
  %149 = vmatpush1.msra.mxu0 0.0
  %150 = vmatprep.subr.mxu0 0.0
  %151 = vmatpush1.msra.mxu0 0.0
  %152 = vmatprep.subr.mxu0 0.0
  %153 = vmatpush1.msra.mxu0 0.0
  %154 = vmatprep.subr.mxu0 0.0
  %155 = vmatpush1.msra.mxu0 0.0
  %156 = vmatprep.subr.mxu0 0.0
  %157 = vmatpush1.msra.mxu0 0.0
  %158 = vmatprep.subr.mxu0 0.0
  %159 = vmatpush1.msra.mxu0 0.0
  %160 = vmatprep.subr.mxu0 0.0
  %161 = vmatpush1.msra.mxu0 0.0
  %162 = vmatprep.subr.mxu0 0.0
  %163 = vmatpush1.msra.mxu0 0.0
  %164 = vmatprep.subr.mxu0 0.0
  %165 = vmatpush1.msra.mxu0 0.0
  %166 = vmatprep.subr.mxu0 0.0
  %167 = vmatpush1.msra.mxu0 0.0
  %168 = vmatprep.subr.mxu0 0.0
  %169 = vmatpush1.msra.mxu0 0.0
  %170 = vmatprep.subr.mxu0 0.0
  %171 = vmatpush1.msra.mxu0 0.0
  %172 = vmatprep.subr.mxu0 0.0
  %173 = vmatpush1.msra.mxu0 0.0
  %174 = vmatprep.subr.mxu0 0.0
  %175 = vmatpush1.msra.mxu0 0.0
  %176 = vmatprep.subr.mxu0 0.0
  %177 = vmatpush1.msra.mxu0 0.0
  %178 = vmatprep.subr.mxu0 0.0
  %179 = vmatpush1.msra.mxu0 0.0
  %180 = vmatprep.subr.mxu0 0.0
  %181 = vmatpush1.msra.mxu0 0.0
  %182 = vmatprep.subr.mxu0 0.0
  %183 = vmatpush1.msra.mxu0 0.0
  %184 = vmatprep.mubr.f32.mxu0 0.0
  %185 = vmatmul.mubr.f32.gmra.mrb[0].mxu0 %v96
  %v186 = vpop.f32.mrb[0].mxu0
  %v187 = vadd.f32 %v62, %v186
  %v188 = vpop.f32.mrb[0].mxu0
  %189 = vmatprep.mubr.f32.mxu0 0.0
  %190 = vmatmul.mubr.f32.gmra.mrb[0].mxu0 %v99
  %v191 = vpop.f32.mrb[0].mxu0
  %v192 = vadd.f32 %v67, %v191
  %v193 = vpop.f32.mrb[0].mxu0
  %194 = vmatprep.mubr.f32.mxu0 0.0
  %195 = vmatmul.mubr.f32.gmra.mrb[0].mxu0 %v102
  %v196 = vpop.f32.mrb[0].mxu0
  %v197 = vadd.f32 %v72, %v196
  %v198 = vpop.f32.mrb[0].mxu0
  %199 = vmatprep.mubr.f32.mxu0 0.0
  %200 = vmatmul.mubr.f32.gmra.mrb[0].mxu0 %v105
  %v201 = vpop.f32.mrb[0].mxu0
  %v202 = vadd.f32 %v77, %v201
  %v203 = vpop.f32.mrb[0].mxu0
  %204 = vmatprep.mubr.f32.mxu0 0.0
  %205 = vmatmul.mubr.f32.gmra.mrb[0].mxu0 %v108
  %v206 = vpop.f32.mrb[0].mxu0
  %v207 = vadd.f32 %v82, %v206
  %v208 = vpop.f32.mrb[0].mxu0
  %209 = vmatprep.mubr.f32.mxu0 0.0
  %210 = vmatmul.mubr.f32.gmra.mrb[0].mxu0 %v111
  %v211 = vpop.f32.mrb[0].mxu0
  %v212 = vadd.f32 %v87, %v211
  %v213 = vpop.f32.mrb[0].mxu0
  %214 = vmatprep.mubr.f32.mxu0 0.0
  %215 = vmatmul.mubr.f32.gmra.mrb[0].mxu0 %v114
  %v216 = vpop.f32.mrb[0].mxu0
  %v217 = vadd.f32 %v92, %v216
  %v218 = vpop.f32.mrb[0].mxu0
  %219 = vdwg.mxu0
  %v220 = vtanh.pop %v187
  %v221 = vtanh.pop %v192
  %v222 = vtanh.pop %v197
  %v223 = vtanh.pop %v202
  %v224 = vtanh.pop %v207
  %v225 = vtanh.pop %v212
  %v226 = vtanh.pop %v217
  %v227 = vmul.f32 %v220, %v220
  %v228 = vmul.f32 %v221, %v221
  %v229 = vmul.f32 %v222, %v222
  %v230 = vmul.f32 %v223, %v223
  %v231 = vmul.f32 %v224, %v224
  %v232 = vmul.f32 %v225, %v225
  %v233 = vmul.f32 %v226, %v226
  %v234 = vsub.f32 1.0, %v227
  %v235 = vsub.f32 1.0, %v228
  %v236 = vsub.f32 1.0, %v229
  %v237 = vsub.f32 1.0, %v230
  %v238 = vsub.f32 1.0, %v231
  %v239 = vsub.f32 1.0, %v232
  %v240 = vsub.f32 1.0, %v233
  %v241 = vmul.f32 %v220, 2.0
  %v242 = vmul.f32 %v221, 2.0
  %v243 = vmul.f32 %v222, 2.0
  %v244 = vmul.f32 %v223, 2.0
  %v245 = vmul.f32 %v224, 2.0
  %v246 = vmul.f32 %v225, 2.0
  %v247 = vmul.f32 %v226, 2.0
  %v248 = vmul.f32 %v241, %v234
  %v249 = vmul.f32 %v242, %v235
  %v250 = vmul.f32 %v243, %v236
  %v251 = vmul.f32 %v244, %v237
  %v252 = vmul.f32 %v245, %v238
  %v253 = vmul.f32 %v246, %v239
  %v254 = vmul.f32 %v247, %v240
  %255 = vst [vmem:[#allocation2] sm:$0xff] %v220
  %256 = vst [vmem:[#allocation2 + $0x30] sm:$0xff] %v221
  %257 = vst [vmem:[#allocation2 + $0x60] sm:$0xff] %v222
  %258 = vst [vmem:[#allocation2 + $0x90] sm:$0xff] %v223
  %259 = vst [vmem:[#allocation2 + $0xc0] sm:$0xff] %v224
  %260 = vst [vmem:[#allocation2 + $0xf0] sm:$0xff] %v225
  %261 = vst [vmem:[#allocation2 + $0x120] sm:$0x3] %v226
  %262 = vset.pattern.permute.xlu0 2
  %263 = vperm.xlu0 %262, %v45
  %v264 = vpop.permute.xlu0 %263
  %266 = vset.pattern.permute.xlu0 2
  %267 = vperm.xlu0 %266, %v46
  %v268 = vpop.permute.xlu0 %267
  %270 = vset.pattern.permute.xlu0 2
  %271 = vperm.xlu0 %270, %v47
  %v272 = vpop.permute.xlu0 %271
  %274 = vset.pattern.permute.xlu0 2
  %275 = vperm.xlu0 %274, %v48
  %v276 = vpop.permute.xlu0 %275
  %278 = vset.pattern.permute.xlu0 2
  %279 = vperm.xlu0 %278, %v49
  %v280 = vpop.permute.xlu0 %279
  %282 = vset.pattern.permute.xlu0 2
  %283 = vperm.xlu0 %282, %v50
  %v284 = vpop.permute.xlu0 %283
  %286 = vset.pattern.permute.xlu0 2
  %287 = vperm.xlu0 %286, %v51
  %v288 = vpop.permute.xlu0 %287
  %v290 = vmul.f32 %v234, %v264
  %v291 = vmul.f32 %v235, %v268
  %v292 = vmul.f32 %v236, %v272
  %v293 = vmul.f32 %v237, %v276
  %v294 = vmul.f32 %v238, %v280
  %v295 = vmul.f32 %v239, %v284
  %v296 = vmul.f32 %v240, %v288
  %297 = vst [vmem:[#allocation2 + $0x8] sm:$0xff] %v290
  %298 = vst [vmem:[#allocation2 + $0x38] sm:$0xff] %v291
  %299 = vst [vmem:[#allocation2 + $0x68] sm:$0xff] %v292
  %300 = vst [vmem:[#allocation2 + $0x98] sm:$0xff] %v293
  %301 = vst [vmem:[#allocation2 + $0xc8] sm:$0xff] %v294
  %302 = vst [vmem:[#allocation2 + $0xf8] sm:$0xff] %v295
  %303 = vst [vmem:[#allocation2 + $0x128] sm:$0x3] %v296
  %v304 = vsub.f32 0.0, %v248
  %v305 = vsub.f32 0.0, %v249
  %v306 = vsub.f32 0.0, %v250
  %v307 = vsub.f32 0.0, %v251
  %v308 = vsub.f32 0.0, %v252
  %v309 = vsub.f32 0.0, %v253
  %v310 = vsub.f32 0.0, %v254
  %v311 = vmul.f32 %v45, %v45
  %v312 = vmul.f32 %v46, %v46
  %v313 = vmul.f32 %v47, %v47
  %v314 = vmul.f32 %v48, %v48
  %v315 = vmul.f32 %v49, %v49
  %v316 = vmul.f32 %v50, %v50
  %v317 = vmul.f32 %v51, %v51
  %319 = vset.pattern.permute.xlu0 0
  %320 = vperm.xlu0 %319, %v311
  %v321 = vpop.permute.xlu0 %320
  %324 = vset.pattern.permute.xlu0 0
  %325 = vperm.xlu0 %324, %v312
  %v326 = vpop.permute.xlu0 %325
  %329 = vset.pattern.permute.xlu0 0
  %330 = vperm.xlu0 %329, %v313
  %v331 = vpop.permute.xlu0 %330
  %334 = vset.pattern.permute.xlu0 0
  %335 = vperm.xlu0 %334, %v314
  %v336 = vpop.permute.xlu0 %335
  %339 = vset.pattern.permute.xlu0 0
  %340 = vperm.xlu0 %339, %v315
  %v341 = vpop.permute.xlu0 %340
  %344 = vset.pattern.permute.xlu0 0
  %345 = vperm.xlu0 %344, %v316
  %v346 = vpop.permute.xlu0 %345
  %349 = vset.pattern.permute.xlu0 0
  %350 = vperm.xlu0 %349, %v317
  %v351 = vpop.permute.xlu0 %350
  %v353 = vmul.f32 %v304, %v321
  %v354 = vmul.f32 %v305, %v326
  %v355 = vmul.f32 %v306, %v331
  %v356 = vmul.f32 %v307, %v336
  %v357 = vmul.f32 %v308, %v341
  %v358 = vmul.f32 %v309, %v346
  %v359 = vmul.f32 %v310, %v351
  %360 = vst [vmem:[#allocation2 + $0x10] sm:$0xff] %v353
  %361 = vst [vmem:[#allocation2 + $0x40] sm:$0xff] %v354
  %362 = vst [vmem:[#allocation2 + $0x70] sm:$0xff] %v355
  %363 = vst [vmem:[#allocation2 + $0xa0] sm:$0xff] %v356
  %364 = vst [vmem:[#allocation2 + $0xd0] sm:$0xff] %v357
  %365 = vst [vmem:[#allocation2 + $0x100] sm:$0xff] %v358
  %366 = vst [vmem:[#allocation2 + $0x130] sm:$0x3] %v359
  %367 = vset.pattern.permute.xlu0 1
  %368 = vperm.xlu0 %367, %v311
  %v369 = vpop.permute.xlu0 %368
  %371 = vset.pattern.permute.xlu0 1
  %372 = vperm.xlu0 %371, %v312
  %v373 = vpop.permute.xlu0 %372
  %375 = vset.pattern.permute.xlu0 1
  %376 = vperm.xlu0 %375, %v313
  %v377 = vpop.permute.xlu0 %376
  %379 = vset.pattern.permute.xlu0 1
  %380 = vperm.xlu0 %379, %v314
  %v381 = vpop.permute.xlu0 %380
  %383 = vset.pattern.permute.xlu0 1
  %384 = vperm.xlu0 %383, %v315
  %v385 = vpop.permute.xlu0 %384
  %387 = vset.pattern.permute.xlu0 1
  %388 = vperm.xlu0 %387, %v316
  %v389 = vpop.permute.xlu0 %388
  %391 = vset.pattern.permute.xlu0 1
  %392 = vperm.xlu0 %391, %v317
  %v393 = vpop.permute.xlu0 %392
  %v395 = vmul.f32 %v304, %v369
  %v396 = vmul.f32 %v305, %v373
  %v397 = vmul.f32 %v306, %v377
  %v398 = vmul.f32 %v307, %v381
  %v399 = vmul.f32 %v308, %v385
  %v400 = vmul.f32 %v309, %v389
  %v401 = vmul.f32 %v310, %v393
  %402 = vst [vmem:[#allocation2 + $0x18] sm:$0xff] %v395
  %403 = vst [vmem:[#allocation2 + $0x48] sm:$0xff] %v396
  %404 = vst [vmem:[#allocation2 + $0x78] sm:$0xff] %v397
  %405 = vst [vmem:[#allocation2 + $0xa8] sm:$0xff] %v398
  %406 = vst [vmem:[#allocation2 + $0xd8] sm:$0xff] %v399
  %407 = vst [vmem:[#allocation2 + $0x108] sm:$0xff] %v400
  %408 = vst [vmem:[#allocation2 + $0x138] sm:$0x3] %v401
  %409 = vset.pattern.permute.xlu0 0
  %410 = vperm.xlu0 %409, %v45
  %v411 = vpop.permute.xlu0 %410
  %413 = vset.pattern.permute.xlu0 0
  %414 = vperm.xlu0 %413, %v46
  %v415 = vpop.permute.xlu0 %414
  %417 = vset.pattern.permute.xlu0 0
  %418 = vperm.xlu0 %417, %v47
  %v419 = vpop.permute.xlu0 %418
  %421 = vset.pattern.permute.xlu0 0
  %422 = vperm.xlu0 %421, %v48
  %v423 = vpop.permute.xlu0 %422
  %425 = vset.pattern.permute.xlu0 0
  %426 = vperm.xlu0 %425, %v49
  %v427 = vpop.permute.xlu0 %426
  %429 = vset.pattern.permute.xlu0 0
  %430 = vperm.xlu0 %429, %v50
  %v431 = vpop.permute.xlu0 %430
  %433 = vset.pattern.permute.xlu0 0
  %434 = vperm.xlu0 %433, %v51
  %v435 = vpop.permute.xlu0 %434
  %v437 = vmul.f32 %v234, %v411
  %v438 = vmul.f32 %v235, %v415
  %v439 = vmul.f32 %v236, %v419
  %v440 = vmul.f32 %v237, %v423
  %v441 = vmul.f32 %v238, %v427
  %v442 = vmul.f32 %v239, %v431
  %v443 = vmul.f32 %v240, %v435
  %444 = vst [vmem:[#allocation2 + $0x20] sm:$0xff] %v437
  %445 = vst [vmem:[#allocation2 + $0x50] sm:$0xff] %v438
  %446 = vst [vmem:[#allocation2 + $0x80] sm:$0xff] %v439
  %447 = vst [vmem:[#allocation2 + $0xb0] sm:$0xff] %v440
  %448 = vst [vmem:[#allocation2 + $0xe0] sm:$0xff] %v441
  %449 = vst [vmem:[#allocation2 + $0x110] sm:$0xff] %v442
  %450 = vst [vmem:[#allocation2 + $0x140] sm:$0x3] %v443
  %451 = vset.pattern.permute.xlu0 1
  %452 = vperm.xlu0 %451, %v45
  %v453 = vpop.permute.xlu0 %452
  %455 = vset.pattern.permute.xlu0 1
  %456 = vperm.xlu0 %455, %v46
  %v457 = vpop.permute.xlu0 %456
  %459 = vset.pattern.permute.xlu0 1
  %460 = vperm.xlu0 %459, %v47
  %v461 = vpop.permute.xlu0 %460
  %463 = vset.pattern.permute.xlu0 1
  %464 = vperm.xlu0 %463, %v48
  %v465 = vpop.permute.xlu0 %464
  %467 = vset.pattern.permute.xlu0 1
  %468 = vperm.xlu0 %467, %v49
  %v469 = vpop.permute.xlu0 %468
  %471 = vset.pattern.permute.xlu0 1
  %472 = vperm.xlu0 %471, %v50
  %v473 = vpop.permute.xlu0 %472
  %475 = vset.pattern.permute.xlu0 1
  %476 = vperm.xlu0 %475, %v51
  %v477 = vpop.permute.xlu0 %476
  %v479 = vmul.f32 %v234, %v453
  %v480 = vmul.f32 %v235, %v457
  %v481 = vmul.f32 %v236, %v461
  %v482 = vmul.f32 %v237, %v465
  %v483 = vmul.f32 %v238, %v469
  %v484 = vmul.f32 %v239, %v473
  %v485 = vmul.f32 %v240, %v477
  %486 = vst [vmem:[#allocation2 + $0x28] sm:$0xff] %v479
  %487 = vst [vmem:[#allocation2 + $0x58] sm:$0xff] %v480
  %488 = vst [vmem:[#allocation2 + $0x88] sm:$0xff] %v481
  %489 = vst [vmem:[#allocation2 + $0xb8] sm:$0xff] %v482
  %490 = vst [vmem:[#allocation2 + $0xe8] sm:$0xff] %v483
  %491 = vst [vmem:[#allocation2 + $0x118] sm:$0xff] %v484
  %492 = vst [vmem:[#allocation2 + $0x148] sm:$0x3] %v485
  %v493 = vld [vmem:[%s3] sm:$0xff]
  %v494 = vld [vmem:[%s3 + $0x8] sm:$0xff]
  %v495 = vld [vmem:[%s3 + $0x10] sm:$0xff]
  %v496 = vld [vmem:[%s3 + $0x18] sm:$0xff]
  %v497 = vld [vmem:[%s3 + $0x20] sm:$0xff]
  %v498 = vld [vmem:[%s3 + $0x28] sm:$0xff]
  %v499 = vld [vmem:[%s3 + $0x30] sm:$0x3]
  %v500 = vld [vmem:[%s4] sm:$0xff]
  %v501 = vld [vmem:[%s4 + $0x8] sm:$0xff]
  %v502 = vld [vmem:[%s4 + $0x10] sm:$0xff]
  %v503 = vld [vmem:[%s4 + $0x18] sm:$0xff]
  %v504 = vld [vmem:[%s4 + $0x20] sm:$0xff]
  %v505 = vld [vmem:[%s4 + $0x28] sm:$0xff]
  %v506 = vld [vmem:[%s4 + $0x30] sm:$0x3]
  %v507 = vld [vmem:[#allocation2] sm:$0xff]
  %v508 = vld [vmem:[#allocation2 + $0x8] sm:$0xff]
  %v509 = vld [vmem:[#allocation2 + $0x10] sm:$0xff]
  %v510 = vld [vmem:[#allocation2 + $0x18] sm:$0xff]
  %v511 = vld [vmem:[#allocation2 + $0x20] sm:$0xff]
  %v512 = vld [vmem:[#allocation2 + $0x28] sm:$0xff]
  %v513 = vld [vmem:[#allocation2 + $0x30] sm:$0xff]
  %v514 = vld [vmem:[#allocation2 + $0x38] sm:$0xff]
  %v515 = vld [vmem:[#allocation2 + $0x40] sm:$0xff]
  %v516 = vld [vmem:[#allocation2 + $0x48] sm:$0xff]
  %v517 = vld [vmem:[#allocation2 + $0x50] sm:$0xff]
  %v518 = vld [vmem:[#allocation2 + $0x58] sm:$0xff]
  %v519 = vld [vmem:[#allocation2 + $0x60] sm:$0xff]
  %v520 = vld [vmem:[#allocation2 + $0x68] sm:$0xff]
  %v521 = vld [vmem:[#allocation2 + $0x70] sm:$0xff]
  %v522 = vld [vmem:[#allocation2 + $0x78] sm:$0xff]
  %v523 = vld [vmem:[#allocation2 + $0x80] sm:$0xff]
  %v524 = vld [vmem:[#allocation2 + $0x88] sm:$0xff]
  %v525 = vld [vmem:[#allocation2 + $0x90] sm:$0xff]
  %v526 = vld [vmem:[#allocation2 + $0x98] sm:$0xff]
  %v527 = vld [vmem:[#allocation2 + $0xa0] sm:$0xff]
  %v528 = vld [vmem:[#allocation2 + $0xa8] sm:$0xff]
  %v529 = vld [vmem:[#allocation2 + $0xb0] sm:$0xff]
  %v530 = vld [vmem:[#allocation2 + $0xb8] sm:$0xff]
  %v531 = vld [vmem:[#allocation2 + $0xc0] sm:$0xff]
  %v532 = vld [vmem:[#allocation2 + $0xc8] sm:$0xff]
  %v533 = vld [vmem:[#allocation2 + $0xd0] sm:$0xff]
  %v534 = vld [vmem:[#allocation2 + $0xd8] sm:$0xff]
  %v535 = vld [vmem:[#allocation2 + $0xe0] sm:$0xff]
  %v536 = vld [vmem:[#allocation2 + $0xe8] sm:$0xff]
  %v537 = vld [vmem:[#allocation2 + $0xf0] sm:$0xff]
  %v538 = vld [vmem:[#allocation2 + $0xf8] sm:$0xff]
  %v539 = vld [vmem:[#allocation2 + $0x100] sm:$0xff]
  %v540 = vld [vmem:[#allocation2 + $0x108] sm:$0xff]
  %v541 = vld [vmem:[#allocation2 + $0x110] sm:$0xff]
  %v542 = vld [vmem:[#allocation2 + $0x118] sm:$0xff]
  %v543 = vld [vmem:[#allocation2 + $0x120] sm:$0x3]
  %v544 = vld [vmem:[#allocation2 + $0x128] sm:$0x3]
  %v545 = vld [vmem:[#allocation2 + $0x130] sm:$0x3]
  %v546 = vld [vmem:[#allocation2 + $0x138] sm:$0x3]
  %v547 = vld [vmem:[#allocation2 + $0x140] sm:$0x3]
  %v548 = vld [vmem:[#allocation2 + $0x148] sm:$0x3]
  %vm549 = vcmask 408576
  %v551 = vsel %vm549, %v493, 0
  %v554 = vsel %vm549, %v494, 0
  %v557 = vsel %vm549, %v495, 0
  %v560 = vsel %vm549, %v496, 0
  %v563 = vsel %vm549, %v497, 0
  %v566 = vsel %vm549, %v498, 0
  %v569 = vsel %vm549, %v499, 0
  %vm571 = vcmask 1041408
  %v573 = vsel %vm571, %v543, 0
  %v576 = vsel %vm571, %v544, 0
  %v579 = vsel %vm571, %v545, 0
  %v582 = vsel %vm571, %v546, 0
  %v585 = vsel %vm571, %v547, 0
  %v588 = vsel %vm571, %v548, 0
  %590 = vmatprep.subr.mxu0 %v508
  %591 = vmatpush1.msra.mxu0 %v507
  %592 = vmatprep.subr.mxu0 %v514
  %593 = vmatpush1.msra.mxu0 %v513
  %594 = vmatprep.subr.mxu0 %v520
  %595 = vmatpush1.msra.mxu0 %v519
  %596 = vmatprep.subr.mxu0 %v526
  %597 = vmatpush1.msra.mxu0 %v525
  %598 = vmatprep.subr.mxu0 %v532
  %599 = vmatpush1.msra.mxu0 %v531
  %600 = vmatprep.subr.mxu0 %v538
  %601 = vmatpush1.msra.mxu0 %v537
  %602 = vmatprep.subr.mxu0 %v576
  %603 = vmatpush1.msra.mxu0 %v573
  %604 = vmatprep.subr.mxu0 0.0
  %605 = vmatpush1.msra.mxu0 0.0
  %606 = vmatprep.subr.mxu0 0.0
  %607 = vmatpush1.msra.mxu0 0.0
  %608 = vmatprep.subr.mxu0 0.0
  %609 = vmatpush1.msra.mxu0 0.0
  %610 = vmatprep.subr.mxu0 0.0
  %611 = vmatpush1.msra.mxu0 0.0
  %612 = vmatprep.subr.mxu0 0.0
  %613 = vmatpush1.msra.mxu0 0.0
  %614 = vmatprep.subr.mxu0 0.0
  %615 = vmatpush1.msra.mxu0 0.0
  %616 = vmatprep.subr.mxu0 0.0
  %617 = vmatpush1.msra.mxu0 0.0
  %618 = vmatprep.subr.mxu0 0.0
  %619 = vmatpush1.msra.mxu0 0.0
  %620 = vmatprep.subr.mxu0 0.0
  %621 = vmatpush1.msra.mxu0 0.0
  %622 = vmatprep.subr.mxu0 0.0
  %623 = vmatpush1.msra.mxu0 0.0
  %624 = vmatprep.subr.mxu0 0.0
  %625 = vmatpush1.msra.mxu0 0.0
  %626 = vmatprep.subr.mxu0 0.0
  %627 = vmatpush1.msra.mxu0 0.0
  %628 = vmatprep.subr.mxu0 0.0
  %629 = vmatpush1.msra.mxu0 0.0
  %630 = vmatprep.subr.mxu0 0.0
  %631 = vmatpush1.msra.mxu0 0.0
  %632 = vmatprep.subr.mxu0 0.0
  %633 = vmatpush1.msra.mxu0 0.0
  %634 = vmatprep.subr.mxu0 0.0
  %635 = vmatpush1.msra.mxu0 0.0
  %636 = vmatprep.subr.mxu0 0.0
  %637 = vmatpush1.msra.mxu0 0.0
  %638 = vmatprep.subr.mxu0 0.0
  %639 = vmatpush1.msra.mxu0 0.0
  %640 = vmatprep.subr.mxu0 0.0
  %641 = vmatpush1.msra.mxu0 0.0
  %642 = vmatprep.subr.mxu0 0.0
  %643 = vmatpush1.msra.mxu0 0.0
  %644 = vmatprep.subr.mxu0 0.0
  %645 = vmatpush1.msra.mxu0 0.0
  %646 = vmatprep.subr.mxu0 0.0
  %647 = vmatpush1.msra.mxu0 0.0
  %648 = vmatprep.subr.mxu0 0.0
  %649 = vmatpush1.msra.mxu0 0.0
  %650 = vmatprep.subr.mxu0 0.0
  %651 = vmatpush1.msra.mxu0 0.0
  %652 = vmatprep.subr.mxu0 0.0
  %653 = vmatpush1.msra.mxu0 0.0
  %654 = vmatprep.mubr.f32.mxu0 0.0
  %655 = vmatmul.mubr.f32.gmra.mrb[0].mxu0 %v551
  %v656 = vpop.f32.mrb[0].mxu0
  %v657 = vadd.f32 0.0, %v656
  %v658 = vpop.f32.mrb[0].mxu0
  %v659 = vadd.f32 0.0, %v658
  %660 = vmatprep.mubr.f32.mxu0 0.0
  %661 = vmatmul.mubr.f32.gmra.mrb[0].mxu0 %v554
  %v662 = vpop.f32.mrb[0].mxu0
  %v663 = vadd.f32 0.0, %v662
  %v664 = vpop.f32.mrb[0].mxu0
  %v665 = vadd.f32 0.0, %v664
  %666 = vmatprep.mubr.f32.mxu0 0.0
  %667 = vmatmul.mubr.f32.gmra.mrb[0].mxu0 %v557
  %v668 = vpop.f32.mrb[0].mxu0
  %v669 = vadd.f32 0.0, %v668
  %v670 = vpop.f32.mrb[0].mxu0
  %v671 = vadd.f32 0.0, %v670
  %672 = vmatprep.mubr.f32.mxu0 0.0
  %673 = vmatmul.mubr.f32.gmra.mrb[0].mxu0 %v560
  %v674 = vpop.f32.mrb[0].mxu0
  %v675 = vadd.f32 0.0, %v674
  %v676 = vpop.f32.mrb[0].mxu0
  %v677 = vadd.f32 0.0, %v676
  %678 = vmatprep.mubr.f32.mxu0 0.0
  %679 = vmatmul.mubr.f32.gmra.mrb[0].mxu0 %v563
  %v680 = vpop.f32.mrb[0].mxu0
  %v681 = vadd.f32 0.0, %v680
  %v682 = vpop.f32.mrb[0].mxu0
  %v683 = vadd.f32 0.0, %v682
  %684 = vmatprep.mubr.f32.mxu0 0.0
  %685 = vmatmul.mubr.f32.gmra.mrb[0].mxu0 %v566
  %v686 = vpop.f32.mrb[0].mxu0
  %v687 = vadd.f32 0.0, %v686
  %v688 = vpop.f32.mrb[0].mxu0
  %v689 = vadd.f32 0.0, %v688
  %690 = vmatprep.mubr.f32.mxu0 0.0
  %691 = vmatmul.mubr.f32.gmra.mrb[0].mxu0 %v569
  %v692 = vpop.f32.mrb[0].mxu0
  %v693 = vadd.f32 0.0, %v692
  %v694 = vpop.f32.mrb[0].mxu0
  %v695 = vadd.f32 0.0, %v694
  %696 = vdwg.mxu0
  %697 = vmatprep.subr.mxu0 %v510
  %698 = vmatpush1.msra.mxu0 %v509
  %699 = vmatprep.subr.mxu0 %v516
  %700 = vmatpush1.msra.mxu0 %v515
  %701 = vmatprep.subr.mxu0 %v522
  %702 = vmatpush1.msra.mxu0 %v521
  %703 = vmatprep.subr.mxu0 %v528
  %704 = vmatpush1.msra.mxu0 %v527
  %705 = vmatprep.subr.mxu0 %v534
  %706 = vmatpush1.msra.mxu0 %v533
  %707 = vmatprep.subr.mxu0 %v540
  %708 = vmatpush1.msra.mxu0 %v539
  %709 = vmatprep.subr.mxu0 %v582
  %710 = vmatpush1.msra.mxu0 %v579
  %711 = vmatprep.subr.mxu0 0.0
  %712 = vmatpush1.msra.mxu0 0.0
  %713 = vmatprep.subr.mxu0 0.0
  %714 = vmatpush1.msra.mxu0 0.0
  %715 = vmatprep.subr.mxu0 0.0
  %716 = vmatpush1.msra.mxu0 0.0
  %717 = vmatprep.subr.mxu0 0.0
  %718 = vmatpush1.msra.mxu0 0.0
  %719 = vmatprep.subr.mxu0 0.0
  %720 = vmatpush1.msra.mxu0 0.0
  %721 = vmatprep.subr.mxu0 0.0
  %722 = vmatpush1.msra.mxu0 0.0
  %723 = vmatprep.subr.mxu0 0.0
  %724 = vmatpush1.msra.mxu0 0.0
  %725 = vmatprep.subr.mxu0 0.0
  %726 = vmatpush1.msra.mxu0 0.0
  %727 = vmatprep.subr.mxu0 0.0
  %728 = vmatpush1.msra.mxu0 0.0
  %729 = vmatprep.subr.mxu0 0.0
  %730 = vmatpush1.msra.mxu0 0.0
  %731 = vmatprep.subr.mxu0 0.0
  %732 = vmatpush1.msra.mxu0 0.0
  %733 = vmatprep.subr.mxu0 0.0
  %734 = vmatpush1.msra.mxu0 0.0
  %735 = vmatprep.subr.mxu0 0.0
  %736 = vmatpush1.msra.mxu0 0.0
  %737 = vmatprep.subr.mxu0 0.0
  %738 = vmatpush1.msra.mxu0 0.0
  %739 = vmatprep.subr.mxu0 0.0
  %740 = vmatpush1.msra.mxu0 0.0
  %741 = vmatprep.subr.mxu0 0.0
  %742 = vmatpush1.msra.mxu0 0.0
  %743 = vmatprep.subr.mxu0 0.0
  %744 = vmatpush1.msra.mxu0 0.0
  %745 = vmatprep.subr.mxu0 0.0
  %746 = vmatpush1.msra.mxu0 0.0
  %747 = vmatprep.subr.mxu0 0.0
  %748 = vmatpush1.msra.mxu0 0.0
  %749 = vmatprep.subr.mxu0 0.0
  %750 = vmatpush1.msra.mxu0 0.0
  %751 = vmatprep.subr.mxu0 0.0
  %752 = vmatpush1.msra.mxu0 0.0
  %753 = vmatprep.subr.mxu0 0.0
  %754 = vmatpush1.msra.mxu0 0.0
  %755 = vmatprep.subr.mxu0 0.0
  %756 = vmatpush1.msra.mxu0 0.0
  %757 = vmatprep.subr.mxu0 0.0
  %758 = vmatpush1.msra.mxu0 0.0
  %759 = vmatprep.subr.mxu0 0.0
  %760 = vmatpush1.msra.mxu0 0.0
  %761 = vmatprep.mubr.f32.mxu0 0.0
  %762 = vmatmul.mubr.f32.gmra.mrb[0].mxu0 %v551
  %v763 = vpop.f32.mrb[0].mxu0
  %v764 = vadd.f32 0.0, %v763
  %v765 = vpop.f32.mrb[0].mxu0
  %v766 = vadd.f32 0.0, %v765
  %767 = vmatprep.mubr.f32.mxu0 0.0
  %768 = vmatmul.mubr.f32.gmra.mrb[0].mxu0 %v554
  %v769 = vpop.f32.mrb[0].mxu0
  %v770 = vadd.f32 0.0, %v769
  %v771 = vpop.f32.mrb[0].mxu0
  %v772 = vadd.f32 0.0, %v771
  %773 = vmatprep.mubr.f32.mxu0 0.0
  %774 = vmatmul.mubr.f32.gmra.mrb[0].mxu0 %v557
  %v775 = vpop.f32.mrb[0].mxu0
  %v776 = vadd.f32 0.0, %v775
  %v777 = vpop.f32.mrb[0].mxu0
  %v778 = vadd.f32 0.0, %v777
  %779 = vmatprep.mubr.f32.mxu0 0.0
  %780 = vmatmul.mubr.f32.gmra.mrb[0].mxu0 %v560
  %v781 = vpop.f32.mrb[0].mxu0
  %v782 = vadd.f32 0.0, %v781
  %v783 = vpop.f32.mrb[0].mxu0
  %v784 = vadd.f32 0.0, %v783
  %785 = vmatprep.mubr.f32.mxu0 0.0
  %786 = vmatmul.mubr.f32.gmra.mrb[0].mxu0 %v563
  %v787 = vpop.f32.mrb[0].mxu0
  %v788 = vadd.f32 0.0, %v787
  %v789 = vpop.f32.mrb[0].mxu0
  %v790 = vadd.f32 0.0, %v789
  %791 = vmatprep.mubr.f32.mxu0 0.0
  %792 = vmatmul.mubr.f32.gmra.mrb[0].mxu0 %v566
  %v793 = vpop.f32.mrb[0].mxu0
  %v794 = vadd.f32 0.0, %v793
  %v795 = vpop.f32.mrb[0].mxu0
  %v796 = vadd.f32 0.0, %v795
  %797 = vmatprep.mubr.f32.mxu0 0.0
  %798 = vmatmul.mubr.f32.gmra.mrb[0].mxu0 %v569
  %v799 = vpop.f32.mrb[0].mxu0
  %v800 = vadd.f32 0.0, %v799
  %v801 = vpop.f32.mrb[0].mxu0
  %v802 = vadd.f32 0.0, %v801
  %803 = vdwg.mxu0
  %804 = vmatprep.subr.mxu0 %v512
  %805 = vmatpush1.msra.mxu0 %v511
  %806 = vmatprep.subr.mxu0 %v518
  %807 = vmatpush1.msra.mxu0 %v517
  %808 = vmatprep.subr.mxu0 %v524
  %809 = vmatpush1.msra.mxu0 %v523
  %810 = vmatprep.subr.mxu0 %v530
  %811 = vmatpush1.msra.mxu0 %v529
  %812 = vmatprep.subr.mxu0 %v536
  %813 = vmatpush1.msra.mxu0 %v535
  %814 = vmatprep.subr.mxu0 %v542
  %815 = vmatpush1.msra.mxu0 %v541
  %816 = vmatprep.subr.mxu0 %v588
  %817 = vmatpush1.msra.mxu0 %v585
  %818 = vmatprep.subr.mxu0 0.0
  %819 = vmatpush1.msra.mxu0 0.0
  %820 = vmatprep.subr.mxu0 0.0
  %821 = vmatpush1.msra.mxu0 0.0
  %822 = vmatprep.subr.mxu0 0.0
  %823 = vmatpush1.msra.mxu0 0.0
  %824 = vmatprep.subr.mxu0 0.0
  %825 = vmatpush1.msra.mxu0 0.0
  %826 = vmatprep.subr.mxu0 0.0
  %827 = vmatpush1.msra.mxu0 0.0
  %828 = vmatprep.subr.mxu0 0.0
  %829 = vmatpush1.msra.mxu0 0.0
  %830 = vmatprep.subr.mxu0 0.0
  %831 = vmatpush1.msra.mxu0 0.0
  %832 = vmatprep.subr.mxu0 0.0
  %833 = vmatpush1.msra.mxu0 0.0
  %834 = vmatprep.subr.mxu0 0.0
  %835 = vmatpush1.msra.mxu0 0.0
  %836 = vmatprep.subr.mxu0 0.0
  %837 = vmatpush1.msra.mxu0 0.0
  %838 = vmatprep.subr.mxu0 0.0
  %839 = vmatpush1.msra.mxu0 0.0
  %840 = vmatprep.subr.mxu0 0.0
  %841 = vmatpush1.msra.mxu0 0.0
  %842 = vmatprep.subr.mxu0 0.0
  %843 = vmatpush1.msra.mxu0 0.0
  %844 = vmatprep.subr.mxu0 0.0
  %845 = vmatpush1.msra.mxu0 0.0
  %846 = vmatprep.subr.mxu0 0.0
  %847 = vmatpush1.msra.mxu0 0.0
  %848 = vmatprep.subr.mxu0 0.0
  %849 = vmatpush1.msra.mxu0 0.0
  %850 = vmatprep.subr.mxu0 0.0
  %851 = vmatpush1.msra.mxu0 0.0
  %852 = vmatprep.subr.mxu0 0.0
  %853 = vmatpush1.msra.mxu0 0.0
  %854 = vmatprep.subr.mxu0 0.0
  %855 = vmatpush1.msra.mxu0 0.0
  %856 = vmatprep.subr.mxu0 0.0
  %857 = vmatpush1.msra.mxu0 0.0
  %858 = vmatprep.subr.mxu0 0.0
  %859 = vmatpush1.msra.mxu0 0.0
  %860 = vmatprep.subr.mxu0 0.0
  %861 = vmatpush1.msra.mxu0 0.0
  %862 = vmatprep.subr.mxu0 0.0
  %863 = vmatpush1.msra.mxu0 0.0
  %864 = vmatprep.subr.mxu0 0.0
  %865 = vmatpush1.msra.mxu0 0.0
  %866 = vmatprep.subr.mxu0 0.0
  %867 = vmatpush1.msra.mxu0 0.0
  %868 = vmatprep.mubr.f32.mxu0 0.0
  %869 = vmatmul.mubr.f32.gmra.mrb[0].mxu0 %v551
  %v870 = vpop.f32.mrb[0].mxu0
  %v871 = vadd.f32 0.0, %v870
  %v872 = vpop.f32.mrb[0].mxu0
  %v873 = vadd.f32 0.0, %v872
  %874 = vmatprep.mubr.f32.mxu0 0.0
  %875 = vmatmul.mubr.f32.gmra.mrb[0].mxu0 %v554
  %v876 = vpop.f32.mrb[0].mxu0
  %v877 = vadd.f32 0.0, %v876
  %v878 = vpop.f32.mrb[0].mxu0
  %v879 = vadd.f32 0.0, %v878
  %880 = vmatprep.mubr.f32.mxu0 0.0
  %881 = vmatmul.mubr.f32.gmra.mrb[0].mxu0 %v557
  %v882 = vpop.f32.mrb[0].mxu0
  %v883 = vadd.f32 0.0, %v882
  %v884 = vpop.f32.mrb[0].mxu0
  %v885 = vadd.f32 0.0, %v884
  %886 = vmatprep.mubr.f32.mxu0 0.0
  %887 = vmatmul.mubr.f32.gmra.mrb[0].mxu0 %v560
  %v888 = vpop.f32.mrb[0].mxu0
  %v889 = vadd.f32 0.0, %v888
  %v890 = vpop.f32.mrb[0].mxu0
  %v891 = vadd.f32 0.0, %v890
  %892 = vmatprep.mubr.f32.mxu0 0.0
  %893 = vmatmul.mubr.f32.gmra.mrb[0].mxu0 %v563
  %v894 = vpop.f32.mrb[0].mxu0
  %v895 = vadd.f32 0.0, %v894
  %v896 = vpop.f32.mrb[0].mxu0
  %v897 = vadd.f32 0.0, %v896
  %898 = vmatprep.mubr.f32.mxu0 0.0
  %899 = vmatmul.mubr.f32.gmra.mrb[0].mxu0 %v566
  %v900 = vpop.f32.mrb[0].mxu0
  %v901 = vadd.f32 0.0, %v900
  %v902 = vpop.f32.mrb[0].mxu0
  %v903 = vadd.f32 0.0, %v902
  %904 = vmatprep.mubr.f32.mxu0 0.0
  %905 = vmatmul.mubr.f32.gmra.mrb[0].mxu0 %v569
  %v906 = vpop.f32.mrb[0].mxu0
  %v907 = vadd.f32 0.0, %v906
  %v908 = vpop.f32.mrb[0].mxu0
  %v909 = vadd.f32 0.0, %v908
  %910 = vdwg.mxu0
  %912 = vset.pattern.permute.xlu0 0
  %913 = vperm.xlu0 %912, %v500
  %v914 = vpop.permute.xlu0 %913
  %917 = vset.pattern.permute.xlu0 0
  %918 = vperm.xlu0 %917, %v501
  %v919 = vpop.permute.xlu0 %918
  %922 = vset.pattern.permute.xlu0 0
  %923 = vperm.xlu0 %922, %v502
  %v924 = vpop.permute.xlu0 %923
  %927 = vset.pattern.permute.xlu0 0
  %928 = vperm.xlu0 %927, %v503
  %v929 = vpop.permute.xlu0 %928
  %932 = vset.pattern.permute.xlu0 0
  %933 = vperm.xlu0 %932, %v504
  %v934 = vpop.permute.xlu0 %933
  %937 = vset.pattern.permute.xlu0 0
  %938 = vperm.xlu0 %937, %v505
  %v939 = vpop.permute.xlu0 %938
  %942 = vset.pattern.permute.xlu0 0
  %943 = vperm.xlu0 %942, %v506
  %v944 = vpop.permute.xlu0 %943
  %v946 = vadd.f32 %v657, %v914
  %v947 = vadd.f32 %v663, %v919
  %v948 = vadd.f32 %v669, %v924
  %v949 = vadd.f32 %v675, %v929
  %v950 = vadd.f32 %v681, %v934
  %v951 = vadd.f32 %v687, %v939
  %v952 = vadd.f32 %v693, %v944
  %v953 = vtanh.pop %v946
  %v954 = vtanh.pop %v947
  %v955 = vtanh.pop %v948
  %v956 = vtanh.pop %v949
  %v957 = vtanh.pop %v950
  %v958 = vtanh.pop %v951
  %v959 = vtanh.pop %v952
  %v960 = vmul.f32 %v953, %v953
  %v961 = vmul.f32 %v954, %v954
  %v962 = vmul.f32 %v955, %v955
  %v963 = vmul.f32 %v956, %v956
  %v964 = vmul.f32 %v957, %v957
  %v965 = vmul.f32 %v958, %v958
  %v966 = vmul.f32 %v959, %v959
  %v967 = vsub.f32 1.0, %v960
  %v968 = vsub.f32 1.0, %v961
  %v969 = vsub.f32 1.0, %v962
  %v970 = vsub.f32 1.0, %v963
  %v971 = vsub.f32 1.0, %v964
  %v972 = vsub.f32 1.0, %v965
  %v973 = vsub.f32 1.0, %v966
  %v974 = vmul.f32 %v953, 2.0
  %v975 = vmul.f32 %v954, 2.0
  %v976 = vmul.f32 %v955, 2.0
  %v977 = vmul.f32 %v956, 2.0
  %v978 = vmul.f32 %v957, 2.0
  %v979 = vmul.f32 %v958, 2.0
  %v980 = vmul.f32 %v959, 2.0
  %v981 = vmul.f32 %v974, %v967
  %v982 = vmul.f32 %v975, %v968
  %v983 = vmul.f32 %v976, %v969
  %v984 = vmul.f32 %v977, %v970
  %v985 = vmul.f32 %v978, %v971
  %v986 = vmul.f32 %v979, %v972
  %v987 = vmul.f32 %v980, %v973
  %988 = vst [vmem:[#allocation3] sm:$0xff] %v953
  %989 = vst [vmem:[#allocation3 + $0x30] sm:$0xff] %v954
  %990 = vst [vmem:[#allocation3 + $0x60] sm:$0xff] %v955
  %991 = vst [vmem:[#allocation3 + $0x90] sm:$0xff] %v956
  %992 = vst [vmem:[#allocation3 + $0xc0] sm:$0xff] %v957
  %993 = vst [vmem:[#allocation3 + $0xf0] sm:$0xff] %v958
  %994 = vst [vmem:[#allocation3 + $0x120] sm:$0x3] %v959
  %v995 = vmul.f32 %v967, %v659
  %v996 = vmul.f32 %v968, %v665
  %v997 = vmul.f32 %v969, %v671
  %v998 = vmul.f32 %v970, %v677
  %v999 = vmul.f32 %v971, %v683
  %v1000 = vmul.f32 %v972, %v689
  %v1001 = vmul.f32 %v973, %v695
  %1002 = vst [vmem:[#allocation3 + $0x8] sm:$0xff] %v995
  %1003 = vst [vmem:[#allocation3 + $0x38] sm:$0xff] %v996
  %1004 = vst [vmem:[#allocation3 + $0x68] sm:$0xff] %v997
  %1005 = vst [vmem:[#allocation3 + $0x98] sm:$0xff] %v998
  %1006 = vst [vmem:[#allocation3 + $0xc8] sm:$0xff] %v999
  %1007 = vst [vmem:[#allocation3 + $0xf8] sm:$0xff] %v1000
  %1008 = vst [vmem:[#allocation3 + $0x128] sm:$0x3] %v1001
  %v1009 = vmul.f32 %v967, %v764
  %v1010 = vmul.f32 %v968, %v770
  %v1011 = vmul.f32 %v969, %v776
  %v1012 = vmul.f32 %v970, %v782
  %v1013 = vmul.f32 %v971, %v788
  %v1014 = vmul.f32 %v972, %v794
  %v1015 = vmul.f32 %v973, %v800
  %v1016 = vmul.f32 %v871, %v871
  %v1017 = vmul.f32 %v877, %v877
  %v1018 = vmul.f32 %v883, %v883
  %v1019 = vmul.f32 %v889, %v889
  %v1020 = vmul.f32 %v895, %v895
  %v1021 = vmul.f32 %v901, %v901
  %v1022 = vmul.f32 %v907, %v907
  %v1023 = vmul.f32 %v981, %v1016
  %v1024 = vmul.f32 %v982, %v1017
  %v1025 = vmul.f32 %v983, %v1018
  %v1026 = vmul.f32 %v984, %v1019
  %v1027 = vmul.f32 %v985, %v1020
  %v1028 = vmul.f32 %v986, %v1021
  %v1029 = vmul.f32 %v987, %v1022
  %v1030 = vsub.f32 %v1009, %v1023
  %v1031 = vsub.f32 %v1010, %v1024
  %v1032 = vsub.f32 %v1011, %v1025
  %v1033 = vsub.f32 %v1012, %v1026
  %v1034 = vsub.f32 %v1013, %v1027
  %v1035 = vsub.f32 %v1014, %v1028
  %v1036 = vsub.f32 %v1015, %v1029
  %1037 = vst [vmem:[#allocation3 + $0x10] sm:$0xff] %v1030
  %1038 = vst [vmem:[#allocation3 + $0x40] sm:$0xff] %v1031
  %1039 = vst [vmem:[#allocation3 + $0x70] sm:$0xff] %v1032
  %1040 = vst [vmem:[#allocation3 + $0xa0] sm:$0xff] %v1033
  %1041 = vst [vmem:[#allocation3 + $0xd0] sm:$0xff] %v1034
  %1042 = vst [vmem:[#allocation3 + $0x100] sm:$0xff] %v1035
  %1043 = vst [vmem:[#allocation3 + $0x130] sm:$0x3] %v1036
  %v1044 = vmul.f32 %v967, %v766
  %v1045 = vmul.f32 %v968, %v772
  %v1046 = vmul.f32 %v969, %v778
  %v1047 = vmul.f32 %v970, %v784
  %v1048 = vmul.f32 %v971, %v790
  %v1049 = vmul.f32 %v972, %v796
  %v1050 = vmul.f32 %v973, %v802
  %v1051 = vmul.f32 %v873, %v873
  %v1052 = vmul.f32 %v879, %v879
  %v1053 = vmul.f32 %v885, %v885
  %v1054 = vmul.f32 %v891, %v891
  %v1055 = vmul.f32 %v897, %v897
  %v1056 = vmul.f32 %v903, %v903
  %v1057 = vmul.f32 %v909, %v909
  %v1058 = vmul.f32 %v981, %v1051
  %v1059 = vmul.f32 %v982, %v1052
  %v1060 = vmul.f32 %v983, %v1053
  %v1061 = vmul.f32 %v984, %v1054
  %v1062 = vmul.f32 %v985, %v1055
  %v1063 = vmul.f32 %v986, %v1056
  %v1064 = vmul.f32 %v987, %v1057
  %v1065 = vsub.f32 %v1044, %v1058
  %v1066 = vsub.f32 %v1045, %v1059
  %v1067 = vsub.f32 %v1046, %v1060
  %v1068 = vsub.f32 %v1047, %v1061
  %v1069 = vsub.f32 %v1048, %v1062
  %v1070 = vsub.f32 %v1049, %v1063
  %v1071 = vsub.f32 %v1050, %v1064
  %1072 = vst [vmem:[#allocation3 + $0x18] sm:$0xff] %v1065
  %1073 = vst [vmem:[#allocation3 + $0x48] sm:$0xff] %v1066
  %1074 = vst [vmem:[#allocation3 + $0x78] sm:$0xff] %v1067
  %1075 = vst [vmem:[#allocation3 + $0xa8] sm:$0xff] %v1068
  %1076 = vst [vmem:[#allocation3 + $0xd8] sm:$0xff] %v1069
  %1077 = vst [vmem:[#allocation3 + $0x108] sm:$0xff] %v1070
  %1078 = vst [vmem:[#allocation3 + $0x138] sm:$0x3] %v1071
  %v1079 = vmul.f32 %v967, %v871
  %v1080 = vmul.f32 %v968, %v877
  %v1081 = vmul.f32 %v969, %v883
  %v1082 = vmul.f32 %v970, %v889
  %v1083 = vmul.f32 %v971, %v895
  %v1084 = vmul.f32 %v972, %v901
  %v1085 = vmul.f32 %v973, %v907
  %1086 = vst [vmem:[#allocation3 + $0x20] sm:$0xff] %v1079
  %1087 = vst [vmem:[#allocation3 + $0x50] sm:$0xff] %v1080
  %1088 = vst [vmem:[#allocation3 + $0x80] sm:$0xff] %v1081
  %1089 = vst [vmem:[#allocation3 + $0xb0] sm:$0xff] %v1082
  %1090 = vst [vmem:[#allocation3 + $0xe0] sm:$0xff] %v1083
  %1091 = vst [vmem:[#allocation3 + $0x110] sm:$0xff] %v1084
  %1092 = vst [vmem:[#allocation3 + $0x140] sm:$0x3] %v1085
  %v1093 = vmul.f32 %v967, %v873
  %v1094 = vmul.f32 %v968, %v879
  %v1095 = vmul.f32 %v969, %v885
  %v1096 = vmul.f32 %v970, %v891
  %v1097 = vmul.f32 %v971, %v897
  %v1098 = vmul.f32 %v972, %v903
  %v1099 = vmul.f32 %v973, %v909
  %1100 = vst [vmem:[#allocation3 + $0x28] sm:$0xff] %v1093
  %1101 = vst [vmem:[#allocation3 + $0x58] sm:$0xff] %v1094
  %1102 = vst [vmem:[#allocation3 + $0x88] sm:$0xff] %v1095
  %1103 = vst [vmem:[#allocation3 + $0xb8] sm:$0xff] %v1096
  %1104 = vst [vmem:[#allocation3 + $0xe8] sm:$0xff] %v1097
  %1105 = vst [vmem:[#allocation3 + $0x118] sm:$0xff] %v1098
  %1106 = vst [vmem:[#allocation3 + $0x148] sm:$0x3] %v1099
  %v1107 = vld [vmem:[%s5] sm:$0xff]
  %v1108 = vld [vmem:[%s5 + $0x8] sm:$0xff]
  %v1109 = vld [vmem:[%s5 + $0x10] sm:$0xff]
  %v1110 = vld [vmem:[%s5 + $0x18] sm:$0xff]
  %v1111 = vld [vmem:[%s5 + $0x20] sm:$0xff]
  %v1112 = vld [vmem:[%s5 + $0x28] sm:$0xff]
  %v1113 = vld [vmem:[%s5 + $0x30] sm:$0x3]
  %v1114 = vld [vmem:[%s6] sm:$0xff]
  %v1115 = vld [vmem:[%s6 + $0x8] sm:$0xff]
  %v1116 = vld [vmem:[%s6 + $0x10] sm:$0xff]
  %v1117 = vld [vmem:[%s6 + $0x18] sm:$0xff]
  %v1118 = vld [vmem:[%s6 + $0x20] sm:$0xff]
  %v1119 = vld [vmem:[%s6 + $0x28] sm:$0xff]
  %v1120 = vld [vmem:[%s6 + $0x30] sm:$0x3]
  %v1121 = vld [vmem:[#allocation3] sm:$0xff]
  %v1122 = vld [vmem:[#allocation3 + $0x8] sm:$0xff]
  %v1123 = vld [vmem:[#allocation3 + $0x10] sm:$0xff]
  %v1124 = vld [vmem:[#allocation3 + $0x18] sm:$0xff]
  %v1125 = vld [vmem:[#allocation3 + $0x20] sm:$0xff]
  %v1126 = vld [vmem:[#allocation3 + $0x28] sm:$0xff]
  %v1127 = vld [vmem:[#allocation3 + $0x30] sm:$0xff]
  %v1128 = vld [vmem:[#allocation3 + $0x38] sm:$0xff]
  %v1129 = vld [vmem:[#allocation3 + $0x40] sm:$0xff]
  %v1130 = vld [vmem:[#allocation3 + $0x48] sm:$0xff]
  %v1131 = vld [vmem:[#allocation3 + $0x50] sm:$0xff]
  %v1132 = vld [vmem:[#allocation3 + $0x58] sm:$0xff]
  %v1133 = vld [vmem:[#allocation3 + $0x60] sm:$0xff]
  %v1134 = vld [vmem:[#allocation3 + $0x68] sm:$0xff]
  %v1135 = vld [vmem:[#allocation3 + $0x70] sm:$0xff]
  %v1136 = vld [vmem:[#allocation3 + $0x78] sm:$0xff]
  %v1137 = vld [vmem:[#allocation3 + $0x80] sm:$0xff]
  %v1138 = vld [vmem:[#allocation3 + $0x88] sm:$0xff]
  %v1139 = vld [vmem:[#allocation3 + $0x90] sm:$0xff]
  %v1140 = vld [vmem:[#allocation3 + $0x98] sm:$0xff]
  %v1141 = vld [vmem:[#allocation3 + $0xa0] sm:$0xff]
  %v1142 = vld [vmem:[#allocation3 + $0xa8] sm:$0xff]
  %v1143 = vld [vmem:[#allocation3 + $0xb0] sm:$0xff]
  %v1144 = vld [vmem:[#allocation3 + $0xb8] sm:$0xff]
  %v1145 = vld [vmem:[#allocation3 + $0xc0] sm:$0xff]
  %v1146 = vld [vmem:[#allocation3 + $0xc8] sm:$0xff]
  %v1147 = vld [vmem:[#allocation3 + $0xd0] sm:$0xff]
  %v1148 = vld [vmem:[#allocation3 + $0xd8] sm:$0xff]
  %v1149 = vld [vmem:[#allocation3 + $0xe0] sm:$0xff]
  %v1150 = vld [vmem:[#allocation3 + $0xe8] sm:$0xff]
  %v1151 = vld [vmem:[#allocation3 + $0xf0] sm:$0xff]
  %v1152 = vld [vmem:[#allocation3 + $0xf8] sm:$0xff]
  %v1153 = vld [vmem:[#allocation3 + $0x100] sm:$0xff]
  %v1154 = vld [vmem:[#allocation3 + $0x108] sm:$0xff]
  %v1155 = vld [vmem:[#allocation3 + $0x110] sm:$0xff]
  %v1156 = vld [vmem:[#allocation3 + $0x118] sm:$0xff]
  %v1157 = vld [vmem:[#allocation3 + $0x120] sm:$0x3]
  %v1158 = vld [vmem:[#allocation3 + $0x128] sm:$0x3]
  %v1159 = vld [vmem:[#allocation3 + $0x130] sm:$0x3]
  %v1160 = vld [vmem:[#allocation3 + $0x138] sm:$0x3]
  %v1161 = vld [vmem:[#allocation3 + $0x140] sm:$0x3]
  %v1162 = vld [vmem:[#allocation3 + $0x148] sm:$0x3]
  %v1164 = vsel %vm549, %v1107, 0
  %v1167 = vsel %vm549, %v1108, 0
  %v1170 = vsel %vm549, %v1109, 0
  %v1173 = vsel %vm549, %v1110, 0
  %v1176 = vsel %vm549, %v1111, 0
  %v1179 = vsel %vm549, %v1112, 0
  %v1182 = vsel %vm549, %v1113, 0
  %v1185 = vsel %vm571, %v1157, 0
  %v1188 = vsel %vm571, %v1158, 0
  %v1191 = vsel %vm571, %v1159, 0
  %v1194 = vsel %vm571, %v1160, 0
  %v1197 = vsel %vm571, %v1161, 0
  %v1200 = vsel %vm571, %v1162, 0
  %1202 = vmatprep.subr.mxu0 %v1122
  %1203 = vmatpush1.msra.mxu0 %v1121
  %1204 = vmatprep.subr.mxu0 %v1128
  %1205 = vmatpush1.msra.mxu0 %v1127
  %1206 = vmatprep.subr.mxu0 %v1134
  %1207 = vmatpush1.msra.mxu0 %v1133
  %1208 = vmatprep.subr.mxu0 %v1140
  %1209 = vmatpush1.msra.mxu0 %v1139
  %1210 = vmatprep.subr.mxu0 %v1146
  %1211 = vmatpush1.msra.mxu0 %v1145
  %1212 = vmatprep.subr.mxu0 %v1152
  %1213 = vmatpush1.msra.mxu0 %v1151
  %1214 = vmatprep.subr.mxu0 %v1188
  %1215 = vmatpush1.msra.mxu0 %v1185
  %1216 = vmatprep.subr.mxu0 0.0
  %1217 = vmatpush1.msra.mxu0 0.0
  %1218 = vmatprep.subr.mxu0 0.0
  %1219 = vmatpush1.msra.mxu0 0.0
  %1220 = vmatprep.subr.mxu0 0.0
  %1221 = vmatpush1.msra.mxu0 0.0
  %1222 = vmatprep.subr.mxu0 0.0
  %1223 = vmatpush1.msra.mxu0 0.0
  %1224 = vmatprep.subr.mxu0 0.0
  %1225 = vmatpush1.msra.mxu0 0.0
  %1226 = vmatprep.subr.mxu0 0.0
  %1227 = vmatpush1.msra.mxu0 0.0
  %1228 = vmatprep.subr.mxu0 0.0
  %1229 = vmatpush1.msra.mxu0 0.0
  %1230 = vmatprep.subr.mxu0 0.0
  %1231 = vmatpush1.msra.mxu0 0.0
  %1232 = vmatprep.subr.mxu0 0.0
  %1233 = vmatpush1.msra.mxu0 0.0
  %1234 = vmatprep.subr.mxu0 0.0
  %1235 = vmatpush1.msra.mxu0 0.0
  %1236 = vmatprep.subr.mxu0 0.0
  %1237 = vmatpush1.msra.mxu0 0.0
  %1238 = vmatprep.subr.mxu0 0.0
  %1239 = vmatpush1.msra.mxu0 0.0
  %1240 = vmatprep.subr.mxu0 0.0
  %1241 = vmatpush1.msra.mxu0 0.0
  %1242 = vmatprep.subr.mxu0 0.0
  %1243 = vmatpush1.msra.mxu0 0.0
  %1244 = vmatprep.subr.mxu0 0.0
  %1245 = vmatpush1.msra.mxu0 0.0
  %1246 = vmatprep.subr.mxu0 0.0
  %1247 = vmatpush1.msra.mxu0 0.0
  %1248 = vmatprep.subr.mxu0 0.0
  %1249 = vmatpush1.msra.mxu0 0.0
  %1250 = vmatprep.subr.mxu0 0.0
  %1251 = vmatpush1.msra.mxu0 0.0
  %1252 = vmatprep.subr.mxu0 0.0
  %1253 = vmatpush1.msra.mxu0 0.0
  %1254 = vmatprep.subr.mxu0 0.0
  %1255 = vmatpush1.msra.mxu0 0.0
  %1256 = vmatprep.subr.mxu0 0.0
  %1257 = vmatpush1.msra.mxu0 0.0
  %1258 = vmatprep.subr.mxu0 0.0
  %1259 = vmatpush1.msra.mxu0 0.0
  %1260 = vmatprep.subr.mxu0 0.0
  %1261 = vmatpush1.msra.mxu0 0.0
  %1262 = vmatprep.subr.mxu0 0.0
  %1263 = vmatpush1.msra.mxu0 0.0
  %1264 = vmatprep.subr.mxu0 0.0
  %1265 = vmatpush1.msra.mxu0 0.0
  %1266 = vmatprep.mubr.f32.mxu0 0.0
  %1267 = vmatmul.mubr.f32.gmra.mrb[0].mxu0 %v1164
  %v1268 = vpop.f32.mrb[0].mxu0
  %v1269 = vadd.f32 0.0, %v1268
  %v1270 = vpop.f32.mrb[0].mxu0
  %v1271 = vadd.f32 0.0, %v1270
  %1272 = vmatprep.mubr.f32.mxu0 0.0
  %1273 = vmatmul.mubr.f32.gmra.mrb[0].mxu0 %v1167
  %v1274 = vpop.f32.mrb[0].mxu0
  %v1275 = vadd.f32 0.0, %v1274
  %v1276 = vpop.f32.mrb[0].mxu0
  %v1277 = vadd.f32 0.0, %v1276
  %1278 = vmatprep.mubr.f32.mxu0 0.0
  %1279 = vmatmul.mubr.f32.gmra.mrb[0].mxu0 %v1170
  %v1280 = vpop.f32.mrb[0].mxu0
  %v1281 = vadd.f32 0.0, %v1280
  %v1282 = vpop.f32.mrb[0].mxu0
  %v1283 = vadd.f32 0.0, %v1282
  %1284 = vmatprep.mubr.f32.mxu0 0.0
  %1285 = vmatmul.mubr.f32.gmra.mrb[0].mxu0 %v1173
  %v1286 = vpop.f32.mrb[0].mxu0
  %v1287 = vadd.f32 0.0, %v1286
  %v1288 = vpop.f32.mrb[0].mxu0
  %v1289 = vadd.f32 0.0, %v1288
  %1290 = vmatprep.mubr.f32.mxu0 0.0
  %1291 = vmatmul.mubr.f32.gmra.mrb[0].mxu0 %v1176
  %v1292 = vpop.f32.mrb[0].mxu0
  %v1293 = vadd.f32 0.0, %v1292
  %v1294 = vpop.f32.mrb[0].mxu0
  %v1295 = vadd.f32 0.0, %v1294
  %1296 = vmatprep.mubr.f32.mxu0 0.0
  %1297 = vmatmul.mubr.f32.gmra.mrb[0].mxu0 %v1179
  %v1298 = vpop.f32.mrb[0].mxu0
  %v1299 = vadd.f32 0.0, %v1298
  %v1300 = vpop.f32.mrb[0].mxu0
  %v1301 = vadd.f32 0.0, %v1300
  %1302 = vmatprep.mubr.f32.mxu0 0.0
  %1303 = vmatmul.mubr.f32.gmra.mrb[0].mxu0 %v1182
  %v1304 = vpop.f32.mrb[0].mxu0
  %v1305 = vadd.f32 0.0, %v1304
  %v1306 = vpop.f32.mrb[0].mxu0
  %v1307 = vadd.f32 0.0, %v1306
  %1308 = vdwg.mxu0
  %1309 = vmatprep.subr.mxu0 %v1124
  %1310 = vmatpush1.msra.mxu0 %v1123
  %1311 = vmatprep.subr.mxu0 %v1130
  %1312 = vmatpush1.msra.mxu0 %v1129
  %1313 = vmatprep.subr.mxu0 %v1136
  %1314 = vmatpush1.msra.mxu0 %v1135
  %1315 = vmatprep.subr.mxu0 %v1142
  %1316 = vmatpush1.msra.mxu0 %v1141
  %1317 = vmatprep.subr.mxu0 %v1148
  %1318 = vmatpush1.msra.mxu0 %v1147
  %1319 = vmatprep.subr.mxu0 %v1154
  %1320 = vmatpush1.msra.mxu0 %v1153
  %1321 = vmatprep.subr.mxu0 %v1194
  %1322 = vmatpush1.msra.mxu0 %v1191
  %1323 = vmatprep.subr.mxu0 0.0
  %1324 = vmatpush1.msra.mxu0 0.0
  %1325 = vmatprep.subr.mxu0 0.0
  %1326 = vmatpush1.msra.mxu0 0.0
  %1327 = vmatprep.subr.mxu0 0.0
  %1328 = vmatpush1.msra.mxu0 0.0
  %1329 = vmatprep.subr.mxu0 0.0
  %1330 = vmatpush1.msra.mxu0 0.0
  %1331 = vmatprep.subr.mxu0 0.0
  %1332 = vmatpush1.msra.mxu0 0.0
  %1333 = vmatprep.subr.mxu0 0.0
  %1334 = vmatpush1.msra.mxu0 0.0
  %1335 = vmatprep.subr.mxu0 0.0
  %1336 = vmatpush1.msra.mxu0 0.0
  %1337 = vmatprep.subr.mxu0 0.0
  %1338 = vmatpush1.msra.mxu0 0.0
  %1339 = vmatprep.subr.mxu0 0.0
  %1340 = vmatpush1.msra.mxu0 0.0
  %1341 = vmatprep.subr.mxu0 0.0
  %1342 = vmatpush1.msra.mxu0 0.0
  %1343 = vmatprep.subr.mxu0 0.0
  %1344 = vmatpush1.msra.mxu0 0.0
  %1345 = vmatprep.subr.mxu0 0.0
  %1346 = vmatpush1.msra.mxu0 0.0
  %1347 = vmatprep.subr.mxu0 0.0
  %1348 = vmatpush1.msra.mxu0 0.0
  %1349 = vmatprep.subr.mxu0 0.0
  %1350 = vmatpush1.msra.mxu0 0.0
  %1351 = vmatprep.subr.mxu0 0.0
  %1352 = vmatpush1.msra.mxu0 0.0
  %1353 = vmatprep.subr.mxu0 0.0
  %1354 = vmatpush1.msra.mxu0 0.0
  %1355 = vmatprep.subr.mxu0 0.0
  %1356 = vmatpush1.msra.mxu0 0.0
  %1357 = vmatprep.subr.mxu0 0.0
  %1358 = vmatpush1.msra.mxu0 0.0
  %1359 = vmatprep.subr.mxu0 0.0
  %1360 = vmatpush1.msra.mxu0 0.0
  %1361 = vmatprep.subr.mxu0 0.0
  %1362 = vmatpush1.msra.mxu0 0.0
  %1363 = vmatprep.subr.mxu0 0.0
  %1364 = vmatpush1.msra.mxu0 0.0
  %1365 = vmatprep.subr.mxu0 0.0
  %1366 = vmatpush1.msra.mxu0 0.0
  %1367 = vmatprep.subr.mxu0 0.0
  %1368 = vmatpush1.msra.mxu0 0.0
  %1369 = vmatprep.subr.mxu0 0.0
  %1370 = vmatpush1.msra.mxu0 0.0
  %1371 = vmatprep.subr.mxu0 0.0
  %1372 = vmatpush1.msra.mxu0 0.0
  %1373 = vmatprep.mubr.f32.mxu0 0.0
  %1374 = vmatmul.mubr.f32.gmra.mrb[0].mxu0 %v1164
  %v1375 = vpop.f32.mrb[0].mxu0
  %v1376 = vadd.f32 0.0, %v1375
  %v1377 = vpop.f32.mrb[0].mxu0
  %v1378 = vadd.f32 0.0, %v1377
  %1379 = vmatprep.mubr.f32.mxu0 0.0
  %1380 = vmatmul.mubr.f32.gmra.mrb[0].mxu0 %v1167
  %v1381 = vpop.f32.mrb[0].mxu0
  %v1382 = vadd.f32 0.0, %v1381
  %v1383 = vpop.f32.mrb[0].mxu0
  %v1384 = vadd.f32 0.0, %v1383
  %1385 = vmatprep.mubr.f32.mxu0 0.0
  %1386 = vmatmul.mubr.f32.gmra.mrb[0].mxu0 %v1170
  %v1387 = vpop.f32.mrb[0].mxu0
  %v1388 = vadd.f32 0.0, %v1387
  %v1389 = vpop.f32.mrb[0].mxu0
  %v1390 = vadd.f32 0.0, %v1389
  %1391 = vmatprep.mubr.f32.mxu0 0.0
  %1392 = vmatmul.mubr.f32.gmra.mrb[0].mxu0 %v1173
  %v1393 = vpop.f32.mrb[0].mxu0
  %v1394 = vadd.f32 0.0, %v1393
  %v1395 = vpop.f32.mrb[0].mxu0
  %v1396 = vadd.f32 0.0, %v1395
  %1397 = vmatprep.mubr.f32.mxu0 0.0
  %1398 = vmatmul.mubr.f32.gmra.mrb[0].mxu0 %v1176
  %v1399 = vpop.f32.mrb[0].mxu0
  %v1400 = vadd.f32 0.0, %v1399
  %v1401 = vpop.f32.mrb[0].mxu0
  %v1402 = vadd.f32 0.0, %v1401
  %1403 = vmatprep.mubr.f32.mxu0 0.0
  %1404 = vmatmul.mubr.f32.gmra.mrb[0].mxu0 %v1179
  %v1405 = vpop.f32.mrb[0].mxu0
  %v1406 = vadd.f32 0.0, %v1405
  %v1407 = vpop.f32.mrb[0].mxu0
  %v1408 = vadd.f32 0.0, %v1407
  %1409 = vmatprep.mubr.f32.mxu0 0.0
  %1410 = vmatmul.mubr.f32.gmra.mrb[0].mxu0 %v1182
  %v1411 = vpop.f32.mrb[0].mxu0
  %v1412 = vadd.f32 0.0, %v1411
  %v1413 = vpop.f32.mrb[0].mxu0
  %v1414 = vadd.f32 0.0, %v1413
  %1415 = vdwg.mxu0
  %1416 = vmatprep.subr.mxu0 %v1126
  %1417 = vmatpush1.msra.mxu0 %v1125
  %1418 = vmatprep.subr.mxu0 %v1132
  %1419 = vmatpush1.msra.mxu0 %v1131
  %1420 = vmatprep.subr.mxu0 %v1138
  %1421 = vmatpush1.msra.mxu0 %v1137
  %1422 = vmatprep.subr.mxu0 %v1144
  %1423 = vmatpush1.msra.mxu0 %v1143
  %1424 = vmatprep.subr.mxu0 %v1150
  %1425 = vmatpush1.msra.mxu0 %v1149
  %1426 = vmatprep.subr.mxu0 %v1156
  %1427 = vmatpush1.msra.mxu0 %v1155
  %1428 = vmatprep.subr.mxu0 %v1200
  %1429 = vmatpush1.msra.mxu0 %v1197
  %1430 = vmatprep.subr.mxu0 0.0
  %1431 = vmatpush1.msra.mxu0 0.0
  %1432 = vmatprep.subr.mxu0 0.0
  %1433 = vmatpush1.msra.mxu0 0.0
  %1434 = vmatprep.subr.mxu0 0.0
  %1435 = vmatpush1.msra.mxu0 0.0
  %1436 = vmatprep.subr.mxu0 0.0
  %1437 = vmatpush1.msra.mxu0 0.0
  %1438 = vmatprep.subr.mxu0 0.0
  %1439 = vmatpush1.msra.mxu0 0.0
  %1440 = vmatprep.subr.mxu0 0.0
  %1441 = vmatpush1.msra.mxu0 0.0
  %1442 = vmatprep.subr.mxu0 0.0
  %1443 = vmatpush1.msra.mxu0 0.0
  %1444 = vmatprep.subr.mxu0 0.0
  %1445 = vmatpush1.msra.mxu0 0.0
  %1446 = vmatprep.subr.mxu0 0.0
  %1447 = vmatpush1.msra.mxu0 0.0
  %1448 = vmatprep.subr.mxu0 0.0
  %1449 = vmatpush1.msra.mxu0 0.0
  %1450 = vmatprep.subr.mxu0 0.0
  %1451 = vmatpush1.msra.mxu0 0.0
  %1452 = vmatprep.subr.mxu0 0.0
  %1453 = vmatpush1.msra.mxu0 0.0
  %1454 = vmatprep.subr.mxu0 0.0
  %1455 = vmatpush1.msra.mxu0 0.0
  %1456 = vmatprep.subr.mxu0 0.0
  %1457 = vmatpush1.msra.mxu0 0.0
  %1458 = vmatprep.subr.mxu0 0.0
  %1459 = vmatpush1.msra.mxu0 0.0
  %1460 = vmatprep.subr.mxu0 0.0
  %1461 = vmatpush1.msra.mxu0 0.0
  %1462 = vmatprep.subr.mxu0 0.0
  %1463 = vmatpush1.msra.mxu0 0.0
  %1464 = vmatprep.subr.mxu0 0.0
  %1465 = vmatpush1.msra.mxu0 0.0
  %1466 = vmatprep.subr.mxu0 0.0
  %1467 = vmatpush1.msra.mxu0 0.0
  %1468 = vmatprep.subr.mxu0 0.0
  %1469 = vmatpush1.msra.mxu0 0.0
  %1470 = vmatprep.subr.mxu0 0.0
  %1471 = vmatpush1.msra.mxu0 0.0
  %1472 = vmatprep.subr.mxu0 0.0
  %1473 = vmatpush1.msra.mxu0 0.0
  %1474 = vmatprep.subr.mxu0 0.0
  %1475 = vmatpush1.msra.mxu0 0.0
  %1476 = vmatprep.subr.mxu0 0.0
  %1477 = vmatpush1.msra.mxu0 0.0
  %1478 = vmatprep.subr.mxu0 0.0
  %1479 = vmatpush1.msra.mxu0 0.0
  %1480 = vmatprep.mubr.f32.mxu0 0.0
  %1481 = vmatmul.mubr.f32.gmra.mrb[0].mxu0 %v1164
  %v1482 = vpop.f32.mrb[0].mxu0
  %v1483 = vadd.f32 0.0, %v1482
  %v1484 = vpop.f32.mrb[0].mxu0
  %v1485 = vadd.f32 0.0, %v1484
  %1486 = vmatprep.mubr.f32.mxu0 0.0
  %1487 = vmatmul.mubr.f32.gmra.mrb[0].mxu0 %v1167
  %v1488 = vpop.f32.mrb[0].mxu0
  %v1489 = vadd.f32 0.0, %v1488
  %v1490 = vpop.f32.mrb[0].mxu0
  %v1491 = vadd.f32 0.0, %v1490
  %1492 = vmatprep.mubr.f32.mxu0 0.0
  %1493 = vmatmul.mubr.f32.gmra.mrb[0].mxu0 %v1170
  %v1494 = vpop.f32.mrb[0].mxu0
  %v1495 = vadd.f32 0.0, %v1494
  %v1496 = vpop.f32.mrb[0].mxu0
  %v1497 = vadd.f32 0.0, %v1496
  %1498 = vmatprep.mubr.f32.mxu0 0.0
  %1499 = vmatmul.mubr.f32.gmra.mrb[0].mxu0 %v1173
  %v1500 = vpop.f32.mrb[0].mxu0
  %v1501 = vadd.f32 0.0, %v1500
  %v1502 = vpop.f32.mrb[0].mxu0
  %v1503 = vadd.f32 0.0, %v1502
  %1504 = vmatprep.mubr.f32.mxu0 0.0
  %1505 = vmatmul.mubr.f32.gmra.mrb[0].mxu0 %v1176
  %v1506 = vpop.f32.mrb[0].mxu0
  %v1507 = vadd.f32 0.0, %v1506
  %v1508 = vpop.f32.mrb[0].mxu0
  %v1509 = vadd.f32 0.0, %v1508
  %1510 = vmatprep.mubr.f32.mxu0 0.0
  %1511 = vmatmul.mubr.f32.gmra.mrb[0].mxu0 %v1179
  %v1512 = vpop.f32.mrb[0].mxu0
  %v1513 = vadd.f32 0.0, %v1512
  %v1514 = vpop.f32.mrb[0].mxu0
  %v1515 = vadd.f32 0.0, %v1514
  %1516 = vmatprep.mubr.f32.mxu0 0.0
  %1517 = vmatmul.mubr.f32.gmra.mrb[0].mxu0 %v1182
  %v1518 = vpop.f32.mrb[0].mxu0
  %v1519 = vadd.f32 0.0, %v1518
  %v1520 = vpop.f32.mrb[0].mxu0
  %v1521 = vadd.f32 0.0, %v1520
  %1522 = vdwg.mxu0
  %1524 = vset.pattern.permute.xlu0 0
  %1525 = vperm.xlu0 %1524, %v1114
  %v1526 = vpop.permute.xlu0 %1525
  %1529 = vset.pattern.permute.xlu0 0
  %1530 = vperm.xlu0 %1529, %v1115
  %v1531 = vpop.permute.xlu0 %1530
  %1534 = vset.pattern.permute.xlu0 0
  %1535 = vperm.xlu0 %1534, %v1116
  %v1536 = vpop.permute.xlu0 %1535
  %1539 = vset.pattern.permute.xlu0 0
  %1540 = vperm.xlu0 %1539, %v1117
  %v1541 = vpop.permute.xlu0 %1540
  %1544 = vset.pattern.permute.xlu0 0
  %1545 = vperm.xlu0 %1544, %v1118
  %v1546 = vpop.permute.xlu0 %1545
  %1549 = vset.pattern.permute.xlu0 0
  %1550 = vperm.xlu0 %1549, %v1119
  %v1551 = vpop.permute.xlu0 %1550
  %1554 = vset.pattern.permute.xlu0 0
  %1555 = vperm.xlu0 %1554, %v1120
  %v1556 = vpop.permute.xlu0 %1555
  %v1558 = vadd.f32 %v1269, %v1526
  %v1559 = vadd.f32 %v1275, %v1531
  %v1560 = vadd.f32 %v1281, %v1536
  %v1561 = vadd.f32 %v1287, %v1541
  %v1562 = vadd.f32 %v1293, %v1546
  %v1563 = vadd.f32 %v1299, %v1551
  %v1564 = vadd.f32 %v1305, %v1556
  %v1565 = vtanh.pop %v1558
  %v1566 = vtanh.pop %v1559
  %v1567 = vtanh.pop %v1560
  %v1568 = vtanh.pop %v1561
  %v1569 = vtanh.pop %v1562
  %v1570 = vtanh.pop %v1563
  %v1571 = vtanh.pop %v1564
  %v1572 = vmul.f32 %v1565, %v1565
  %v1573 = vmul.f32 %v1566, %v1566
  %v1574 = vmul.f32 %v1567, %v1567
  %v1575 = vmul.f32 %v1568, %v1568
  %v1576 = vmul.f32 %v1569, %v1569
  %v1577 = vmul.f32 %v1570, %v1570
  %v1578 = vmul.f32 %v1571, %v1571
  %v1579 = vsub.f32 1.0, %v1572
  %v1580 = vsub.f32 1.0, %v1573
  %v1581 = vsub.f32 1.0, %v1574
  %v1582 = vsub.f32 1.0, %v1575
  %v1583 = vsub.f32 1.0, %v1576
  %v1584 = vsub.f32 1.0, %v1577
  %v1585 = vsub.f32 1.0, %v1578
  %v1586 = vmul.f32 %v1565, 2.0
  %v1587 = vmul.f32 %v1566, 2.0
  %v1588 = vmul.f32 %v1567, 2.0
  %v1589 = vmul.f32 %v1568, 2.0
  %v1590 = vmul.f32 %v1569, 2.0
  %v1591 = vmul.f32 %v1570, 2.0
  %v1592 = vmul.f32 %v1571, 2.0
  %v1593 = vmul.f32 %v1586, %v1579
  %v1594 = vmul.f32 %v1587, %v1580
  %v1595 = vmul.f32 %v1588, %v1581
  %v1596 = vmul.f32 %v1589, %v1582
  %v1597 = vmul.f32 %v1590, %v1583
  %v1598 = vmul.f32 %v1591, %v1584
  %v1599 = vmul.f32 %v1592, %v1585
  %1600 = vst [vmem:[#allocation2] sm:$0xff] %v1565
  %1601 = vst [vmem:[#allocation2 + $0x30] sm:$0xff] %v1566
  %1602 = vst [vmem:[#allocation2 + $0x60] sm:$0xff] %v1567
  %1603 = vst [vmem:[#allocation2 + $0x90] sm:$0xff] %v1568
  %1604 = vst [vmem:[#allocation2 + $0xc0] sm:$0xff] %v1569
  %1605 = vst [vmem:[#allocation2 + $0xf0] sm:$0xff] %v1570
  %1606 = vst [vmem:[#allocation2 + $0x120] sm:$0x3] %v1571
  %v1607 = vmul.f32 %v1579, %v1271
  %v1608 = vmul.f32 %v1580, %v1277
  %v1609 = vmul.f32 %v1581, %v1283
  %v1610 = vmul.f32 %v1582, %v1289
  %v1611 = vmul.f32 %v1583, %v1295
  %v1612 = vmul.f32 %v1584, %v1301
  %v1613 = vmul.f32 %v1585, %v1307
  %1614 = vst [vmem:[#allocation2 + $0x8] sm:$0xff] %v1607
  %1615 = vst [vmem:[#allocation2 + $0x38] sm:$0xff] %v1608
  %1616 = vst [vmem:[#allocation2 + $0x68] sm:$0xff] %v1609
  %1617 = vst [vmem:[#allocation2 + $0x98] sm:$0xff] %v1610
  %1618 = vst [vmem:[#allocation2 + $0xc8] sm:$0xff] %v1611
  %1619 = vst [vmem:[#allocation2 + $0xf8] sm:$0xff] %v1612
  %1620 = vst [vmem:[#allocation2 + $0x128] sm:$0x3] %v1613
  %v1621 = vmul.f32 %v1579, %v1376
  %v1622 = vmul.f32 %v1580, %v1382
  %v1623 = vmul.f32 %v1581, %v1388
  %v1624 = vmul.f32 %v1582, %v1394
  %v1625 = vmul.f32 %v1583, %v1400
  %v1626 = vmul.f32 %v1584, %v1406
  %v1627 = vmul.f32 %v1585, %v1412
  %v1628 = vmul.f32 %v1483, %v1483
  %v1629 = vmul.f32 %v1489, %v1489
  %v1630 = vmul.f32 %v1495, %v1495
  %v1631 = vmul.f32 %v1501, %v1501
  %v1632 = vmul.f32 %v1507, %v1507
  %v1633 = vmul.f32 %v1513, %v1513
  %v1634 = vmul.f32 %v1519, %v1519
  %v1635 = vmul.f32 %v1593, %v1628
  %v1636 = vmul.f32 %v1594, %v1629
  %v1637 = vmul.f32 %v1595, %v1630
  %v1638 = vmul.f32 %v1596, %v1631
  %v1639 = vmul.f32 %v1597, %v1632
  %v1640 = vmul.f32 %v1598, %v1633
  %v1641 = vmul.f32 %v1599, %v1634
  %v1642 = vsub.f32 %v1621, %v1635
  %v1643 = vsub.f32 %v1622, %v1636
  %v1644 = vsub.f32 %v1623, %v1637
  %v1645 = vsub.f32 %v1624, %v1638
  %v1646 = vsub.f32 %v1625, %v1639
  %v1647 = vsub.f32 %v1626, %v1640
  %v1648 = vsub.f32 %v1627, %v1641
  %1649 = vst [vmem:[#allocation2 + $0x10] sm:$0xff] %v1642
  %1650 = vst [vmem:[#allocation2 + $0x40] sm:$0xff] %v1643
  %1651 = vst [vmem:[#allocation2 + $0x70] sm:$0xff] %v1644
  %1652 = vst [vmem:[#allocation2 + $0xa0] sm:$0xff] %v1645
  %1653 = vst [vmem:[#allocation2 + $0xd0] sm:$0xff] %v1646
  %1654 = vst [vmem:[#allocation2 + $0x100] sm:$0xff] %v1647
  %1655 = vst [vmem:[#allocation2 + $0x130] sm:$0x3] %v1648
  %v1656 = vmul.f32 %v1579, %v1378
  %v1657 = vmul.f32 %v1580, %v1384
  %v1658 = vmul.f32 %v1581, %v1390
  %v1659 = vmul.f32 %v1582, %v1396
  %v1660 = vmul.f32 %v1583, %v1402
  %v1661 = vmul.f32 %v1584, %v1408
  %v1662 = vmul.f32 %v1585, %v1414
  %v1663 = vmul.f32 %v1485, %v1485
  %v1664 = vmul.f32 %v1491, %v1491
  %v1665 = vmul.f32 %v1497, %v1497
  %v1666 = vmul.f32 %v1503, %v1503
  %v1667 = vmul.f32 %v1509, %v1509
  %v1668 = vmul.f32 %v1515, %v1515
  %v1669 = vmul.f32 %v1521, %v1521
  %v1670 = vmul.f32 %v1593, %v1663
  %v1671 = vmul.f32 %v1594, %v1664
  %v1672 = vmul.f32 %v1595, %v1665
  %v1673 = vmul.f32 %v1596, %v1666
  %v1674 = vmul.f32 %v1597, %v1667
  %v1675 = vmul.f32 %v1598, %v1668
  %v1676 = vmul.f32 %v1599, %v1669
  %v1677 = vsub.f32 %v1656, %v1670
  %v1678 = vsub.f32 %v1657, %v1671
  %v1679 = vsub.f32 %v1658, %v1672
  %v1680 = vsub.f32 %v1659, %v1673
  %v1681 = vsub.f32 %v1660, %v1674
  %v1682 = vsub.f32 %v1661, %v1675
  %v1683 = vsub.f32 %v1662, %v1676
  %1684 = vst [vmem:[#allocation2 + $0x18] sm:$0xff] %v1677
  %1685 = vst [vmem:[#allocation2 + $0x48] sm:$0xff] %v1678
  %1686 = vst [vmem:[#allocation2 + $0x78] sm:$0xff] %v1679
  %1687 = vst [vmem:[#allocation2 + $0xa8] sm:$0xff] %v1680
  %1688 = vst [vmem:[#allocation2 + $0xd8] sm:$0xff] %v1681
  %1689 = vst [vmem:[#allocation2 + $0x108] sm:$0xff] %v1682
  %1690 = vst [vmem:[#allocation2 + $0x138] sm:$0x3] %v1683
  %v1691 = vmul.f32 %v1579, %v1483
  %v1692 = vmul.f32 %v1580, %v1489
  %v1693 = vmul.f32 %v1581, %v1495
  %v1694 = vmul.f32 %v1582, %v1501
  %v1695 = vmul.f32 %v1583, %v1507
  %v1696 = vmul.f32 %v1584, %v1513
  %v1697 = vmul.f32 %v1585, %v1519
  %1698 = vst [vmem:[#allocation2 + $0x20] sm:$0xff] %v1691
  %1699 = vst [vmem:[#allocation2 + $0x50] sm:$0xff] %v1692
  %1700 = vst [vmem:[#allocation2 + $0x80] sm:$0xff] %v1693
  %1701 = vst [vmem:[#allocation2 + $0xb0] sm:$0xff] %v1694
  %1702 = vst [vmem:[#allocation2 + $0xe0] sm:$0xff] %v1695
  %1703 = vst [vmem:[#allocation2 + $0x110] sm:$0xff] %v1696
  %1704 = vst [vmem:[#allocation2 + $0x140] sm:$0x3] %v1697
  %v1705 = vmul.f32 %v1579, %v1485
  %v1706 = vmul.f32 %v1580, %v1491
  %v1707 = vmul.f32 %v1581, %v1497
  %v1708 = vmul.f32 %v1582, %v1503
  %v1709 = vmul.f32 %v1583, %v1509
  %v1710 = vmul.f32 %v1584, %v1515
  %v1711 = vmul.f32 %v1585, %v1521
  %1712 = vst [vmem:[#allocation2 + $0x28] sm:$0xff] %v1705
  %1713 = vst [vmem:[#allocation2 + $0x58] sm:$0xff] %v1706
  %1714 = vst [vmem:[#allocation2 + $0x88] sm:$0xff] %v1707
  %1715 = vst [vmem:[#allocation2 + $0xb8] sm:$0xff] %v1708
  %1716 = vst [vmem:[#allocation2 + $0xe8] sm:$0xff] %v1709
  %1717 = vst [vmem:[#allocation2 + $0x118] sm:$0xff] %v1710
  %1718 = vst [vmem:[#allocation2 + $0x148] sm:$0x3] %v1711
  %v1719 = vld [vmem:[%s7] sm:$0xff]
  %v1720 = vld [vmem:[%s7 + $0x8] sm:$0xff]
  %v1721 = vld [vmem:[%s7 + $0x10] sm:$0xff]
  %v1722 = vld [vmem:[%s7 + $0x18] sm:$0xff]
  %v1723 = vld [vmem:[%s7 + $0x20] sm:$0xff]
  %v1724 = vld [vmem:[%s7 + $0x28] sm:$0xff]
  %v1725 = vld [vmem:[%s7 + $0x30] sm:$0x3]
  %v1726 = vld [vmem:[%s8] sm:$0xff]
  %v1727 = vld [vmem:[%s8 + $0x8] sm:$0xff]
  %v1728 = vld [vmem:[%s8 + $0x10] sm:$0xff]
  %v1729 = vld [vmem:[%s8 + $0x18] sm:$0xff]
  %v1730 = vld [vmem:[%s8 + $0x20] sm:$0xff]
  %v1731 = vld [vmem:[%s8 + $0x28] sm:$0xff]
  %v1732 = vld [vmem:[%s8 + $0x30] sm:$0x3]
  %v1733 = vld [vmem:[#allocation2] sm:$0xff]
  %v1734 = vld [vmem:[#allocation2 + $0x8] sm:$0xff]
  %v1735 = vld [vmem:[#allocation2 + $0x10] sm:$0xff]
  %v1736 = vld [vmem:[#allocation2 + $0x18] sm:$0xff]
  %v1737 = vld [vmem:[#allocation2 + $0x20] sm:$0xff]
  %v1738 = vld [vmem:[#allocation2 + $0x28] sm:$0xff]
  %v1739 = vld [vmem:[#allocation2 + $0x30] sm:$0xff]
  %v1740 = vld [vmem:[#allocation2 + $0x38] sm:$0xff]
  %v1741 = vld [vmem:[#allocation2 + $0x40] sm:$0xff]
  %v1742 = vld [vmem:[#allocation2 + $0x48] sm:$0xff]
  %v1743 = vld [vmem:[#allocation2 + $0x50] sm:$0xff]
  %v1744 = vld [vmem:[#allocation2 + $0x58] sm:$0xff]
  %v1745 = vld [vmem:[#allocation2 + $0x60] sm:$0xff]
  %v1746 = vld [vmem:[#allocation2 + $0x68] sm:$0xff]
  %v1747 = vld [vmem:[#allocation2 + $0x70] sm:$0xff]
  %v1748 = vld [vmem:[#allocation2 + $0x78] sm:$0xff]
  %v1749 = vld [vmem:[#allocation2 + $0x80] sm:$0xff]
  %v1750 = vld [vmem:[#allocation2 + $0x88] sm:$0xff]
  %v1751 = vld [vmem:[#allocation2 + $0x90] sm:$0xff]
  %v1752 = vld [vmem:[#allocation2 + $0x98] sm:$0xff]
  %v1753 = vld [vmem:[#allocation2 + $0xa0] sm:$0xff]
  %v1754 = vld [vmem:[#allocation2 + $0xa8] sm:$0xff]
  %v1755 = vld [vmem:[#allocation2 + $0xb0] sm:$0xff]
  %v1756 = vld [vmem:[#allocation2 + $0xb8] sm:$0xff]
  %v1757 = vld [vmem:[#allocation2 + $0xc0] sm:$0xff]
  %v1758 = vld [vmem:[#allocation2 + $0xc8] sm:$0xff]
  %v1759 = vld [vmem:[#allocation2 + $0xd0] sm:$0xff]
  %v1760 = vld [vmem:[#allocation2 + $0xd8] sm:$0xff]
  %v1761 = vld [vmem:[#allocation2 + $0xe0] sm:$0xff]
  %v1762 = vld [vmem:[#allocation2 + $0xe8] sm:$0xff]
  %v1763 = vld [vmem:[#allocation2 + $0xf0] sm:$0xff]
  %v1764 = vld [vmem:[#allocation2 + $0xf8] sm:$0xff]
  %v1765 = vld [vmem:[#allocation2 + $0x100] sm:$0xff]
  %v1766 = vld [vmem:[#allocation2 + $0x108] sm:$0xff]
  %v1767 = vld [vmem:[#allocation2 + $0x110] sm:$0xff]
  %v1768 = vld [vmem:[#allocation2 + $0x118] sm:$0xff]
  %v1769 = vld [vmem:[#allocation2 + $0x120] sm:$0x3]
  %v1770 = vld [vmem:[#allocation2 + $0x128] sm:$0x3]
  %v1771 = vld [vmem:[#allocation2 + $0x130] sm:$0x3]
  %v1772 = vld [vmem:[#allocation2 + $0x138] sm:$0x3]
  %v1773 = vld [vmem:[#allocation2 + $0x140] sm:$0x3]
  %v1774 = vld [vmem:[#allocation2 + $0x148] sm:$0x3]
  %v1776 = vsel %vm549, %v1719, 0
  %v1779 = vsel %vm549, %v1720, 0
  %v1782 = vsel %vm549, %v1721, 0
  %v1785 = vsel %vm549, %v1722, 0
  %v1788 = vsel %vm549, %v1723, 0
  %v1791 = vsel %vm549, %v1724, 0
  %v1794 = vsel %vm549, %v1725, 0
  %v1797 = vsel %vm571, %v1769, 0
  %v1800 = vsel %vm571, %v1770, 0
  %v1803 = vsel %vm571, %v1771, 0
  %v1806 = vsel %vm571, %v1772, 0
  %v1809 = vsel %vm571, %v1773, 0
  %v1812 = vsel %vm571, %v1774, 0
  %1814 = vmatprep.subr.mxu0 %v1734
  %1815 = vmatpush1.msra.mxu0 %v1733
  %1816 = vmatprep.subr.mxu0 %v1740
  %1817 = vmatpush1.msra.mxu0 %v1739
  %1818 = vmatprep.subr.mxu0 %v1746
  %1819 = vmatpush1.msra.mxu0 %v1745
  %1820 = vmatprep.subr.mxu0 %v1752
  %1821 = vmatpush1.msra.mxu0 %v1751
  %1822 = vmatprep.subr.mxu0 %v1758
  %1823 = vmatpush1.msra.mxu0 %v1757
  %1824 = vmatprep.subr.mxu0 %v1764
  %1825 = vmatpush1.msra.mxu0 %v1763
  %1826 = vmatprep.subr.mxu0 %v1800
  %1827 = vmatpush1.msra.mxu0 %v1797
  %1828 = vmatprep.subr.mxu0 0.0
  %1829 = vmatpush1.msra.mxu0 0.0
  %1830 = vmatprep.subr.mxu0 0.0
  %1831 = vmatpush1.msra.mxu0 0.0
  %1832 = vmatprep.subr.mxu0 0.0
  %1833 = vmatpush1.msra.mxu0 0.0
  %1834 = vmatprep.subr.mxu0 0.0
  %1835 = vmatpush1.msra.mxu0 0.0
  %1836 = vmatprep.subr.mxu0 0.0
  %1837 = vmatpush1.msra.mxu0 0.0
  %1838 = vmatprep.subr.mxu0 0.0
  %1839 = vmatpush1.msra.mxu0 0.0
  %1840 = vmatprep.subr.mxu0 0.0
  %1841 = vmatpush1.msra.mxu0 0.0
  %1842 = vmatprep.subr.mxu0 0.0
  %1843 = vmatpush1.msra.mxu0 0.0
  %1844 = vmatprep.subr.mxu0 0.0
  %1845 = vmatpush1.msra.mxu0 0.0
  %1846 = vmatprep.subr.mxu0 0.0
  %1847 = vmatpush1.msra.mxu0 0.0
  %1848 = vmatprep.subr.mxu0 0.0
  %1849 = vmatpush1.msra.mxu0 0.0
  %1850 = vmatprep.subr.mxu0 0.0
  %1851 = vmatpush1.msra.mxu0 0.0
  %1852 = vmatprep.subr.mxu0 0.0
  %1853 = vmatpush1.msra.mxu0 0.0
  %1854 = vmatprep.subr.mxu0 0.0
  %1855 = vmatpush1.msra.mxu0 0.0
  %1856 = vmatprep.subr.mxu0 0.0
  %1857 = vmatpush1.msra.mxu0 0.0
  %1858 = vmatprep.subr.mxu0 0.0
  %1859 = vmatpush1.msra.mxu0 0.0
  %1860 = vmatprep.subr.mxu0 0.0
  %1861 = vmatpush1.msra.mxu0 0.0
  %1862 = vmatprep.subr.mxu0 0.0
  %1863 = vmatpush1.msra.mxu0 0.0
  %1864 = vmatprep.subr.mxu0 0.0
  %1865 = vmatpush1.msra.mxu0 0.0
  %1866 = vmatprep.subr.mxu0 0.0
  %1867 = vmatpush1.msra.mxu0 0.0
  %1868 = vmatprep.subr.mxu0 0.0
  %1869 = vmatpush1.msra.mxu0 0.0
  %1870 = vmatprep.subr.mxu0 0.0
  %1871 = vmatpush1.msra.mxu0 0.0
  %1872 = vmatprep.subr.mxu0 0.0
  %1873 = vmatpush1.msra.mxu0 0.0
  %1874 = vmatprep.subr.mxu0 0.0
  %1875 = vmatpush1.msra.mxu0 0.0
  %1876 = vmatprep.subr.mxu0 0.0
  %1877 = vmatpush1.msra.mxu0 0.0
  %1878 = vmatprep.mubr.f32.mxu0 0.0
  %1879 = vmatmul.mubr.f32.gmra.mrb[0].mxu0 %v1776
  %v1880 = vpop.f32.mrb[0].mxu0
  %v1881 = vadd.f32 0.0, %v1880
  %v1882 = vpop.f32.mrb[0].mxu0
  %v1883 = vadd.f32 0.0, %v1882
  %1884 = vmatprep.mubr.f32.mxu0 0.0
  %1885 = vmatmul.mubr.f32.gmra.mrb[0].mxu0 %v1779
  %v1886 = vpop.f32.mrb[0].mxu0
  %v1887 = vadd.f32 0.0, %v1886
  %v1888 = vpop.f32.mrb[0].mxu0
  %v1889 = vadd.f32 0.0, %v1888
  %1890 = vmatprep.mubr.f32.mxu0 0.0
  %1891 = vmatmul.mubr.f32.gmra.mrb[0].mxu0 %v1782
  %v1892 = vpop.f32.mrb[0].mxu0
  %v1893 = vadd.f32 0.0, %v1892
  %v1894 = vpop.f32.mrb[0].mxu0
  %v1895 = vadd.f32 0.0, %v1894
  %1896 = vmatprep.mubr.f32.mxu0 0.0
  %1897 = vmatmul.mubr.f32.gmra.mrb[0].mxu0 %v1785
  %v1898 = vpop.f32.mrb[0].mxu0
  %v1899 = vadd.f32 0.0, %v1898
  %v1900 = vpop.f32.mrb[0].mxu0
  %v1901 = vadd.f32 0.0, %v1900
  %1902 = vmatprep.mubr.f32.mxu0 0.0
  %1903 = vmatmul.mubr.f32.gmra.mrb[0].mxu0 %v1788
  %v1904 = vpop.f32.mrb[0].mxu0
  %v1905 = vadd.f32 0.0, %v1904
  %v1906 = vpop.f32.mrb[0].mxu0
  %v1907 = vadd.f32 0.0, %v1906
  %1908 = vmatprep.mubr.f32.mxu0 0.0
  %1909 = vmatmul.mubr.f32.gmra.mrb[0].mxu0 %v1791
  %v1910 = vpop.f32.mrb[0].mxu0
  %v1911 = vadd.f32 0.0, %v1910
  %v1912 = vpop.f32.mrb[0].mxu0
  %v1913 = vadd.f32 0.0, %v1912
  %1914 = vmatprep.mubr.f32.mxu0 0.0
  %1915 = vmatmul.mubr.f32.gmra.mrb[0].mxu0 %v1794
  %v1916 = vpop.f32.mrb[0].mxu0
  %v1917 = vadd.f32 0.0, %v1916
  %v1918 = vpop.f32.mrb[0].mxu0
  %v1919 = vadd.f32 0.0, %v1918
  %1920 = vdwg.mxu0
  %1921 = vmatprep.subr.mxu0 %v1736
  %1922 = vmatpush1.msra.mxu0 %v1735
  %1923 = vmatprep.subr.mxu0 %v1742
  %1924 = vmatpush1.msra.mxu0 %v1741
  %1925 = vmatprep.subr.mxu0 %v1748
  %1926 = vmatpush1.msra.mxu0 %v1747
  %1927 = vmatprep.subr.mxu0 %v1754
  %1928 = vmatpush1.msra.mxu0 %v1753
  %1929 = vmatprep.subr.mxu0 %v1760
  %1930 = vmatpush1.msra.mxu0 %v1759
  %1931 = vmatprep.subr.mxu0 %v1766
  %1932 = vmatpush1.msra.mxu0 %v1765
  %1933 = vmatprep.subr.mxu0 %v1806
  %1934 = vmatpush1.msra.mxu0 %v1803
  %1935 = vmatprep.subr.mxu0 0.0
  %1936 = vmatpush1.msra.mxu0 0.0
  %1937 = vmatprep.subr.mxu0 0.0
  %1938 = vmatpush1.msra.mxu0 0.0
  %1939 = vmatprep.subr.mxu0 0.0
  %1940 = vmatpush1.msra.mxu0 0.0
  %1941 = vmatprep.subr.mxu0 0.0
  %1942 = vmatpush1.msra.mxu0 0.0
  %1943 = vmatprep.subr.mxu0 0.0
  %1944 = vmatpush1.msra.mxu0 0.0
  %1945 = vmatprep.subr.mxu0 0.0
  %1946 = vmatpush1.msra.mxu0 0.0
  %1947 = vmatprep.subr.mxu0 0.0
  %1948 = vmatpush1.msra.mxu0 0.0
  %1949 = vmatprep.subr.mxu0 0.0
  %1950 = vmatpush1.msra.mxu0 0.0
  %1951 = vmatprep.subr.mxu0 0.0
  %1952 = vmatpush1.msra.mxu0 0.0
  %1953 = vmatprep.subr.mxu0 0.0
  %1954 = vmatpush1.msra.mxu0 0.0
  %1955 = vmatprep.subr.mxu0 0.0
  %1956 = vmatpush1.msra.mxu0 0.0
  %1957 = vmatprep.subr.mxu0 0.0
  %1958 = vmatpush1.msra.mxu0 0.0
  %1959 = vmatprep.subr.mxu0 0.0
  %1960 = vmatpush1.msra.mxu0 0.0
  %1961 = vmatprep.subr.mxu0 0.0
  %1962 = vmatpush1.msra.mxu0 0.0
  %1963 = vmatprep.subr.mxu0 0.0
  %1964 = vmatpush1.msra.mxu0 0.0
  %1965 = vmatprep.subr.mxu0 0.0
  %1966 = vmatpush1.msra.mxu0 0.0
  %1967 = vmatprep.subr.mxu0 0.0
  %1968 = vmatpush1.msra.mxu0 0.0
  %1969 = vmatprep.subr.mxu0 0.0
  %1970 = vmatpush1.msra.mxu0 0.0
  %1971 = vmatprep.subr.mxu0 0.0
  %1972 = vmatpush1.msra.mxu0 0.0
  %1973 = vmatprep.subr.mxu0 0.0
  %1974 = vmatpush1.msra.mxu0 0.0
  %1975 = vmatprep.subr.mxu0 0.0
  %1976 = vmatpush1.msra.mxu0 0.0
  %1977 = vmatprep.subr.mxu0 0.0
  %1978 = vmatpush1.msra.mxu0 0.0
  %1979 = vmatprep.subr.mxu0 0.0
  %1980 = vmatpush1.msra.mxu0 0.0
  %1981 = vmatprep.subr.mxu0 0.0
  %1982 = vmatpush1.msra.mxu0 0.0
  %1983 = vmatprep.subr.mxu0 0.0
  %1984 = vmatpush1.msra.mxu0 0.0
  %1985 = vmatprep.mubr.f32.mxu0 0.0
  %1986 = vmatmul.mubr.f32.gmra.mrb[0].mxu0 %v1776
  %v1987 = vpop.f32.mrb[0].mxu0
  %v1988 = vadd.f32 0.0, %v1987
  %v1989 = vpop.f32.mrb[0].mxu0
  %v1990 = vadd.f32 0.0, %v1989
  %1991 = vmatprep.mubr.f32.mxu0 0.0
  %1992 = vmatmul.mubr.f32.gmra.mrb[0].mxu0 %v1779
  %v1993 = vpop.f32.mrb[0].mxu0
  %v1994 = vadd.f32 0.0, %v1993
  %v1995 = vpop.f32.mrb[0].mxu0
  %v1996 = vadd.f32 0.0, %v1995
  %1997 = vmatprep.mubr.f32.mxu0 0.0
  %1998 = vmatmul.mubr.f32.gmra.mrb[0].mxu0 %v1782
  %v1999 = vpop.f32.mrb[0].mxu0
  %v2000 = vadd.f32 0.0, %v1999
  %v2001 = vpop.f32.mrb[0].mxu0
  %v2002 = vadd.f32 0.0, %v2001
  %2003 = vmatprep.mubr.f32.mxu0 0.0
  %2004 = vmatmul.mubr.f32.gmra.mrb[0].mxu0 %v1785
  %v2005 = vpop.f32.mrb[0].mxu0
  %v2006 = vadd.f32 0.0, %v2005
  %v2007 = vpop.f32.mrb[0].mxu0
  %v2008 = vadd.f32 0.0, %v2007
  %2009 = vmatprep.mubr.f32.mxu0 0.0
  %2010 = vmatmul.mubr.f32.gmra.mrb[0].mxu0 %v1788
  %v2011 = vpop.f32.mrb[0].mxu0
  %v2012 = vadd.f32 0.0, %v2011
  %v2013 = vpop.f32.mrb[0].mxu0
  %v2014 = vadd.f32 0.0, %v2013
  %2015 = vmatprep.mubr.f32.mxu0 0.0
  %2016 = vmatmul.mubr.f32.gmra.mrb[0].mxu0 %v1791
  %v2017 = vpop.f32.mrb[0].mxu0
  %v2018 = vadd.f32 0.0, %v2017
  %v2019 = vpop.f32.mrb[0].mxu0
  %v2020 = vadd.f32 0.0, %v2019
  %2021 = vmatprep.mubr.f32.mxu0 0.0
  %2022 = vmatmul.mubr.f32.gmra.mrb[0].mxu0 %v1794
  %v2023 = vpop.f32.mrb[0].mxu0
  %v2024 = vadd.f32 0.0, %v2023
  %v2025 = vpop.f32.mrb[0].mxu0
  %v2026 = vadd.f32 0.0, %v2025
  %2027 = vdwg.mxu0
  %2028 = vmatprep.subr.mxu0 %v1738
  %2029 = vmatpush1.msra.mxu0 %v1737
  %2030 = vmatprep.subr.mxu0 %v1744
  %2031 = vmatpush1.msra.mxu0 %v1743
  %2032 = vmatprep.subr.mxu0 %v1750
  %2033 = vmatpush1.msra.mxu0 %v1749
  %2034 = vmatprep.subr.mxu0 %v1756
  %2035 = vmatpush1.msra.mxu0 %v1755
  %2036 = vmatprep.subr.mxu0 %v1762
  %2037 = vmatpush1.msra.mxu0 %v1761
  %2038 = vmatprep.subr.mxu0 %v1768
  %2039 = vmatpush1.msra.mxu0 %v1767
  %2040 = vmatprep.subr.mxu0 %v1812
  %2041 = vmatpush1.msra.mxu0 %v1809
  %2042 = vmatprep.subr.mxu0 0.0
  %2043 = vmatpush1.msra.mxu0 0.0
  %2044 = vmatprep.subr.mxu0 0.0
  %2045 = vmatpush1.msra.mxu0 0.0
  %2046 = vmatprep.subr.mxu0 0.0
  %2047 = vmatpush1.msra.mxu0 0.0
  %2048 = vmatprep.subr.mxu0 0.0
  %2049 = vmatpush1.msra.mxu0 0.0
  %2050 = vmatprep.subr.mxu0 0.0
  %2051 = vmatpush1.msra.mxu0 0.0
  %2052 = vmatprep.subr.mxu0 0.0
  %2053 = vmatpush1.msra.mxu0 0.0
  %2054 = vmatprep.subr.mxu0 0.0
  %2055 = vmatpush1.msra.mxu0 0.0
  %2056 = vmatprep.subr.mxu0 0.0
  %2057 = vmatpush1.msra.mxu0 0.0
  %2058 = vmatprep.subr.mxu0 0.0
  %2059 = vmatpush1.msra.mxu0 0.0
  %2060 = vmatprep.subr.mxu0 0.0
  %2061 = vmatpush1.msra.mxu0 0.0
  %2062 = vmatprep.subr.mxu0 0.0
  %2063 = vmatpush1.msra.mxu0 0.0
  %2064 = vmatprep.subr.mxu0 0.0
  %2065 = vmatpush1.msra.mxu0 0.0
  %2066 = vmatprep.subr.mxu0 0.0
  %2067 = vmatpush1.msra.mxu0 0.0
  %2068 = vmatprep.subr.mxu0 0.0
  %2069 = vmatpush1.msra.mxu0 0.0
  %2070 = vmatprep.subr.mxu0 0.0
  %2071 = vmatpush1.msra.mxu0 0.0
  %2072 = vmatprep.subr.mxu0 0.0
  %2073 = vmatpush1.msra.mxu0 0.0
  %2074 = vmatprep.subr.mxu0 0.0
  %2075 = vmatpush1.msra.mxu0 0.0
  %2076 = vmatprep.subr.mxu0 0.0
  %2077 = vmatpush1.msra.mxu0 0.0
  %2078 = vmatprep.subr.mxu0 0.0
  %2079 = vmatpush1.msra.mxu0 0.0
  %2080 = vmatprep.subr.mxu0 0.0
  %2081 = vmatpush1.msra.mxu0 0.0
  %2082 = vmatprep.subr.mxu0 0.0
  %2083 = vmatpush1.msra.mxu0 0.0
  %2084 = vmatprep.subr.mxu0 0.0
  %2085 = vmatpush1.msra.mxu0 0.0
  %2086 = vmatprep.subr.mxu0 0.0
  %2087 = vmatpush1.msra.mxu0 0.0
  %2088 = vmatprep.subr.mxu0 0.0
  %2089 = vmatpush1.msra.mxu0 0.0
  %2090 = vmatprep.subr.mxu0 0.0
  %2091 = vmatpush1.msra.mxu0 0.0
  %2092 = vmatprep.mubr.f32.mxu0 0.0
  %2093 = vmatmul.mubr.f32.gmra.mrb[0].mxu0 %v1776
  %v2094 = vpop.f32.mrb[0].mxu0
  %v2095 = vadd.f32 0.0, %v2094
  %v2096 = vpop.f32.mrb[0].mxu0
  %v2097 = vadd.f32 0.0, %v2096
  %2098 = vmatprep.mubr.f32.mxu0 0.0
  %2099 = vmatmul.mubr.f32.gmra.mrb[0].mxu0 %v1779
  %v2100 = vpop.f32.mrb[0].mxu0
  %v2101 = vadd.f32 0.0, %v2100
  %v2102 = vpop.f32.mrb[0].mxu0
  %v2103 = vadd.f32 0.0, %v2102
  %2104 = vmatprep.mubr.f32.mxu0 0.0
  %2105 = vmatmul.mubr.f32.gmra.mrb[0].mxu0 %v1782
  %v2106 = vpop.f32.mrb[0].mxu0
  %v2107 = vadd.f32 0.0, %v2106
  %v2108 = vpop.f32.mrb[0].mxu0
  %v2109 = vadd.f32 0.0, %v2108
  %2110 = vmatprep.mubr.f32.mxu0 0.0
  %2111 = vmatmul.mubr.f32.gmra.mrb[0].mxu0 %v1785
  %v2112 = vpop.f32.mrb[0].mxu0
  %v2113 = vadd.f32 0.0, %v2112
  %v2114 = vpop.f32.mrb[0].mxu0
  %v2115 = vadd.f32 0.0, %v2114
  %2116 = vmatprep.mubr.f32.mxu0 0.0
  %2117 = vmatmul.mubr.f32.gmra.mrb[0].mxu0 %v1788
  %v2118 = vpop.f32.mrb[0].mxu0
  %v2119 = vadd.f32 0.0, %v2118
  %v2120 = vpop.f32.mrb[0].mxu0
  %v2121 = vadd.f32 0.0, %v2120
  %2122 = vmatprep.mubr.f32.mxu0 0.0
  %2123 = vmatmul.mubr.f32.gmra.mrb[0].mxu0 %v1791
  %v2124 = vpop.f32.mrb[0].mxu0
  %v2125 = vadd.f32 0.0, %v2124
  %v2126 = vpop.f32.mrb[0].mxu0
  %v2127 = vadd.f32 0.0, %v2126
  %2128 = vmatprep.mubr.f32.mxu0 0.0
  %2129 = vmatmul.mubr.f32.gmra.mrb[0].mxu0 %v1794
  %v2130 = vpop.f32.mrb[0].mxu0
  %v2131 = vadd.f32 0.0, %v2130
  %v2132 = vpop.f32.mrb[0].mxu0
  %v2133 = vadd.f32 0.0, %v2132
  %2134 = vdwg.mxu0
  %2136 = vset.pattern.permute.xlu0 0
  %2137 = vperm.xlu0 %2136, %v1726
  %v2138 = vpop.permute.xlu0 %2137
  %2141 = vset.pattern.permute.xlu0 0
  %2142 = vperm.xlu0 %2141, %v1727
  %v2143 = vpop.permute.xlu0 %2142
  %2146 = vset.pattern.permute.xlu0 0
  %2147 = vperm.xlu0 %2146, %v1728
  %v2148 = vpop.permute.xlu0 %2147
  %2151 = vset.pattern.permute.xlu0 0
  %2152 = vperm.xlu0 %2151, %v1729
  %v2153 = vpop.permute.xlu0 %2152
  %2156 = vset.pattern.permute.xlu0 0
  %2157 = vperm.xlu0 %2156, %v1730
  %v2158 = vpop.permute.xlu0 %2157
  %2161 = vset.pattern.permute.xlu0 0
  %2162 = vperm.xlu0 %2161, %v1731
  %v2163 = vpop.permute.xlu0 %2162
  %2166 = vset.pattern.permute.xlu0 0
  %2167 = vperm.xlu0 %2166, %v1732
  %v2168 = vpop.permute.xlu0 %2167
  %v2170 = vadd.f32 %v1881, %v2138
  %v2171 = vadd.f32 %v1887, %v2143
  %v2172 = vadd.f32 %v1893, %v2148
  %v2173 = vadd.f32 %v1899, %v2153
  %v2174 = vadd.f32 %v1905, %v2158
  %v2175 = vadd.f32 %v1911, %v2163
  %v2176 = vadd.f32 %v1917, %v2168
  %v2177 = vtanh.pop %v2170
  %v2178 = vtanh.pop %v2171
  %v2179 = vtanh.pop %v2172
  %v2180 = vtanh.pop %v2173
  %v2181 = vtanh.pop %v2174
  %v2182 = vtanh.pop %v2175
  %v2183 = vtanh.pop %v2176
  %v2184 = vmul.f32 %v2177, %v2177
  %v2185 = vmul.f32 %v2178, %v2178
  %v2186 = vmul.f32 %v2179, %v2179
  %v2187 = vmul.f32 %v2180, %v2180
  %v2188 = vmul.f32 %v2181, %v2181
  %v2189 = vmul.f32 %v2182, %v2182
  %v2190 = vmul.f32 %v2183, %v2183
  %v2191 = vsub.f32 1.0, %v2184
  %v2192 = vsub.f32 1.0, %v2185
  %v2193 = vsub.f32 1.0, %v2186
  %v2194 = vsub.f32 1.0, %v2187
  %v2195 = vsub.f32 1.0, %v2188
  %v2196 = vsub.f32 1.0, %v2189
  %v2197 = vsub.f32 1.0, %v2190
  %v2198 = vmul.f32 %v2177, 2.0
  %v2199 = vmul.f32 %v2178, 2.0
  %v2200 = vmul.f32 %v2179, 2.0
  %v2201 = vmul.f32 %v2180, 2.0
  %v2202 = vmul.f32 %v2181, 2.0
  %v2203 = vmul.f32 %v2182, 2.0
  %v2204 = vmul.f32 %v2183, 2.0
  %v2205 = vmul.f32 %v2198, %v2191
  %v2206 = vmul.f32 %v2199, %v2192
  %v2207 = vmul.f32 %v2200, %v2193
  %v2208 = vmul.f32 %v2201, %v2194
  %v2209 = vmul.f32 %v2202, %v2195
  %v2210 = vmul.f32 %v2203, %v2196
  %v2211 = vmul.f32 %v2204, %v2197
  %2212 = vst [vmem:[#allocation3] sm:$0xff] %v2177
  %2213 = vst [vmem:[#allocation3 + $0x30] sm:$0xff] %v2178
  %2214 = vst [vmem:[#allocation3 + $0x60] sm:$0xff] %v2179
  %2215 = vst [vmem:[#allocation3 + $0x90] sm:$0xff] %v2180
  %2216 = vst [vmem:[#allocation3 + $0xc0] sm:$0xff] %v2181
  %2217 = vst [vmem:[#allocation3 + $0xf0] sm:$0xff] %v2182
  %2218 = vst [vmem:[#allocation3 + $0x120] sm:$0x3] %v2183
  %v2219 = vmul.f32 %v2191, %v1883
  %v2220 = vmul.f32 %v2192, %v1889
  %v2221 = vmul.f32 %v2193, %v1895
  %v2222 = vmul.f32 %v2194, %v1901
  %v2223 = vmul.f32 %v2195, %v1907
  %v2224 = vmul.f32 %v2196, %v1913
  %v2225 = vmul.f32 %v2197, %v1919
  %2226 = vst [vmem:[#allocation3 + $0x8] sm:$0xff] %v2219
  %2227 = vst [vmem:[#allocation3 + $0x38] sm:$0xff] %v2220
  %2228 = vst [vmem:[#allocation3 + $0x68] sm:$0xff] %v2221
  %2229 = vst [vmem:[#allocation3 + $0x98] sm:$0xff] %v2222
  %2230 = vst [vmem:[#allocation3 + $0xc8] sm:$0xff] %v2223
  %2231 = vst [vmem:[#allocation3 + $0xf8] sm:$0xff] %v2224
  %2232 = vst [vmem:[#allocation3 + $0x128] sm:$0x3] %v2225
  %v2233 = vmul.f32 %v2191, %v1988
  %v2234 = vmul.f32 %v2192, %v1994
  %v2235 = vmul.f32 %v2193, %v2000
  %v2236 = vmul.f32 %v2194, %v2006
  %v2237 = vmul.f32 %v2195, %v2012
  %v2238 = vmul.f32 %v2196, %v2018
  %v2239 = vmul.f32 %v2197, %v2024
  %v2240 = vmul.f32 %v2095, %v2095
  %v2241 = vmul.f32 %v2101, %v2101
  %v2242 = vmul.f32 %v2107, %v2107
  %v2243 = vmul.f32 %v2113, %v2113
  %v2244 = vmul.f32 %v2119, %v2119
  %v2245 = vmul.f32 %v2125, %v2125
  %v2246 = vmul.f32 %v2131, %v2131
  %v2247 = vmul.f32 %v2205, %v2240
  %v2248 = vmul.f32 %v2206, %v2241
  %v2249 = vmul.f32 %v2207, %v2242
  %v2250 = vmul.f32 %v2208, %v2243
  %v2251 = vmul.f32 %v2209, %v2244
  %v2252 = vmul.f32 %v2210, %v2245
  %v2253 = vmul.f32 %v2211, %v2246
  %v2254 = vsub.f32 %v2233, %v2247
  %v2255 = vsub.f32 %v2234, %v2248
  %v2256 = vsub.f32 %v2235, %v2249
  %v2257 = vsub.f32 %v2236, %v2250
  %v2258 = vsub.f32 %v2237, %v2251
  %v2259 = vsub.f32 %v2238, %v2252
  %v2260 = vsub.f32 %v2239, %v2253
  %2261 = vst [vmem:[#allocation3 + $0x10] sm:$0xff] %v2254
  %2262 = vst [vmem:[#allocation3 + $0x40] sm:$0xff] %v2255
  %2263 = vst [vmem:[#allocation3 + $0x70] sm:$0xff] %v2256
  %2264 = vst [vmem:[#allocation3 + $0xa0] sm:$0xff] %v2257
  %2265 = vst [vmem:[#allocation3 + $0xd0] sm:$0xff] %v2258
  %2266 = vst [vmem:[#allocation3 + $0x100] sm:$0xff] %v2259
  %2267 = vst [vmem:[#allocation3 + $0x130] sm:$0x3] %v2260
  %v2268 = vmul.f32 %v2191, %v1990
  %v2269 = vmul.f32 %v2192, %v1996
  %v2270 = vmul.f32 %v2193, %v2002
  %v2271 = vmul.f32 %v2194, %v2008
  %v2272 = vmul.f32 %v2195, %v2014
  %v2273 = vmul.f32 %v2196, %v2020
  %v2274 = vmul.f32 %v2197, %v2026
  %v2275 = vmul.f32 %v2097, %v2097
  %v2276 = vmul.f32 %v2103, %v2103
  %v2277 = vmul.f32 %v2109, %v2109
  %v2278 = vmul.f32 %v2115, %v2115
  %v2279 = vmul.f32 %v2121, %v2121
  %v2280 = vmul.f32 %v2127, %v2127
  %v2281 = vmul.f32 %v2133, %v2133
  %v2282 = vmul.f32 %v2205, %v2275
  %v2283 = vmul.f32 %v2206, %v2276
  %v2284 = vmul.f32 %v2207, %v2277
  %v2285 = vmul.f32 %v2208, %v2278
  %v2286 = vmul.f32 %v2209, %v2279
  %v2287 = vmul.f32 %v2210, %v2280
  %v2288 = vmul.f32 %v2211, %v2281
  %v2289 = vsub.f32 %v2268, %v2282
  %v2290 = vsub.f32 %v2269, %v2283
  %v2291 = vsub.f32 %v2270, %v2284
  %v2292 = vsub.f32 %v2271, %v2285
  %v2293 = vsub.f32 %v2272, %v2286
  %v2294 = vsub.f32 %v2273, %v2287
  %v2295 = vsub.f32 %v2274, %v2288
  %2296 = vst [vmem:[#allocation3 + $0x18] sm:$0xff] %v2289
  %2297 = vst [vmem:[#allocation3 + $0x48] sm:$0xff] %v2290
  %2298 = vst [vmem:[#allocation3 + $0x78] sm:$0xff] %v2291
  %2299 = vst [vmem:[#allocation3 + $0xa8] sm:$0xff] %v2292
  %2300 = vst [vmem:[#allocation3 + $0xd8] sm:$0xff] %v2293
  %2301 = vst [vmem:[#allocation3 + $0x108] sm:$0xff] %v2294
  %2302 = vst [vmem:[#allocation3 + $0x138] sm:$0x3] %v2295
  %v2303 = vmul.f32 %v2191, %v2095
  %v2304 = vmul.f32 %v2192, %v2101
  %v2305 = vmul.f32 %v2193, %v2107
  %v2306 = vmul.f32 %v2194, %v2113
  %v2307 = vmul.f32 %v2195, %v2119
  %v2308 = vmul.f32 %v2196, %v2125
  %v2309 = vmul.f32 %v2197, %v2131
  %2310 = vst [vmem:[#allocation3 + $0x20] sm:$0xff] %v2303
  %2311 = vst [vmem:[#allocation3 + $0x50] sm:$0xff] %v2304
  %2312 = vst [vmem:[#allocation3 + $0x80] sm:$0xff] %v2305
  %2313 = vst [vmem:[#allocation3 + $0xb0] sm:$0xff] %v2306
  %2314 = vst [vmem:[#allocation3 + $0xe0] sm:$0xff] %v2307
  %2315 = vst [vmem:[#allocation3 + $0x110] sm:$0xff] %v2308
  %2316 = vst [vmem:[#allocation3 + $0x140] sm:$0x3] %v2309
  %v2317 = vmul.f32 %v2191, %v2097
  %v2318 = vmul.f32 %v2192, %v2103
  %v2319 = vmul.f32 %v2193, %v2109
  %v2320 = vmul.f32 %v2194, %v2115
  %v2321 = vmul.f32 %v2195, %v2121
  %v2322 = vmul.f32 %v2196, %v2127
  %v2323 = vmul.f32 %v2197, %v2133
  %2324 = vst [vmem:[#allocation3 + $0x28] sm:$0xff] %v2317
  %2325 = vst [vmem:[#allocation3 + $0x58] sm:$0xff] %v2318
  %2326 = vst [vmem:[#allocation3 + $0x88] sm:$0xff] %v2319
  %2327 = vst [vmem:[#allocation3 + $0xb8] sm:$0xff] %v2320
  %2328 = vst [vmem:[#allocation3 + $0xe8] sm:$0xff] %v2321
  %2329 = vst [vmem:[#allocation3 + $0x118] sm:$0xff] %v2322
  %2330 = vst [vmem:[#allocation3 + $0x148] sm:$0x3] %v2323
  %v2331 = vld [vmem:[%s9] sm:$0xff]
  %v2332 = vld [vmem:[%s9 + $0x8] sm:$0xff]
  %v2333 = vld [vmem:[%s9 + $0x10] sm:$0xff]
  %v2334 = vld [vmem:[%s9 + $0x18] sm:$0xff]
  %v2335 = vld [vmem:[%s9 + $0x20] sm:$0xff]
  %v2336 = vld [vmem:[%s9 + $0x28] sm:$0xff]
  %v2337 = vld [vmem:[%s9 + $0x30] sm:$0x3]
  %v2338 = vld [vmem:[%s10] sm:$0xff]
  %v2339 = vld [vmem:[%s10 + $0x8] sm:$0xff]
  %v2340 = vld [vmem:[%s10 + $0x10] sm:$0xff]
  %v2341 = vld [vmem:[%s10 + $0x18] sm:$0xff]
  %v2342 = vld [vmem:[%s10 + $0x20] sm:$0xff]
  %v2343 = vld [vmem:[%s10 + $0x28] sm:$0xff]
  %v2344 = vld [vmem:[%s10 + $0x30] sm:$0x3]
  %v2345 = vld [vmem:[#allocation3] sm:$0xff]
  %v2346 = vld [vmem:[#allocation3 + $0x8] sm:$0xff]
  %v2347 = vld [vmem:[#allocation3 + $0x10] sm:$0xff]
  %v2348 = vld [vmem:[#allocation3 + $0x18] sm:$0xff]
  %v2349 = vld [vmem:[#allocation3 + $0x20] sm:$0xff]
  %v2350 = vld [vmem:[#allocation3 + $0x28] sm:$0xff]
  %v2351 = vld [vmem:[#allocation3 + $0x30] sm:$0xff]
  %v2352 = vld [vmem:[#allocation3 + $0x38] sm:$0xff]
  %v2353 = vld [vmem:[#allocation3 + $0x40] sm:$0xff]
  %v2354 = vld [vmem:[#allocation3 + $0x48] sm:$0xff]
  %v2355 = vld [vmem:[#allocation3 + $0x50] sm:$0xff]
  %v2356 = vld [vmem:[#allocation3 + $0x58] sm:$0xff]
  %v2357 = vld [vmem:[#allocation3 + $0x60] sm:$0xff]
  %v2358 = vld [vmem:[#allocation3 + $0x68] sm:$0xff]
  %v2359 = vld [vmem:[#allocation3 + $0x70] sm:$0xff]
  %v2360 = vld [vmem:[#allocation3 + $0x78] sm:$0xff]
  %v2361 = vld [vmem:[#allocation3 + $0x80] sm:$0xff]
  %v2362 = vld [vmem:[#allocation3 + $0x88] sm:$0xff]
  %v2363 = vld [vmem:[#allocation3 + $0x90] sm:$0xff]
  %v2364 = vld [vmem:[#allocation3 + $0x98] sm:$0xff]
  %v2365 = vld [vmem:[#allocation3 + $0xa0] sm:$0xff]
  %v2366 = vld [vmem:[#allocation3 + $0xa8] sm:$0xff]
  %v2367 = vld [vmem:[#allocation3 + $0xb0] sm:$0xff]
  %v2368 = vld [vmem:[#allocation3 + $0xb8] sm:$0xff]
  %v2369 = vld [vmem:[#allocation3 + $0xc0] sm:$0xff]
  %v2370 = vld [vmem:[#allocation3 + $0xc8] sm:$0xff]
  %v2371 = vld [vmem:[#allocation3 + $0xd0] sm:$0xff]
  %v2372 = vld [vmem:[#allocation3 + $0xd8] sm:$0xff]
  %v2373 = vld [vmem:[#allocation3 + $0xe0] sm:$0xff]
  %v2374 = vld [vmem:[#allocation3 + $0xe8] sm:$0xff]
  %v2375 = vld [vmem:[#allocation3 + $0xf0] sm:$0xff]
  %v2376 = vld [vmem:[#allocation3 + $0xf8] sm:$0xff]
  %v2377 = vld [vmem:[#allocation3 + $0x100] sm:$0xff]
  %v2378 = vld [vmem:[#allocation3 + $0x108] sm:$0xff]
  %v2379 = vld [vmem:[#allocation3 + $0x110] sm:$0xff]
  %v2380 = vld [vmem:[#allocation3 + $0x118] sm:$0xff]
  %v2381 = vld [vmem:[#allocation3 + $0x120] sm:$0x3]
  %v2382 = vld [vmem:[#allocation3 + $0x128] sm:$0x3]
  %v2383 = vld [vmem:[#allocation3 + $0x130] sm:$0x3]
  %v2384 = vld [vmem:[#allocation3 + $0x138] sm:$0x3]
  %v2385 = vld [vmem:[#allocation3 + $0x140] sm:$0x3]
  %v2386 = vld [vmem:[#allocation3 + $0x148] sm:$0x3]
  %v2388 = vsel %vm549, %v2331, 0
  %v2391 = vsel %vm549, %v2332, 0
  %v2394 = vsel %vm549, %v2333, 0
  %v2397 = vsel %vm549, %v2334, 0
  %v2400 = vsel %vm549, %v2335, 0
  %v2403 = vsel %vm549, %v2336, 0
  %v2406 = vsel %vm549, %v2337, 0
  %v2409 = vsel %vm571, %v2381, 0
  %v2412 = vsel %vm571, %v2382, 0
  %v2415 = vsel %vm571, %v2383, 0
  %v2418 = vsel %vm571, %v2384, 0
  %v2421 = vsel %vm571, %v2385, 0
  %v2424 = vsel %vm571, %v2386, 0
  %2426 = vmatprep.subr.mxu0 %v2346
  %2427 = vmatpush1.msra.mxu0 %v2345
  %2428 = vmatprep.subr.mxu0 %v2352
  %2429 = vmatpush1.msra.mxu0 %v2351
  %2430 = vmatprep.subr.mxu0 %v2358
  %2431 = vmatpush1.msra.mxu0 %v2357
  %2432 = vmatprep.subr.mxu0 %v2364
  %2433 = vmatpush1.msra.mxu0 %v2363
  %2434 = vmatprep.subr.mxu0 %v2370
  %2435 = vmatpush1.msra.mxu0 %v2369
  %2436 = vmatprep.subr.mxu0 %v2376
  %2437 = vmatpush1.msra.mxu0 %v2375
  %2438 = vmatprep.subr.mxu0 %v2412
  %2439 = vmatpush1.msra.mxu0 %v2409
  %2440 = vmatprep.subr.mxu0 0.0
  %2441 = vmatpush1.msra.mxu0 0.0
  %2442 = vmatprep.subr.mxu0 0.0
  %2443 = vmatpush1.msra.mxu0 0.0
  %2444 = vmatprep.subr.mxu0 0.0
  %2445 = vmatpush1.msra.mxu0 0.0
  %2446 = vmatprep.subr.mxu0 0.0
  %2447 = vmatpush1.msra.mxu0 0.0
  %2448 = vmatprep.subr.mxu0 0.0
  %2449 = vmatpush1.msra.mxu0 0.0
  %2450 = vmatprep.subr.mxu0 0.0
  %2451 = vmatpush1.msra.mxu0 0.0
  %2452 = vmatprep.subr.mxu0 0.0
  %2453 = vmatpush1.msra.mxu0 0.0
  %2454 = vmatprep.subr.mxu0 0.0
  %2455 = vmatpush1.msra.mxu0 0.0
  %2456 = vmatprep.subr.mxu0 0.0
  %2457 = vmatpush1.msra.mxu0 0.0
  %2458 = vmatprep.subr.mxu0 0.0
  %2459 = vmatpush1.msra.mxu0 0.0
  %2460 = vmatprep.subr.mxu0 0.0
  %2461 = vmatpush1.msra.mxu0 0.0
  %2462 = vmatprep.subr.mxu0 0.0
  %2463 = vmatpush1.msra.mxu0 0.0
  %2464 = vmatprep.subr.mxu0 0.0
  %2465 = vmatpush1.msra.mxu0 0.0
  %2466 = vmatprep.subr.mxu0 0.0
  %2467 = vmatpush1.msra.mxu0 0.0
  %2468 = vmatprep.subr.mxu0 0.0
  %2469 = vmatpush1.msra.mxu0 0.0
  %2470 = vmatprep.subr.mxu0 0.0
  %2471 = vmatpush1.msra.mxu0 0.0
  %2472 = vmatprep.subr.mxu0 0.0
  %2473 = vmatpush1.msra.mxu0 0.0
  %2474 = vmatprep.subr.mxu0 0.0
  %2475 = vmatpush1.msra.mxu0 0.0
  %2476 = vmatprep.subr.mxu0 0.0
  %2477 = vmatpush1.msra.mxu0 0.0
  %2478 = vmatprep.subr.mxu0 0.0
  %2479 = vmatpush1.msra.mxu0 0.0
  %2480 = vmatprep.subr.mxu0 0.0
  %2481 = vmatpush1.msra.mxu0 0.0
  %2482 = vmatprep.subr.mxu0 0.0
  %2483 = vmatpush1.msra.mxu0 0.0
  %2484 = vmatprep.subr.mxu0 0.0
  %2485 = vmatpush1.msra.mxu0 0.0
  %2486 = vmatprep.subr.mxu0 0.0
  %2487 = vmatpush1.msra.mxu0 0.0
  %2488 = vmatprep.subr.mxu0 0.0
  %2489 = vmatpush1.msra.mxu0 0.0
  %2490 = vmatprep.mubr.f32.mxu0 0.0
  %2491 = vmatmul.mubr.f32.gmra.mrb[0].mxu0 %v2388
  %v2492 = vpop.f32.mrb[0].mxu0
  %v2493 = vadd.f32 0.0, %v2492
  %v2494 = vpop.f32.mrb[0].mxu0
  %v2495 = vadd.f32 0.0, %v2494
  %2496 = vmatprep.mubr.f32.mxu0 0.0
  %2497 = vmatmul.mubr.f32.gmra.mrb[0].mxu0 %v2391
  %v2498 = vpop.f32.mrb[0].mxu0
  %v2499 = vadd.f32 0.0, %v2498
  %v2500 = vpop.f32.mrb[0].mxu0
  %v2501 = vadd.f32 0.0, %v2500
  %2502 = vmatprep.mubr.f32.mxu0 0.0
  %2503 = vmatmul.mubr.f32.gmra.mrb[0].mxu0 %v2394
  %v2504 = vpop.f32.mrb[0].mxu0
  %v2505 = vadd.f32 0.0, %v2504
  %v2506 = vpop.f32.mrb[0].mxu0
  %v2507 = vadd.f32 0.0, %v2506
  %2508 = vmatprep.mubr.f32.mxu0 0.0
  %2509 = vmatmul.mubr.f32.gmra.mrb[0].mxu0 %v2397
  %v2510 = vpop.f32.mrb[0].mxu0
  %v2511 = vadd.f32 0.0, %v2510
  %v2512 = vpop.f32.mrb[0].mxu0
  %v2513 = vadd.f32 0.0, %v2512
  %2514 = vmatprep.mubr.f32.mxu0 0.0
  %2515 = vmatmul.mubr.f32.gmra.mrb[0].mxu0 %v2400
  %v2516 = vpop.f32.mrb[0].mxu0
  %v2517 = vadd.f32 0.0, %v2516
  %v2518 = vpop.f32.mrb[0].mxu0
  %v2519 = vadd.f32 0.0, %v2518
  %2520 = vmatprep.mubr.f32.mxu0 0.0
  %2521 = vmatmul.mubr.f32.gmra.mrb[0].mxu0 %v2403
  %v2522 = vpop.f32.mrb[0].mxu0
  %v2523 = vadd.f32 0.0, %v2522
  %v2524 = vpop.f32.mrb[0].mxu0
  %v2525 = vadd.f32 0.0, %v2524
  %2526 = vmatprep.mubr.f32.mxu0 0.0
  %2527 = vmatmul.mubr.f32.gmra.mrb[0].mxu0 %v2406
  %v2528 = vpop.f32.mrb[0].mxu0
  %v2529 = vadd.f32 0.0, %v2528
  %v2530 = vpop.f32.mrb[0].mxu0
  %v2531 = vadd.f32 0.0, %v2530
  %2532 = vdwg.mxu0
  %2533 = vmatprep.subr.mxu0 %v2348
  %2534 = vmatpush1.msra.mxu0 %v2347
  %2535 = vmatprep.subr.mxu0 %v2354
  %2536 = vmatpush1.msra.mxu0 %v2353
  %2537 = vmatprep.subr.mxu0 %v2360
  %2538 = vmatpush1.msra.mxu0 %v2359
  %2539 = vmatprep.subr.mxu0 %v2366
  %2540 = vmatpush1.msra.mxu0 %v2365
  %2541 = vmatprep.subr.mxu0 %v2372
  %2542 = vmatpush1.msra.mxu0 %v2371
  %2543 = vmatprep.subr.mxu0 %v2378
  %2544 = vmatpush1.msra.mxu0 %v2377
  %2545 = vmatprep.subr.mxu0 %v2418
  %2546 = vmatpush1.msra.mxu0 %v2415
  %2547 = vmatprep.subr.mxu0 0.0
  %2548 = vmatpush1.msra.mxu0 0.0
  %2549 = vmatprep.subr.mxu0 0.0
  %2550 = vmatpush1.msra.mxu0 0.0
  %2551 = vmatprep.subr.mxu0 0.0
  %2552 = vmatpush1.msra.mxu0 0.0
  %2553 = vmatprep.subr.mxu0 0.0
  %2554 = vmatpush1.msra.mxu0 0.0
  %2555 = vmatprep.subr.mxu0 0.0
  %2556 = vmatpush1.msra.mxu0 0.0
  %2557 = vmatprep.subr.mxu0 0.0
  %2558 = vmatpush1.msra.mxu0 0.0
  %2559 = vmatprep.subr.mxu0 0.0
  %2560 = vmatpush1.msra.mxu0 0.0
  %2561 = vmatprep.subr.mxu0 0.0
  %2562 = vmatpush1.msra.mxu0 0.0
  %2563 = vmatprep.subr.mxu0 0.0
  %2564 = vmatpush1.msra.mxu0 0.0
  %2565 = vmatprep.subr.mxu0 0.0
  %2566 = vmatpush1.msra.mxu0 0.0
  %2567 = vmatprep.subr.mxu0 0.0
  %2568 = vmatpush1.msra.mxu0 0.0
  %2569 = vmatprep.subr.mxu0 0.0
  %2570 = vmatpush1.msra.mxu0 0.0
  %2571 = vmatprep.subr.mxu0 0.0
  %2572 = vmatpush1.msra.mxu0 0.0
  %2573 = vmatprep.subr.mxu0 0.0
  %2574 = vmatpush1.msra.mxu0 0.0
  %2575 = vmatprep.subr.mxu0 0.0
  %2576 = vmatpush1.msra.mxu0 0.0
  %2577 = vmatprep.subr.mxu0 0.0
  %2578 = vmatpush1.msra.mxu0 0.0
  %2579 = vmatprep.subr.mxu0 0.0
  %2580 = vmatpush1.msra.mxu0 0.0
  %2581 = vmatprep.subr.mxu0 0.0
  %2582 = vmatpush1.msra.mxu0 0.0
  %2583 = vmatprep.subr.mxu0 0.0
  %2584 = vmatpush1.msra.mxu0 0.0
  %2585 = vmatprep.subr.mxu0 0.0
  %2586 = vmatpush1.msra.mxu0 0.0
  %2587 = vmatprep.subr.mxu0 0.0
  %2588 = vmatpush1.msra.mxu0 0.0
  %2589 = vmatprep.subr.mxu0 0.0
  %2590 = vmatpush1.msra.mxu0 0.0
  %2591 = vmatprep.subr.mxu0 0.0
  %2592 = vmatpush1.msra.mxu0 0.0
  %2593 = vmatprep.subr.mxu0 0.0
  %2594 = vmatpush1.msra.mxu0 0.0
  %2595 = vmatprep.subr.mxu0 0.0
  %2596 = vmatpush1.msra.mxu0 0.0
  %2597 = vmatprep.mubr.f32.mxu0 0.0
  %2598 = vmatmul.mubr.f32.gmra.mrb[0].mxu0 %v2388
  %v2599 = vpop.f32.mrb[0].mxu0
  %v2600 = vadd.f32 0.0, %v2599
  %v2601 = vpop.f32.mrb[0].mxu0
  %v2602 = vadd.f32 0.0, %v2601
  %2603 = vmatprep.mubr.f32.mxu0 0.0
  %2604 = vmatmul.mubr.f32.gmra.mrb[0].mxu0 %v2391
  %v2605 = vpop.f32.mrb[0].mxu0
  %v2606 = vadd.f32 0.0, %v2605
  %v2607 = vpop.f32.mrb[0].mxu0
  %v2608 = vadd.f32 0.0, %v2607
  %2609 = vmatprep.mubr.f32.mxu0 0.0
  %2610 = vmatmul.mubr.f32.gmra.mrb[0].mxu0 %v2394
  %v2611 = vpop.f32.mrb[0].mxu0
  %v2612 = vadd.f32 0.0, %v2611
  %v2613 = vpop.f32.mrb[0].mxu0
  %v2614 = vadd.f32 0.0, %v2613
  %2615 = vmatprep.mubr.f32.mxu0 0.0
  %2616 = vmatmul.mubr.f32.gmra.mrb[0].mxu0 %v2397
  %v2617 = vpop.f32.mrb[0].mxu0
  %v2618 = vadd.f32 0.0, %v2617
  %v2619 = vpop.f32.mrb[0].mxu0
  %v2620 = vadd.f32 0.0, %v2619
  %2621 = vmatprep.mubr.f32.mxu0 0.0
  %2622 = vmatmul.mubr.f32.gmra.mrb[0].mxu0 %v2400
  %v2623 = vpop.f32.mrb[0].mxu0
  %v2624 = vadd.f32 0.0, %v2623
  %v2625 = vpop.f32.mrb[0].mxu0
  %v2626 = vadd.f32 0.0, %v2625
  %2627 = vmatprep.mubr.f32.mxu0 0.0
  %2628 = vmatmul.mubr.f32.gmra.mrb[0].mxu0 %v2403
  %v2629 = vpop.f32.mrb[0].mxu0
  %v2630 = vadd.f32 0.0, %v2629
  %v2631 = vpop.f32.mrb[0].mxu0
  %v2632 = vadd.f32 0.0, %v2631
  %2633 = vmatprep.mubr.f32.mxu0 0.0
  %2634 = vmatmul.mubr.f32.gmra.mrb[0].mxu0 %v2406
  %v2635 = vpop.f32.mrb[0].mxu0
  %v2636 = vadd.f32 0.0, %v2635
  %v2637 = vpop.f32.mrb[0].mxu0
  %v2638 = vadd.f32 0.0, %v2637
  %2639 = vdwg.mxu0
  %2640 = vmatprep.subr.mxu0 %v2350
  %2641 = vmatpush1.msra.mxu0 %v2349
  %2642 = vmatprep.subr.mxu0 %v2356
  %2643 = vmatpush1.msra.mxu0 %v2355
  %2644 = vmatprep.subr.mxu0 %v2362
  %2645 = vmatpush1.msra.mxu0 %v2361
  %2646 = vmatprep.subr.mxu0 %v2368
  %2647 = vmatpush1.msra.mxu0 %v2367
  %2648 = vmatprep.subr.mxu0 %v2374
  %2649 = vmatpush1.msra.mxu0 %v2373
  %2650 = vmatprep.subr.mxu0 %v2380
  %2651 = vmatpush1.msra.mxu0 %v2379
  %2652 = vmatprep.subr.mxu0 %v2424
  %2653 = vmatpush1.msra.mxu0 %v2421
  %2654 = vmatprep.subr.mxu0 0.0
  %2655 = vmatpush1.msra.mxu0 0.0
  %2656 = vmatprep.subr.mxu0 0.0
  %2657 = vmatpush1.msra.mxu0 0.0
  %2658 = vmatprep.subr.mxu0 0.0
  %2659 = vmatpush1.msra.mxu0 0.0
  %2660 = vmatprep.subr.mxu0 0.0
  %2661 = vmatpush1.msra.mxu0 0.0
  %2662 = vmatprep.subr.mxu0 0.0
  %2663 = vmatpush1.msra.mxu0 0.0
  %2664 = vmatprep.subr.mxu0 0.0
  %2665 = vmatpush1.msra.mxu0 0.0
  %2666 = vmatprep.subr.mxu0 0.0
  %2667 = vmatpush1.msra.mxu0 0.0
  %2668 = vmatprep.subr.mxu0 0.0
  %2669 = vmatpush1.msra.mxu0 0.0
  %2670 = vmatprep.subr.mxu0 0.0
  %2671 = vmatpush1.msra.mxu0 0.0
  %2672 = vmatprep.subr.mxu0 0.0
  %2673 = vmatpush1.msra.mxu0 0.0
  %2674 = vmatprep.subr.mxu0 0.0
  %2675 = vmatpush1.msra.mxu0 0.0
  %2676 = vmatprep.subr.mxu0 0.0
  %2677 = vmatpush1.msra.mxu0 0.0
  %2678 = vmatprep.subr.mxu0 0.0
  %2679 = vmatpush1.msra.mxu0 0.0
  %2680 = vmatprep.subr.mxu0 0.0
  %2681 = vmatpush1.msra.mxu0 0.0
  %2682 = vmatprep.subr.mxu0 0.0
  %2683 = vmatpush1.msra.mxu0 0.0
  %2684 = vmatprep.subr.mxu0 0.0
  %2685 = vmatpush1.msra.mxu0 0.0
  %2686 = vmatprep.subr.mxu0 0.0
  %2687 = vmatpush1.msra.mxu0 0.0
  %2688 = vmatprep.subr.mxu0 0.0
  %2689 = vmatpush1.msra.mxu0 0.0
  %2690 = vmatprep.subr.mxu0 0.0
  %2691 = vmatpush1.msra.mxu0 0.0
  %2692 = vmatprep.subr.mxu0 0.0
  %2693 = vmatpush1.msra.mxu0 0.0
  %2694 = vmatprep.subr.mxu0 0.0
  %2695 = vmatpush1.msra.mxu0 0.0
  %2696 = vmatprep.subr.mxu0 0.0
  %2697 = vmatpush1.msra.mxu0 0.0
  %2698 = vmatprep.subr.mxu0 0.0
  %2699 = vmatpush1.msra.mxu0 0.0
  %2700 = vmatprep.subr.mxu0 0.0
  %2701 = vmatpush1.msra.mxu0 0.0
  %2702 = vmatprep.subr.mxu0 0.0
  %2703 = vmatpush1.msra.mxu0 0.0
  %2704 = vmatprep.mubr.f32.mxu0 0.0
  %2705 = vmatmul.mubr.f32.gmra.mrb[0].mxu0 %v2388
  %v2706 = vpop.f32.mrb[0].mxu0
  %v2707 = vadd.f32 0.0, %v2706
  %v2708 = vpop.f32.mrb[0].mxu0
  %v2709 = vadd.f32 0.0, %v2708
  %2710 = vmatprep.mubr.f32.mxu0 0.0
  %2711 = vmatmul.mubr.f32.gmra.mrb[0].mxu0 %v2391
  %v2712 = vpop.f32.mrb[0].mxu0
  %v2713 = vadd.f32 0.0, %v2712
  %v2714 = vpop.f32.mrb[0].mxu0
  %v2715 = vadd.f32 0.0, %v2714
  %2716 = vmatprep.mubr.f32.mxu0 0.0
  %2717 = vmatmul.mubr.f32.gmra.mrb[0].mxu0 %v2394
  %v2718 = vpop.f32.mrb[0].mxu0
  %v2719 = vadd.f32 0.0, %v2718
  %v2720 = vpop.f32.mrb[0].mxu0
  %v2721 = vadd.f32 0.0, %v2720
  %2722 = vmatprep.mubr.f32.mxu0 0.0
  %2723 = vmatmul.mubr.f32.gmra.mrb[0].mxu0 %v2397
  %v2724 = vpop.f32.mrb[0].mxu0
  %v2725 = vadd.f32 0.0, %v2724
  %v2726 = vpop.f32.mrb[0].mxu0
  %v2727 = vadd.f32 0.0, %v2726
  %2728 = vmatprep.mubr.f32.mxu0 0.0
  %2729 = vmatmul.mubr.f32.gmra.mrb[0].mxu0 %v2400
  %v2730 = vpop.f32.mrb[0].mxu0
  %v2731 = vadd.f32 0.0, %v2730
  %v2732 = vpop.f32.mrb[0].mxu0
  %v2733 = vadd.f32 0.0, %v2732
  %2734 = vmatprep.mubr.f32.mxu0 0.0
  %2735 = vmatmul.mubr.f32.gmra.mrb[0].mxu0 %v2403
  %v2736 = vpop.f32.mrb[0].mxu0
  %v2737 = vadd.f32 0.0, %v2736
  %v2738 = vpop.f32.mrb[0].mxu0
  %v2739 = vadd.f32 0.0, %v2738
  %2740 = vmatprep.mubr.f32.mxu0 0.0
  %2741 = vmatmul.mubr.f32.gmra.mrb[0].mxu0 %v2406
  %v2742 = vpop.f32.mrb[0].mxu0
  %v2743 = vadd.f32 0.0, %v2742
  %v2744 = vpop.f32.mrb[0].mxu0
  %v2745 = vadd.f32 0.0, %v2744
  %2746 = vdwg.mxu0
  %2748 = vset.pattern.permute.xlu0 0
  %2749 = vperm.xlu0 %2748, %v2338
  %v2750 = vpop.permute.xlu0 %2749
  %2753 = vset.pattern.permute.xlu0 0
  %2754 = vperm.xlu0 %2753, %v2339
  %v2755 = vpop.permute.xlu0 %2754
  %2758 = vset.pattern.permute.xlu0 0
  %2759 = vperm.xlu0 %2758, %v2340
  %v2760 = vpop.permute.xlu0 %2759
  %2763 = vset.pattern.permute.xlu0 0
  %2764 = vperm.xlu0 %2763, %v2341
  %v2765 = vpop.permute.xlu0 %2764
  %2768 = vset.pattern.permute.xlu0 0
  %2769 = vperm.xlu0 %2768, %v2342
  %v2770 = vpop.permute.xlu0 %2769
  %2773 = vset.pattern.permute.xlu0 0
  %2774 = vperm.xlu0 %2773, %v2343
  %v2775 = vpop.permute.xlu0 %2774
  %2778 = vset.pattern.permute.xlu0 0
  %2779 = vperm.xlu0 %2778, %v2344
  %v2780 = vpop.permute.xlu0 %2779
  %v2782 = vadd.f32 %v2493, %v2750
  %v2783 = vadd.f32 %v2499, %v2755
  %v2784 = vadd.f32 %v2505, %v2760
  %v2785 = vadd.f32 %v2511, %v2765
  %v2786 = vadd.f32 %v2517, %v2770
  %v2787 = vadd.f32 %v2523, %v2775
  %v2788 = vadd.f32 %v2529, %v2780
  %v2789 = vtanh.pop %v2782
  %v2790 = vtanh.pop %v2783
  %v2791 = vtanh.pop %v2784
  %v2792 = vtanh.pop %v2785
  %v2793 = vtanh.pop %v2786
  %v2794 = vtanh.pop %v2787
  %v2795 = vtanh.pop %v2788
  %v2796 = vmul.f32 %v2789, %v2789
  %v2797 = vmul.f32 %v2790, %v2790
  %v2798 = vmul.f32 %v2791, %v2791
  %v2799 = vmul.f32 %v2792, %v2792
  %v2800 = vmul.f32 %v2793, %v2793
  %v2801 = vmul.f32 %v2794, %v2794
  %v2802 = vmul.f32 %v2795, %v2795
  %v2803 = vsub.f32 1.0, %v2796
  %v2804 = vsub.f32 1.0, %v2797
  %v2805 = vsub.f32 1.0, %v2798
  %v2806 = vsub.f32 1.0, %v2799
  %v2807 = vsub.f32 1.0, %v2800
  %v2808 = vsub.f32 1.0, %v2801
  %v2809 = vsub.f32 1.0, %v2802
  %v2810 = vmul.f32 %v2789, 2.0
  %v2811 = vmul.f32 %v2790, 2.0
  %v2812 = vmul.f32 %v2791, 2.0
  %v2813 = vmul.f32 %v2792, 2.0
  %v2814 = vmul.f32 %v2793, 2.0
  %v2815 = vmul.f32 %v2794, 2.0
  %v2816 = vmul.f32 %v2795, 2.0
  %v2817 = vmul.f32 %v2810, %v2803
  %v2818 = vmul.f32 %v2811, %v2804
  %v2819 = vmul.f32 %v2812, %v2805
  %v2820 = vmul.f32 %v2813, %v2806
  %v2821 = vmul.f32 %v2814, %v2807
  %v2822 = vmul.f32 %v2815, %v2808
  %v2823 = vmul.f32 %v2816, %v2809
  %2824 = vst [vmem:[#allocation2] sm:$0xff] %v2789
  %2825 = vst [vmem:[#allocation2 + $0x30] sm:$0xff] %v2790
  %2826 = vst [vmem:[#allocation2 + $0x60] sm:$0xff] %v2791
  %2827 = vst [vmem:[#allocation2 + $0x90] sm:$0xff] %v2792
  %2828 = vst [vmem:[#allocation2 + $0xc0] sm:$0xff] %v2793
  %2829 = vst [vmem:[#allocation2 + $0xf0] sm:$0xff] %v2794
  %2830 = vst [vmem:[#allocation2 + $0x120] sm:$0x3] %v2795
  %v2831 = vmul.f32 %v2803, %v2495
  %v2832 = vmul.f32 %v2804, %v2501
  %v2833 = vmul.f32 %v2805, %v2507
  %v2834 = vmul.f32 %v2806, %v2513
  %v2835 = vmul.f32 %v2807, %v2519
  %v2836 = vmul.f32 %v2808, %v2525
  %v2837 = vmul.f32 %v2809, %v2531
  %2838 = vst [vmem:[#allocation2 + $0x8] sm:$0xff] %v2831
  %2839 = vst [vmem:[#allocation2 + $0x38] sm:$0xff] %v2832
  %2840 = vst [vmem:[#allocation2 + $0x68] sm:$0xff] %v2833
  %2841 = vst [vmem:[#allocation2 + $0x98] sm:$0xff] %v2834
  %2842 = vst [vmem:[#allocation2 + $0xc8] sm:$0xff] %v2835
  %2843 = vst [vmem:[#allocation2 + $0xf8] sm:$0xff] %v2836
  %2844 = vst [vmem:[#allocation2 + $0x128] sm:$0x3] %v2837
  %v2845 = vmul.f32 %v2803, %v2600
  %v2846 = vmul.f32 %v2804, %v2606
  %v2847 = vmul.f32 %v2805, %v2612
  %v2848 = vmul.f32 %v2806, %v2618
  %v2849 = vmul.f32 %v2807, %v2624
  %v2850 = vmul.f32 %v2808, %v2630
  %v2851 = vmul.f32 %v2809, %v2636
  %v2852 = vmul.f32 %v2707, %v2707
  %v2853 = vmul.f32 %v2713, %v2713
  %v2854 = vmul.f32 %v2719, %v2719
  %v2855 = vmul.f32 %v2725, %v2725
  %v2856 = vmul.f32 %v2731, %v2731
  %v2857 = vmul.f32 %v2737, %v2737
  %v2858 = vmul.f32 %v2743, %v2743
  %v2859 = vmul.f32 %v2817, %v2852
  %v2860 = vmul.f32 %v2818, %v2853
  %v2861 = vmul.f32 %v2819, %v2854
  %v2862 = vmul.f32 %v2820, %v2855
  %v2863 = vmul.f32 %v2821, %v2856
  %v2864 = vmul.f32 %v2822, %v2857
  %v2865 = vmul.f32 %v2823, %v2858
  %v2866 = vsub.f32 %v2845, %v2859
  %v2867 = vsub.f32 %v2846, %v2860
  %v2868 = vsub.f32 %v2847, %v2861
  %v2869 = vsub.f32 %v2848, %v2862
  %v2870 = vsub.f32 %v2849, %v2863
  %v2871 = vsub.f32 %v2850, %v2864
  %v2872 = vsub.f32 %v2851, %v2865
  %2873 = vst [vmem:[#allocation2 + $0x10] sm:$0xff] %v2866
  %2874 = vst [vmem:[#allocation2 + $0x40] sm:$0xff] %v2867
  %2875 = vst [vmem:[#allocation2 + $0x70] sm:$0xff] %v2868
  %2876 = vst [vmem:[#allocation2 + $0xa0] sm:$0xff] %v2869
  %2877 = vst [vmem:[#allocation2 + $0xd0] sm:$0xff] %v2870
  %2878 = vst [vmem:[#allocation2 + $0x100] sm:$0xff] %v2871
  %2879 = vst [vmem:[#allocation2 + $0x130] sm:$0x3] %v2872
  %v2880 = vmul.f32 %v2803, %v2602
  %v2881 = vmul.f32 %v2804, %v2608
  %v2882 = vmul.f32 %v2805, %v2614
  %v2883 = vmul.f32 %v2806, %v2620
  %v2884 = vmul.f32 %v2807, %v2626
  %v2885 = vmul.f32 %v2808, %v2632
  %v2886 = vmul.f32 %v2809, %v2638
  %v2887 = vmul.f32 %v2709, %v2709
  %v2888 = vmul.f32 %v2715, %v2715
  %v2889 = vmul.f32 %v2721, %v2721
  %v2890 = vmul.f32 %v2727, %v2727
  %v2891 = vmul.f32 %v2733, %v2733
  %v2892 = vmul.f32 %v2739, %v2739
  %v2893 = vmul.f32 %v2745, %v2745
  %v2894 = vmul.f32 %v2817, %v2887
  %v2895 = vmul.f32 %v2818, %v2888
  %v2896 = vmul.f32 %v2819, %v2889
  %v2897 = vmul.f32 %v2820, %v2890
  %v2898 = vmul.f32 %v2821, %v2891
  %v2899 = vmul.f32 %v2822, %v2892
  %v2900 = vmul.f32 %v2823, %v2893
  %v2901 = vsub.f32 %v2880, %v2894
  %v2902 = vsub.f32 %v2881, %v2895
  %v2903 = vsub.f32 %v2882, %v2896
  %v2904 = vsub.f32 %v2883, %v2897
  %v2905 = vsub.f32 %v2884, %v2898
  %v2906 = vsub.f32 %v2885, %v2899
  %v2907 = vsub.f32 %v2886, %v2900
  %2908 = vst [vmem:[#allocation2 + $0x18] sm:$0xff] %v2901
  %2909 = vst [vmem:[#allocation2 + $0x48] sm:$0xff] %v2902
  %2910 = vst [vmem:[#allocation2 + $0x78] sm:$0xff] %v2903
  %2911 = vst [vmem:[#allocation2 + $0xa8] sm:$0xff] %v2904
  %2912 = vst [vmem:[#allocation2 + $0xd8] sm:$0xff] %v2905
  %2913 = vst [vmem:[#allocation2 + $0x108] sm:$0xff] %v2906
  %2914 = vst [vmem:[#allocation2 + $0x138] sm:$0x3] %v2907
  %v2915 = vmul.f32 %v2803, %v2707
  %v2916 = vmul.f32 %v2804, %v2713
  %v2917 = vmul.f32 %v2805, %v2719
  %v2918 = vmul.f32 %v2806, %v2725
  %v2919 = vmul.f32 %v2807, %v2731
  %v2920 = vmul.f32 %v2808, %v2737
  %v2921 = vmul.f32 %v2809, %v2743
  %2922 = vst [vmem:[#allocation2 + $0x20] sm:$0xff] %v2915
  %2923 = vst [vmem:[#allocation2 + $0x50] sm:$0xff] %v2916
  %2924 = vst [vmem:[#allocation2 + $0x80] sm:$0xff] %v2917
  %2925 = vst [vmem:[#allocation2 + $0xb0] sm:$0xff] %v2918
  %2926 = vst [vmem:[#allocation2 + $0xe0] sm:$0xff] %v2919
  %2927 = vst [vmem:[#allocation2 + $0x110] sm:$0xff] %v2920
  %2928 = vst [vmem:[#allocation2 + $0x140] sm:$0x3] %v2921
  %v2929 = vmul.f32 %v2803, %v2709
  %v2930 = vmul.f32 %v2804, %v2715
  %v2931 = vmul.f32 %v2805, %v2721
  %v2932 = vmul.f32 %v2806, %v2727
  %v2933 = vmul.f32 %v2807, %v2733
  %v2934 = vmul.f32 %v2808, %v2739
  %v2935 = vmul.f32 %v2809, %v2745
  %2936 = vst [vmem:[#allocation2 + $0x28] sm:$0xff] %v2929
  %2937 = vst [vmem:[#allocation2 + $0x58] sm:$0xff] %v2930
  %2938 = vst [vmem:[#allocation2 + $0x88] sm:$0xff] %v2931
  %2939 = vst [vmem:[#allocation2 + $0xb8] sm:$0xff] %v2932
  %2940 = vst [vmem:[#allocation2 + $0xe8] sm:$0xff] %v2933
  %2941 = vst [vmem:[#allocation2 + $0x118] sm:$0xff] %v2934
  %2942 = vst [vmem:[#allocation2 + $0x148] sm:$0x3] %v2935
  %v2943 = vld [vmem:[%s11] sm:$0x3]
  %v2944 = vld [vmem:[%s12] sm:$0x3]
  %v2945 = vld [vmem:[#allocation2] sm:$0xff]
  %v2946 = vld [vmem:[#allocation2 + $0x8] sm:$0xff]
  %v2947 = vld [vmem:[#allocation2 + $0x10] sm:$0xff]
  %v2948 = vld [vmem:[#allocation2 + $0x18] sm:$0xff]
  %v2949 = vld [vmem:[#allocation2 + $0x30] sm:$0xff]
  %v2950 = vld [vmem:[#allocation2 + $0x38] sm:$0xff]
  %v2951 = vld [vmem:[#allocation2 + $0x40] sm:$0xff]
  %v2952 = vld [vmem:[#allocation2 + $0x48] sm:$0xff]
  %v2953 = vld [vmem:[#allocation2 + $0x60] sm:$0xff]
  %v2954 = vld [vmem:[#allocation2 + $0x68] sm:$0xff]
  %v2955 = vld [vmem:[#allocation2 + $0x70] sm:$0xff]
  %v2956 = vld [vmem:[#allocation2 + $0x78] sm:$0xff]
  %v2957 = vld [vmem:[#allocation2 + $0x90] sm:$0xff]
  %v2958 = vld [vmem:[#allocation2 + $0x98] sm:$0xff]
  %v2959 = vld [vmem:[#allocation2 + $0xa0] sm:$0xff]
  %v2960 = vld [vmem:[#allocation2 + $0xa8] sm:$0xff]
  %v2961 = vld [vmem:[#allocation2 + $0xc0] sm:$0xff]
  %v2962 = vld [vmem:[#allocation2 + $0xc8] sm:$0xff]
  %v2963 = vld [vmem:[#allocation2 + $0xd0] sm:$0xff]
  %v2964 = vld [vmem:[#allocation2 + $0xd8] sm:$0xff]
  %v2965 = vld [vmem:[#allocation2 + $0xf0] sm:$0xff]
  %v2966 = vld [vmem:[#allocation2 + $0xf8] sm:$0xff]
  %v2967 = vld [vmem:[#allocation2 + $0x100] sm:$0xff]
  %v2968 = vld [vmem:[#allocation2 + $0x108] sm:$0xff]
  %v2969 = vld [vmem:[#allocation2 + $0x120] sm:$0x3]
  %v2970 = vld [vmem:[#allocation2 + $0x128] sm:$0x3]
  %v2971 = vld [vmem:[#allocation2 + $0x130] sm:$0x3]
  %v2972 = vld [vmem:[#allocation2 + $0x138] sm:$0x3]
  %v2974 = vsel %vm549, %v2943, 0
  %v2977 = vsel %vm571, %v2969, 0
  %v2980 = vsel %vm571, %v2970, 0
  %v2983 = vsel %vm571, %v2971, 0
  %v2986 = vsel %vm571, %v2972, 0
  %2988 = vmatprep.subr.mxu0 %v2946
  %2989 = vmatpush1.msra.mxu0 %v2945
  %2990 = vmatprep.subr.mxu0 %v2950
  %2991 = vmatpush1.msra.mxu0 %v2949
  %2992 = vmatprep.subr.mxu0 %v2954
  %2993 = vmatpush1.msra.mxu0 %v2953
  %2994 = vmatprep.subr.mxu0 %v2958
  %2995 = vmatpush1.msra.mxu0 %v2957
  %2996 = vmatprep.subr.mxu0 %v2962
  %2997 = vmatpush1.msra.mxu0 %v2961
  %2998 = vmatprep.subr.mxu0 %v2966
  %2999 = vmatpush1.msra.mxu0 %v2965
  %3000 = vmatprep.subr.mxu0 %v2980
  %3001 = vmatpush1.msra.mxu0 %v2977
  %3002 = vmatprep.subr.mxu0 0.0
  %3003 = vmatpush1.msra.mxu0 0.0
  %3004 = vmatprep.subr.mxu0 0.0
  %3005 = vmatpush1.msra.mxu0 0.0
  %3006 = vmatprep.subr.mxu0 0.0
  %3007 = vmatpush1.msra.mxu0 0.0
  %3008 = vmatprep.subr.mxu0 0.0
  %3009 = vmatpush1.msra.mxu0 0.0
  %3010 = vmatprep.subr.mxu0 0.0
  %3011 = vmatpush1.msra.mxu0 0.0
  %3012 = vmatprep.subr.mxu0 0.0
  %3013 = vmatpush1.msra.mxu0 0.0
  %3014 = vmatprep.subr.mxu0 0.0
  %3015 = vmatpush1.msra.mxu0 0.0
  %3016 = vmatprep.subr.mxu0 0.0
  %3017 = vmatpush1.msra.mxu0 0.0
  %3018 = vmatprep.subr.mxu0 0.0
  %3019 = vmatpush1.msra.mxu0 0.0
  %3020 = vmatprep.subr.mxu0 0.0
  %3021 = vmatpush1.msra.mxu0 0.0
  %3022 = vmatprep.subr.mxu0 0.0
  %3023 = vmatpush1.msra.mxu0 0.0
  %3024 = vmatprep.subr.mxu0 0.0
  %3025 = vmatpush1.msra.mxu0 0.0
  %3026 = vmatprep.subr.mxu0 0.0
  %3027 = vmatpush1.msra.mxu0 0.0
  %3028 = vmatprep.subr.mxu0 0.0
  %3029 = vmatpush1.msra.mxu0 0.0
  %3030 = vmatprep.subr.mxu0 0.0
  %3031 = vmatpush1.msra.mxu0 0.0
  %3032 = vmatprep.subr.mxu0 0.0
  %3033 = vmatpush1.msra.mxu0 0.0
  %3034 = vmatprep.subr.mxu0 0.0
  %3035 = vmatpush1.msra.mxu0 0.0
  %3036 = vmatprep.subr.mxu0 0.0
  %3037 = vmatpush1.msra.mxu0 0.0
  %3038 = vmatprep.subr.mxu0 0.0
  %3039 = vmatpush1.msra.mxu0 0.0
  %3040 = vmatprep.subr.mxu0 0.0
  %3041 = vmatpush1.msra.mxu0 0.0
  %3042 = vmatprep.subr.mxu0 0.0
  %3043 = vmatpush1.msra.mxu0 0.0
  %3044 = vmatprep.subr.mxu0 0.0
  %3045 = vmatpush1.msra.mxu0 0.0
  %3046 = vmatprep.subr.mxu0 0.0
  %3047 = vmatpush1.msra.mxu0 0.0
  %3048 = vmatprep.subr.mxu0 0.0
  %3049 = vmatpush1.msra.mxu0 0.0
  %3050 = vmatprep.subr.mxu0 0.0
  %3051 = vmatpush1.msra.mxu0 0.0
  %3052 = vmatprep.mubr.f32.mxu0 0.0
  %3053 = vmatmul.mubr.f32.gmra.mrb[0].mxu0 %v2974
  %v3054 = vpop.f32.mrb[0].mxu0
  %v3055 = vadd.f32 0.0, %v3054
  %v3056 = vpop.f32.mrb[0].mxu0
  %v3057 = vadd.f32 0.0, %v3056
  %3058 = vdwg.mxu0
  %3059 = vmatprep.subr.mxu0 %v2948
  %3060 = vmatpush1.msra.mxu0 %v2947
  %3061 = vmatprep.subr.mxu0 %v2952
  %3062 = vmatpush1.msra.mxu0 %v2951
  %3063 = vmatprep.subr.mxu0 %v2956
  %3064 = vmatpush1.msra.mxu0 %v2955
  %3065 = vmatprep.subr.mxu0 %v2960
  %3066 = vmatpush1.msra.mxu0 %v2959
  %3067 = vmatprep.subr.mxu0 %v2964
  %3068 = vmatpush1.msra.mxu0 %v2963
  %3069 = vmatprep.subr.mxu0 %v2968
  %3070 = vmatpush1.msra.mxu0 %v2967
  %3071 = vmatprep.subr.mxu0 %v2986
  %3072 = vmatpush1.msra.mxu0 %v2983
  %3073 = vmatprep.subr.mxu0 0.0
  %3074 = vmatpush1.msra.mxu0 0.0
  %3075 = vmatprep.subr.mxu0 0.0
  %3076 = vmatpush1.msra.mxu0 0.0
  %3077 = vmatprep.subr.mxu0 0.0
  %3078 = vmatpush1.msra.mxu0 0.0
  %3079 = vmatprep.subr.mxu0 0.0
  %3080 = vmatpush1.msra.mxu0 0.0
  %3081 = vmatprep.subr.mxu0 0.0
  %3082 = vmatpush1.msra.mxu0 0.0
  %3083 = vmatprep.subr.mxu0 0.0
  %3084 = vmatpush1.msra.mxu0 0.0
  %3085 = vmatprep.subr.mxu0 0.0
  %3086 = vmatpush1.msra.mxu0 0.0
  %3087 = vmatprep.subr.mxu0 0.0
  %3088 = vmatpush1.msra.mxu0 0.0
  %3089 = vmatprep.subr.mxu0 0.0
  %3090 = vmatpush1.msra.mxu0 0.0
  %3091 = vmatprep.subr.mxu0 0.0
  %3092 = vmatpush1.msra.mxu0 0.0
  %3093 = vmatprep.subr.mxu0 0.0
  %3094 = vmatpush1.msra.mxu0 0.0
  %3095 = vmatprep.subr.mxu0 0.0
  %3096 = vmatpush1.msra.mxu0 0.0
  %3097 = vmatprep.subr.mxu0 0.0
  %3098 = vmatpush1.msra.mxu0 0.0
  %3099 = vmatprep.subr.mxu0 0.0
  %3100 = vmatpush1.msra.mxu0 0.0
  %3101 = vmatprep.subr.mxu0 0.0
  %3102 = vmatpush1.msra.mxu0 0.0
  %3103 = vmatprep.subr.mxu0 0.0
  %3104 = vmatpush1.msra.mxu0 0.0
  %3105 = vmatprep.subr.mxu0 0.0
  %3106 = vmatpush1.msra.mxu0 0.0
  %3107 = vmatprep.subr.mxu0 0.0
  %3108 = vmatpush1.msra.mxu0 0.0
  %3109 = vmatprep.subr.mxu0 0.0
  %3110 = vmatpush1.msra.mxu0 0.0
  %3111 = vmatprep.subr.mxu0 0.0
  %3112 = vmatpush1.msra.mxu0 0.0
  %3113 = vmatprep.subr.mxu0 0.0
  %3114 = vmatpush1.msra.mxu0 0.0
  %3115 = vmatprep.subr.mxu0 0.0
  %3116 = vmatpush1.msra.mxu0 0.0
  %3117 = vmatprep.subr.mxu0 0.0
  %3118 = vmatpush1.msra.mxu0 0.0
  %3119 = vmatprep.subr.mxu0 0.0
  %3120 = vmatpush1.msra.mxu0 0.0
  %3121 = vmatprep.subr.mxu0 0.0
  %3122 = vmatpush1.msra.mxu0 0.0
  %3123 = vmatprep.mubr.f32.mxu0 0.0
  %3124 = vmatmul.mubr.f32.gmra.mrb[0].mxu0 %v2974
  %v3125 = vpop.f32.mrb[0].mxu0
  %v3126 = vadd.f32 0.0, %v3125
  %v3127 = vpop.f32.mrb[0].mxu0
  %v3128 = vadd.f32 0.0, %v3127
  %3129 = vdwg.mxu0
  %3131 = vset.pattern.permute.xlu0 0
  %3132 = vperm.xlu0 %3131, %v2944
  %v3133 = vpop.permute.xlu0 %3132
  %v3135 = vadd.f32 %v3055, %v3133
  %v3136 = vlaneseq
  %v3137 = vand.u32 %v3136, 127
  %s3138 = smul.u32 0, 128
  %v3139 = vstv %s3138
  %v3140 = vadd.s32 %v3137, %v3139
  %vm3141 = vcmp.lt.s32.totalorder %v3140, 50
  %v3142 = vsel %vm3141, 1, 0
  %v3143 = vcvt.s32.f32 %v3142
  %v3144 = vmul.f32 %v3135, %v3135
  %v3146 = vrot.slane %v3144, 1
  %v3148 = vadd.f32 %v3144, %v3146
  %v3149 = vmul.f32 %v3148, %v3135
  %v3151 = vrot.slane %v3135, 1
  %v3153 = vmul.f32 %v3148, %v3151
  %v3154 = vmul.f32 %v3126, 0.5
  %v3156 = vrot.slane %v3154, 1
  %v3158 = vadd.f32 %v3057, %v3156
  %v3159 = vmul.f32 %v3128, 0.5
  %v3160 = vsub.f32 %v3158, %v3159
  %v3161 = vadd.f32 %v3160, %v3153
  %v3162 = vadd.f32 %v3161, %v3135
  %v3163 = vmul.f32 %v3162, %v3143
  %v3164 = vmul.f32 %v3159, %v3143
  %v3165 = vsub.f32 0.0, %v3149
  %v3166 = vmul.f32 %v3165, %v3143
  %v3167 = vrot.slane %v3154, 7
  %v3169 = vsub.f32 %v3057, %v3167
  %v3170 = vsub.f32 %v3169, %v3159
  %v3172 = vrot.slane %v3149, 7
  %v3174 = vsub.f32 %v3170, %v3172
  %v3175 = vadd.f32 %v3174, %v3135
  %v3176 = vmul.f32 %v3175, %v3143
  %v3177 = vmul.f32 %v3128, -0.5
  %v3178 = vmul.f32 %v3177, %v3143
  %v3179 = vsub.f32 0.0, %v3153
  %v3180 = vmul.f32 %v3179, %v3143
  %v3181 = vmul.f32 %v3176, %v3176
  %vm3182 = vcmask 1041409
  %v3183 = vsel %vm3182, %v3181, 0.0
  %3184 = vadd.xlane.f32.xlu0 %v3183
  %v3185 = vpop.xlane.xlu0 %3184
  %v3186 = vmul.f32 %v3163, %v3163
  %vm3187 = vcmask 1040384
  %v3188 = vsel %vm3187, %v3186, 0.0
  %3189 = vadd.xlane.f32.xlu0 %v3188
  %v3190 = vpop.xlane.xlu0 %3189
  %v3192 = vrot.slane %v3190, 7
  %v3194 = vadd.f32 %v3185, %v3192
  %v3195 = vmul.f32 %v3178, %v3178
  %v3196 = vsel %vm3187, %v3195, 0.0
  %3197 = vadd.xlane.f32.xlu0 %v3196
  %v3198 = vpop.xlane.xlu0 %3197
  %v3199 = vmul.f32 %v3164, %v3164
  %v3200 = vsel %vm3182, %v3199, 0.0
  %3201 = vadd.xlane.f32.xlu0 %v3200
  %v3202 = vpop.xlane.xlu0 %3201
  %v3204 = vrot.slane %v3202, 1
  %v3206 = vadd.f32 %v3198, %v3204
  %v3207 = vmul.f32 %v3180, %v3180
  %v3208 = vsel %vm3187, %v3207, 0.0
  %3209 = vadd.xlane.f32.xlu0 %v3208
  %v3210 = vpop.xlane.xlu0 %3209
  %v3211 = vmul.f32 %v3166, %v3166
  %v3212 = vsel %vm3187, %v3211, 0.0
  %3213 = vadd.xlane.f32.xlu0 %v3212
  %v3214 = vpop.xlane.xlu0 %3213
  %v3215 = vadd.f32 %v3210, %v3214
  %v3217 = vrot.slane %v3176, 1
  %v3219 = vmul.f32 %v3178, %v3217
  %v3220 = vsel %vm3187, %v3219, 0.0
  %3221 = vadd.xlane.f32.xlu0 %v3220
  %v3222 = vpop.xlane.xlu0 %3221
  %v3224 = vrot.slane %v3163, 7
  %v3226 = vmul.f32 %v3164, %v3224
  %v3227 = vsel %vm3182, %v3226, 0.0
  %3228 = vadd.xlane.f32.xlu0 %v3227
  %v3229 = vpop.xlane.xlu0 %3228
  %v3231 = vrot.slane %v3229, 1
  %v3233 = vadd.f32 %v3222, %v3231
  %v3235 = vrot.slane %v3180, 7
  %v3237 = vmul.f32 %v3176, %v3235
  %v3238 = vsel %vm3182, %v3237, 0.0
  %3239 = vadd.xlane.f32.xlu0 %v3238
  %v3240 = vpop.xlane.xlu0 %3239
  %v3241 = vmul.f32 %v3163, %v3166
  %v3242 = vsel %vm3187, %v3241, 0.0
  %3243 = vadd.xlane.f32.xlu0 %v3242
  %v3244 = vpop.xlane.xlu0 %3243
  %v3246 = vrot.slane %v3244, 7
  %v3248 = vadd.f32 %v3240, %v3246
  %v3249 = vmul.f32 %v3178, %v3180
  %v3250 = vsel %vm3187, %v3249, 0.0
  %3251 = vadd.xlane.f32.xlu0 %v3250
  %v3252 = vpop.xlane.xlu0 %3251
  %v3254 = vrot.slane %v3166, 7
  %v3256 = vmul.f32 %v3164, %v3254
  %v3257 = vsel %vm3182, %v3256, 0.0
  %3258 = vadd.xlane.f32.xlu0 %v3257
  %v3259 = vpop.xlane.xlu0 %3258
  %v3261 = vrot.slane %v3259, 1
  %v3263 = vadd.f32 %v3252, %v3261
  %v3264 = vlaneseq
  %v3265 = vshrl.u32 %v3264, 7
  %vm3266 = vcmp.eq.s32.totalorder %v3265, 0
  %v3268 = vrot.slane %v3194, 1
  %s3269 = vtos %v3268
  %v3270 = vstv %s3269
  %v3272 = vsel %vm3266, %v3270, 0.0
  %vm3273 = vcmp.eq.s32.totalorder %v3265, 1
  %s3275 = vtos %v3206
  %v3276 = vstv %s3275
  %v3278 = vsel %vm3273, %v3276, 0.0
  %v3279 = vadd.f32 %v3272, %v3278
  %vm3280 = vcmp.eq.s32.totalorder %v3265, 2
  %v3281 = vlaneseq
  %v3282 = vshrl.u32 %v3281, 7
  %v3283 = vsub.s32 0, %v3282
  %v3284 = vrot.slane %v3215, %v3283
  %v3285 = vsel %vm3280, %v3284, 0.0
  %v3286 = vadd.f32 %v3279, %v3285
  %vm3287 = vcmp.eq.s32.totalorder %v3265, 3
  %s3289 = vtos %v3233
  %v3290 = vstv %s3289
  %v3292 = vsel %vm3287, %v3290, 0.0
  %v3293 = vadd.f32 %v3286, %v3292
  %vm3294 = vcmp.eq.s32.totalorder %v3265, 4
  %v3296 = vrot.slane %v3248, 1
  %s3297 = vtos %v3296
  %v3298 = vstv %s3297
  %v3300 = vsel %vm3294, %v3298, 0.0
  %v3301 = vadd.f32 %v3293, %v3300
  %vm3302 = vcmp.eq.s32.totalorder %v3265, 5
  %s3304 = vtos %v3263
  %v3305 = vstv %s3304
  %v3307 = vsel %vm3302, %v3305, 0.0
  %v3308 = vadd.f32 %v3301, %v3307
  %3309 = vst [vmem:[%s13] sm:$0xff] %v3308
  // Predicated region
  $region54: #{pml_forward.2} parent=0 // pred_check
    _
  $region55: #{pml_forward.2} parent=0 // pred_check_branch
    %3311 = sbr.rel (0) target = $region57
  $region56: #{pml_forward.2} parent=0 // pred_region
    _
  $region57: #{pml_forward.2} parent=0 // pred_fallthru
    _
  // Predicated region
  $region58: #{pml_forward.2} parent=0 // pred_check
    _
  $region59: #{pml_forward.2} parent=0 // pred_check_branch
    %3313 = sbr.rel (0) target = $region61
  $region60: #{pml_forward.2} parent=0 // pred_region
    _
  $region61: #{pml_forward.2} parent=0 // pred_fallthru
    _

</llo_original>
